<compile_context>
chip_gen: v7x
topology: tpu7x:2x2x1
jax: 0.10.0
libtpu: 0.0.40
codegen_flags: <defaults>
</compile_context>

<pallas_src>
import jax
import jax.numpy as jnp
from jax import lax
from jax.experimental import pallas as pl
from jax.experimental.pallas import tpu as pltpu


def _full_spec(shape):
    """BlockSpec covering the whole (small) array, resident in VMEM."""
    zeros = (0,) * len(shape)
    return pl.BlockSpec(shape, lambda i, tok_ref: zeros)


# --------------------------------------------------------------------------
# Fused kernel. One grid step handles one batch tile of Bt (=8) sequences.
# Activations are laid out time-major flat: row j = t*Bt + b.
# --------------------------------------------------------------------------
def _make_fused_kernel(n_layer, T, Bt, H):
    TB = T * Bt

    def kernel(*refs):
        tok_ref = refs[0]                       # SMEM (nb, T*Bt) int32 (prefetch)
        emb_ref = refs[1]                       # VMEM (V, 1, E) f32
        layer_refs = refs[2:2 + 3 * n_layer]    # per layer: wih(bf16) whh(bf16) b(f32)
        wa_ref, ba_ref, wl_ref, bl_ref = refs[2 + 3 * n_layer:6 + 3 * n_layer]
        out_ref = refs[6 + 3 * n_layer]         # (Bt, Vp) f32
        x_slab, xp_slab = refs[7 + 3 * n_layer:]  # VMEM (TB,H) f32, (TB,4H) f32

        i = pl.program_id(0)

        # ---- embedding: exact scalar-prefetch gather (no one-hot) -----------
        for j in range(TB):
            tok = tok_ref[i, j]                 # SMEM scalar read
            x_slab[j:j + 1, :] = emb_ref[tok]   # dynamic row load -> (1, E)

        # ---- LSTM stack (PyTorch gate order i, f, g, o) ----------------------
        for l in range(n_layer):
            wih = layer_refs[3 * l][...]        # (Hin, 4H) bf16
            whh = layer_refs[3 * l + 1][...]    # (H, 4H)   bf16
            bias = layer_refs[3 * l + 2][...]   # (1, 4H)   f32
            # Hoisted input projection for the whole tile, kept in VMEM.
            xp_slab[...] = (jnp.dot(x_slab[...].astype(jnp.bfloat16), wih,
                                    preferred_element_type=jnp.float32) + bias)
            h = jnp.zeros((Bt, H), jnp.float32)
            c = jnp.zeros((Bt, H), jnp.float32)
            for t in range(T):                  # static unroll (serial recurrence)
                gates = (xp_slab[t * Bt:(t + 1) * Bt, :]
                         + jnp.dot(h.astype(jnp.bfloat16), whh,
                                   preferred_element_type=jnp.float32))
                # Full-width EUP ops, then 32-lane group extraction.
                s_all = jax.nn.sigmoid(gates)   # (Bt, 4H) one EUP push
                t_all = jnp.tanh(gates)         # (Bt, 4H) one EUP push
                i_g = s_all[:, 0 * H:1 * H]
                f_g = s_all[:, 1 * H:2 * H]
                g_g = t_all[:, 2 * H:3 * H]
                o_g = s_all[:, 3 * H:4 * H]
                c = f_g * c + i_g * g_g
                h = o_g * jnp.tanh(c)
                x_slab[t * Bt:(t + 1) * Bt, :] = h   # bounded live range
            # x_slab now holds this layer's outputs (input to the next layer).

        # ---- attention over time (per-batch softmax) + lm head ---------------
        xs = x_slab[...]                                            # (TB, H)
        scores = (jnp.dot(xs, wa_ref[...],
                          preferred_element_type=jnp.float32)
                  + ba_ref[...])                                    # (TB, 1)
        s_cols = [scores[t * Bt:(t + 1) * Bt, :] for t in range(T)]  # T x (Bt,1)
        m = s_cols[0]
        for t in range(1, T):
            m = jnp.maximum(m, s_cols[t])                           # per-batch max
        e_cols = [jnp.exp(sc - m) for sc in s_cols]
        den = e_cols[0]
        for t in range(1, T):
            den = den + e_cols[t]                                   # den >= 1
        inv = pl.reciprocal(den, approx=True)
        attended = jnp.zeros((Bt, H), jnp.float32)
        for t in range(T):
            attended = attended + (e_cols[t] * inv) * xs[t * Bt:(t + 1) * Bt, :]
        logits = (jnp.dot(attended.astype(jnp.bfloat16), wl_ref[...],
                          preferred_element_type=jnp.float32)
                  + bl_ref[...])                                    # (Bt, Vp)
        out_ref[...] = logits

    return kernel


# --------------------------------------------------------------------------
# Wrapper: pad batch to 8-row tiles, pad vocab to 128 lanes, lay tokens out
# time-major per tile, run the fused kernel over batch tiles, slice back out.
# --------------------------------------------------------------------------
def forward(tokens, params):
    B, T = tokens.shape
    V, E = params["emb"].shape
    H = E                                   # module uses hidden == n_embd
    n_layer = len(params["lstm"])
    Bt = 8                                  # sublane tile of batch rows
    Bp = ((B + Bt - 1) // Bt) * Bt
    nb = Bp // Bt
    Vp = ((V + 127) // 128) * 128           # lane-dense logits / lm_head

    # Tokens: (nb, T*Bt) int32, tok_sp[i, t*Bt + b] = token of row i*Bt+b at time t.
    tok_p = jnp.zeros((Bp, T), jnp.int32).at[:B].set(tokens.astype(jnp.int32))
    tok_sp = tok_p.reshape(nb, Bt, T).transpose(0, 2, 1).reshape(nb, T * Bt)

    emb3 = params["emb"].astype(jnp.float32).reshape(V, 1, E)
    wa = params["wa"].reshape(H, 1).astype(jnp.float32)
    ba = params["ba"].reshape(1, 1).astype(jnp.float32)
    wl = (jnp.zeros((H, Vp), jnp.float32).at[:, :V].set(params["wl"])
          ).astype(jnp.bfloat16)
    bl = jnp.zeros((1, Vp), jnp.float32).at[:, :V].set(params["bl"])

    inputs = [emb3]
    for (wih, whh, b) in params["lstm"]:
        inputs += [wih.astype(jnp.bfloat16), whh.astype(jnp.bfloat16),
                   b.reshape(1, 4 * H).astype(jnp.float32)]
    inputs += [wa, ba, wl, bl]

    grid_spec = pltpu.PrefetchScalarGridSpec(
        num_scalar_prefetch=1,
        grid=(nb,),
        in_specs=[_full_spec(a.shape) for a in inputs],
        out_specs=pl.BlockSpec((Bt, Vp), lambda i, tok_ref: (i, 0)),
        scratch_shapes=[pltpu.VMEM((T * Bt, H), jnp.float32),      # activations
                        pltpu.VMEM((T * Bt, 4 * H), jnp.float32)])  # x @ W_ih + b

    logits_p = pl.pallas_call(
        _make_fused_kernel(n_layer, T, Bt, H),
        out_shape=jax.ShapeDtypeStruct((Bp, Vp), jnp.float32),
        grid_spec=grid_spec,
        compiler_params=pltpu.CompilerParams(
            dimension_semantics=("parallel",),       # batch tiles -> both v7x TCs
            vmem_limit_bytes=32 * 1024 * 1024),
    )(tok_sp, *inputs)

    return logits_p[:B, :V].reshape(B, 1, V)


# --------------------------------------------------------------------------
# Pure-JAX reference (mirrors PyTorch semantics) for a correctness check.
# --------------------------------------------------------------------------
def reference_forward(tokens, params):
    B, T = tokens.shape
    H = params["wa"].shape[1]
    V = params["wl"].shape[1]
    x = params["emb"][tokens]                                     # (B, T, E)
    for (wih, whh, b) in params["lstm"]:
        def step(carry, x_t):
            h, c = carry
            gates = x_t @ wih + h @ whh + b[0]
            i = jax.nn.sigmoid(gates[:, 0 * H:1 * H])
            f = jax.nn.sigmoid(gates[:, 1 * H:2 * H])
            g = jnp.tanh(gates[:, 2 * H:3 * H])
            o = jax.nn.sigmoid(gates[:, 3 * H:4 * H])
            c = f * c + i * g
            h = o * jnp.tanh(c)
            return (h, c), h
        init = (jnp.zeros((B, H), jnp.float32), jnp.zeros((B, H), jnp.float32))
        _, ys = lax.scan(step, init, jnp.swapaxes(x, 0, 1))
        x = jnp.swapaxes(ys, 0, 1)
    scores = jnp.einsum("bth,h->bt", x, params["wa"][0]) + params["ba"][0, 0]
    w = jax.nn.softmax(scores, axis=1)
    attended = jnp.einsum("bt,bth->bh", w, x)
    logits = attended @ params["wl"] + params["bl"][0]
    return logits.reshape(B, 1, V)


def init_params(key, vocab_size, n_embd, n_layer):
    V, E, H = vocab_size, n_embd, n_embd
    keys = jax.random.split(key, 4 + 4 * n_layer)
    k_lstm = 1.0 / jnp.sqrt(H)
    params = {"emb": jax.random.normal(keys[0], (V, E), jnp.float32)}
    lstm = []
    for l in range(n_layer):
        in_dim = E if l == 0 else H
        kw = keys[4 + 4 * l: 4 + 4 * l + 4]
        w_ih = jax.random.uniform(kw[0], (4 * H, in_dim), jnp.float32, -k_lstm, k_lstm)
        w_hh = jax.random.uniform(kw[1], (4 * H, H), jnp.float32, -k_lstm, k_lstm)
        b_ih = jax.random.uniform(kw[2], (4 * H,), jnp.float32, -k_lstm, k_lstm)
        b_hh = jax.random.uniform(kw[3], (4 * H,), jnp.float32, -k_lstm, k_lstm)
        lstm.append((w_ih.T, w_hh.T, (b_ih + b_hh).reshape(1, 4 * H)))
    params["lstm"] = lstm
    k_lin = 1.0 / jnp.sqrt(H)
    params["wa"] = jax.random.uniform(keys[1], (1, H), jnp.float32, -k_lin, k_lin)
    params["ba"] = jax.random.uniform(keys[2], (1, 1), jnp.float32, -k_lin, k_lin)
    params["wl"] = jax.random.uniform(keys[3], (V, H), jnp.float32, -k_lin, k_lin).T
    params["bl"] = jnp.zeros((1, V), jnp.float32)
    return params


if __name__ == "__main__":
    config = dict(vocab_size=64, n_embd=32, n_layer=2, dropout=0.0)
    B, T = 2, 8

    key = jax.random.PRNGKey(0)
    k_tok, k_param = jax.random.split(key)
    tokens = jax.random.randint(k_tok, (B, T), 0, config["vocab_size"], jnp.int32)
    params = init_params(k_param, config["vocab_size"], config["n_embd"],
                         config["n_layer"])

    logits = jax.block_until_ready(forward(tokens, params))
    ref = jax.block_until_ready(reference_forward(tokens, params))

    assert logits.shape == (B, 1, config["vocab_size"])
    # Matmuls run as bf16 passes with f32 accumulate and the softmax divide
    # uses the approximate EUP reciprocal, so tolerance vs the f32 XLA
    # reference is correspondingly loose.
    if not jnp.allclose(logits, ref, atol=5e-2, rtol=5e-2):
        raise AssertionError("Pallas kernel output mismatch vs reference")

    print("KERNEL_OK")
</pallas_src>

<mosaic_0001>
module attributes {stable_mosaic.version = 11 : i64} {
  func.func @kernel(%arg0: i32, %arg1: memref<1x64xi32, #tpu.memory_space<smem>>, %arg2: memref<64x1x32xf32, #tpu.memory_space<vmem>>, %arg3: memref<32x128xbf16, #tpu.memory_space<vmem>>, %arg4: memref<32x128xbf16, #tpu.memory_space<vmem>>, %arg5: memref<1x128xf32, #tpu.memory_space<vmem>>, %arg6: memref<32x128xbf16, #tpu.memory_space<vmem>>, %arg7: memref<32x128xbf16, #tpu.memory_space<vmem>>, %arg8: memref<1x128xf32, #tpu.memory_space<vmem>>, %arg9: memref<32x1xf32, #tpu.memory_space<vmem>>, %arg10: memref<1x1xf32, #tpu.memory_space<vmem>>, %arg11: memref<32x128xbf16, #tpu.memory_space<vmem>>, %arg12: memref<1x128xf32, #tpu.memory_space<vmem>>, %arg13: memref<8x128xf32, #tpu.memory_space<vmem>>, %arg14: memref<64x32xf32, #tpu.memory_space<vmem>>, %arg15: memref<64x128xf32, #tpu.memory_space<vmem>>) attributes {dimension_semantics = [#tpu.dimension_semantics<parallel>], iteration_bounds = array<i64: 1>, scalar_prefetch = 1 : i64, scratch_operands = 2 : i64, tpu.core_type = #tpu.core_type<tc>, window_params = [{pipeline_mode = #tpu.pipeline_mode<synchronous>, transform_indices = @transform_0, window_bounds = array<i64: 64, 1, 32>}, {pipeline_mode = #tpu.pipeline_mode<synchronous>, transform_indices = @transform_1, window_bounds = array<i64: 32, 128>}, {pipeline_mode = #tpu.pipeline_mode<synchronous>, transform_indices = @transform_2, window_bounds = array<i64: 32, 128>}, {pipeline_mode = #tpu.pipeline_mode<synchronous>, transform_indices = @transform_3, window_bounds = array<i64: 1, 128>}, {pipeline_mode = #tpu.pipeline_mode<synchronous>, transform_indices = @transform_4, window_bounds = array<i64: 32, 128>}, {pipeline_mode = #tpu.pipeline_mode<synchronous>, transform_indices = @transform_5, window_bounds = array<i64: 32, 128>}, {pipeline_mode = #tpu.pipeline_mode<synchronous>, transform_indices = @transform_6, window_bounds = array<i64: 1, 128>}, {pipeline_mode = #tpu.pipeline_mode<synchronous>, transform_indices = @transform_7, window_bounds = array<i64: 32, 1>}, {pipeline_mode = #tpu.pipeline_mode<synchronous>, transform_indices = @transform_8, window_bounds = array<i64: 1, 1>}, {pipeline_mode = #tpu.pipeline_mode<synchronous>, transform_indices = @transform_9, window_bounds = array<i64: 32, 128>}, {pipeline_mode = #tpu.pipeline_mode<synchronous>, transform_indices = @transform_10, window_bounds = array<i64: 1, 128>}, {transform_indices = @transform_11, window_bounds = array<i64: 8, 128>}]} {
    %0 = arith.index_cast %arg0 : i32 to index
    %c0 = arith.constant 0 : index
    %1 = memref.load %arg1[%0, %c0] : memref<1x64xi32, #tpu.memory_space<smem>>
    %2 = arith.index_cast %1 : i32 to index
    %c0_0 = arith.constant 0 : index
    %c0_1 = arith.constant 0 : index
    %3 = vector.load %arg2[%2, %c0_0, %c0_1] : memref<64x1x32xf32, #tpu.memory_space<vmem>>, vector<1x1x32xf32>
    %4 = vector.shape_cast %3 : vector<1x1x32xf32> to vector<1x32xf32>
    %c0_2 = arith.constant 0 : index
    %c0_3 = arith.constant 0 : index
    %5 = vector.load %arg14[%c0_2, %c0_3] : memref<64x32xf32, #tpu.memory_space<vmem>>, vector<1x32xf32>
    tpu.vector_store %arg14[%c0_2, %c0_3], %4 {strides = array<i32>} : memref<64x32xf32, #tpu.memory_space<vmem>>, vector<1x32xf32>,
    %6 = arith.index_cast %arg0 : i32 to index
    %c1 = arith.constant 1 : index
    %7 = memref.load %arg1[%6, %c1] : memref<1x64xi32, #tpu.memory_space<smem>>
    %8 = arith.index_cast %7 : i32 to index
    %c0_4 = arith.constant 0 : index
    %c0_5 = arith.constant 0 : index
    %9 = vector.load %arg2[%8, %c0_4, %c0_5] : memref<64x1x32xf32, #tpu.memory_space<vmem>>, vector<1x1x32xf32>
    %10 = vector.shape_cast %9 : vector<1x1x32xf32> to vector<1x32xf32>
    %c1_6 = arith.constant 1 : index
    %c0_7 = arith.constant 0 : index
    %11 = vector.load %arg14[%c1_6, %c0_7] : memref<64x32xf32, #tpu.memory_space<vmem>>, vector<1x32xf32>
    tpu.vector_store %arg14[%c1_6, %c0_7], %10 {strides = array<i32>} : memref<64x32xf32, #tpu.memory_space<vmem>>, vector<1x32xf32>,
    %12 = arith.index_cast %arg0 : i32 to index
    %c2 = arith.constant 2 : index
    %13 = memref.load %arg1[%12, %c2] : memref<1x64xi32, #tpu.memory_space<smem>>
    %14 = arith.index_cast %13 : i32 to index
    %c0_8 = arith.constant 0 : index
    %c0_9 = arith.constant 0 : index
    %15 = vector.load %arg2[%14, %c0_8, %c0_9] : memref<64x1x32xf32, #tpu.memory_space<vmem>>, vector<1x1x32xf32>
    %16 = vector.shape_cast %15 : vector<1x1x32xf32> to vector<1x32xf32>
    %c2_10 = arith.constant 2 : index
    %c0_11 = arith.constant 0 : index
    %17 = vector.load %arg14[%c2_10, %c0_11] : memref<64x32xf32, #tpu.memory_space<vmem>>, vector<1x32xf32>
    tpu.vector_store %arg14[%c2_10, %c0_11], %16 {strides = array<i32>} : memref<64x32xf32, #tpu.memory_space<vmem>>, vector<1x32xf32>,
    %18 = arith.index_cast %arg0 : i32 to index
    %c3 = arith.constant 3 : index
    %19 = memref.load %arg1[%18, %c3] : memref<1x64xi32, #tpu.memory_space<smem>>
    %20 = arith.index_cast %19 : i32 to index
    %c0_12 = arith.constant 0 : index
    %c0_13 = arith.constant 0 : index
    %21 = vector.load %arg2[%20, %c0_12, %c0_13] : memref<64x1x32xf32, #tpu.memory_space<vmem>>, vector<1x1x32xf32>
    %22 = vector.shape_cast %21 : vector<1x1x32xf32> to vector<1x32xf32>
    %c3_14 = arith.constant 3 : index
    %c0_15 = arith.constant 0 : index
    %23 = vector.load %arg14[%c3_14, %c0_15] : memref<64x32xf32, #tpu.memory_space<vmem>>, vector<1x32xf32>
    tpu.vector_store %arg14[%c3_14, %c0_15], %22 {strides = array<i32>} : memref<64x32xf32, #tpu.memory_space<vmem>>, vector<1x32xf32>,
    %24 = arith.index_cast %arg0 : i32 to index
    %c4 = arith.constant 4 : index
    %25 = memref.load %arg1[%24, %c4] : memref<1x64xi32, #tpu.memory_space<smem>>
    %26 = arith.index_cast %25 : i32 to index
    %c0_16 = arith.constant 0 : index
    %c0_17 = arith.constant 0 : index
    %27 = vector.load %arg2[%26, %c0_16, %c0_17] : memref<64x1x32xf32, #tpu.memory_space<vmem>>, vector<1x1x32xf32>
    %28 = vector.shape_cast %27 : vector<1x1x32xf32> to vector<1x32xf32>
    %c4_18 = arith.constant 4 : index
    %c0_19 = arith.constant 0 : index
    %29 = vector.load %arg14[%c4_18, %c0_19] : memref<64x32xf32, #tpu.memory_space<vmem>>, vector<1x32xf32>
    tpu.vector_store %arg14[%c4_18, %c0_19], %28 {strides = array<i32>} : memref<64x32xf32, #tpu.memory_space<vmem>>, vector<1x32xf32>,
    %30 = arith.index_cast %arg0 : i32 to index
    %c5 = arith.constant 5 : index
    %31 = memref.load %arg1[%30, %c5] : memref<1x64xi32, #tpu.memory_space<smem>>
    %32 = arith.index_cast %31 : i32 to index
    %c0_20 = arith.constant 0 : index
    %c0_21 = arith.constant 0 : index
    %33 = vector.load %arg2[%32, %c0_20, %c0_21] : memref<64x1x32xf32, #tpu.memory_space<vmem>>, vector<1x1x32xf32>
    %34 = vector.shape_cast %33 : vector<1x1x32xf32> to vector<1x32xf32>
    %c5_22 = arith.constant 5 : index
    %c0_23 = arith.constant 0 : index
    %35 = vector.load %arg14[%c5_22, %c0_23] : memref<64x32xf32, #tpu.memory_space<vmem>>, vector<1x32xf32>
    tpu.vector_store %arg14[%c5_22, %c0_23], %34 {strides = array<i32>} : memref<64x32xf32, #tpu.memory_space<vmem>>, vector<1x32xf32>,
    %36 = arith.index_cast %arg0 : i32 to index
    %c6 = arith.constant 6 : index
    %37 = memref.load %arg1[%36, %c6] : memref<1x64xi32, #tpu.memory_space<smem>>
    %38 = arith.index_cast %37 : i32 to index
    %c0_24 = arith.constant 0 : index
    %c0_25 = arith.constant 0 : index
    %39 = vector.load %arg2[%38, %c0_24, %c0_25] : memref<64x1x32xf32, #tpu.memory_space<vmem>>, vector<1x1x32xf32>
    %40 = vector.shape_cast %39 : vector<1x1x32xf32> to vector<1x32xf32>
    %c6_26 = arith.constant 6 : index
    %c0_27 = arith.constant 0 : index
    %41 = vector.load %arg14[%c6_26, %c0_27] : memref<64x32xf32, #tpu.memory_space<vmem>>, vector<1x32xf32>
    tpu.vector_store %arg14[%c6_26, %c0_27], %40 {strides = array<i32>} : memref<64x32xf32, #tpu.memory_space<vmem>>, vector<1x32xf32>,
    %42 = arith.index_cast %arg0 : i32 to index
    %c7 = arith.constant 7 : index
    %43 = memref.load %arg1[%42, %c7] : memref<1x64xi32, #tpu.memory_space<smem>>
    %44 = arith.index_cast %43 : i32 to index
    %c0_28 = arith.constant 0 : index
    %c0_29 = arith.constant 0 : index
    %45 = vector.load %arg2[%44, %c0_28, %c0_29] : memref<64x1x32xf32, #tpu.memory_space<vmem>>, vector<1x1x32xf32>
    %46 = vector.shape_cast %45 : vector<1x1x32xf32> to vector<1x32xf32>
    %c7_30 = arith.constant 7 : index
    %c0_31 = arith.constant 0 : index
    %47 = vector.load %arg14[%c7_30, %c0_31] : memref<64x32xf32, #tpu.memory_space<vmem>>, vector<1x32xf32>
    tpu.vector_store %arg14[%c7_30, %c0_31], %46 {strides = array<i32>} : memref<64x32xf32, #tpu.memory_space<vmem>>, vector<1x32xf32>,
    %48 = arith.index_cast %arg0 : i32 to index
    %c8 = arith.constant 8 : index
    %49 = memref.load %arg1[%48, %c8] : memref<1x64xi32, #tpu.memory_space<smem>>
    %50 = arith.index_cast %49 : i32 to index
    %c0_32 = arith.constant 0 : index
    %c0_33 = arith.constant 0 : index
    %51 = vector.load %arg2[%50, %c0_32, %c0_33] : memref<64x1x32xf32, #tpu.memory_space<vmem>>, vector<1x1x32xf32>
    %52 = vector.shape_cast %51 : vector<1x1x32xf32> to vector<1x32xf32>
    %c8_34 = arith.constant 8 : index
    %c0_35 = arith.constant 0 : index
    %53 = vector.load %arg14[%c8_34, %c0_35] : memref<64x32xf32, #tpu.memory_space<vmem>>, vector<1x32xf32>
    tpu.vector_store %arg14[%c8_34, %c0_35], %52 {strides = array<i32>} : memref<64x32xf32, #tpu.memory_space<vmem>>, vector<1x32xf32>,
    %54 = arith.index_cast %arg0 : i32 to index
    %c9 = arith.constant 9 : index
    %55 = memref.load %arg1[%54, %c9] : memref<1x64xi32, #tpu.memory_space<smem>>
    %56 = arith.index_cast %55 : i32 to index
    %c0_36 = arith.constant 0 : index
    %c0_37 = arith.constant 0 : index
    %57 = vector.load %arg2[%56, %c0_36, %c0_37] : memref<64x1x32xf32, #tpu.memory_space<vmem>>, vector<1x1x32xf32>
    %58 = vector.shape_cast %57 : vector<1x1x32xf32> to vector<1x32xf32>
    %c9_38 = arith.constant 9 : index
    %c0_39 = arith.constant 0 : index
    %59 = vector.load %arg14[%c9_38, %c0_39] : memref<64x32xf32, #tpu.memory_space<vmem>>, vector<1x32xf32>
    tpu.vector_store %arg14[%c9_38, %c0_39], %58 {strides = array<i32>} : memref<64x32xf32, #tpu.memory_space<vmem>>, vector<1x32xf32>,
    %60 = arith.index_cast %arg0 : i32 to index
    %c10 = arith.constant 10 : index
    %61 = memref.load %arg1[%60, %c10] : memref<1x64xi32, #tpu.memory_space<smem>>
    %62 = arith.index_cast %61 : i32 to index
    %c0_40 = arith.constant 0 : index
    %c0_41 = arith.constant 0 : index
    %63 = vector.load %arg2[%62, %c0_40, %c0_41] : memref<64x1x32xf32, #tpu.memory_space<vmem>>, vector<1x1x32xf32>
    %64 = vector.shape_cast %63 : vector<1x1x32xf32> to vector<1x32xf32>
    %c10_42 = arith.constant 10 : index
    %c0_43 = arith.constant 0 : index
    %65 = vector.load %arg14[%c10_42, %c0_43] : memref<64x32xf32, #tpu.memory_space<vmem>>, vector<1x32xf32>
    tpu.vector_store %arg14[%c10_42, %c0_43], %64 {strides = array<i32>} : memref<64x32xf32, #tpu.memory_space<vmem>>, vector<1x32xf32>,
    %66 = arith.index_cast %arg0 : i32 to index
    %c11 = arith.constant 11 : index
    %67 = memref.load %arg1[%66, %c11] : memref<1x64xi32, #tpu.memory_space<smem>>
    %68 = arith.index_cast %67 : i32 to index
    %c0_44 = arith.constant 0 : index
    %c0_45 = arith.constant 0 : index
    %69 = vector.load %arg2[%68, %c0_44, %c0_45] : memref<64x1x32xf32, #tpu.memory_space<vmem>>, vector<1x1x32xf32>
    %70 = vector.shape_cast %69 : vector<1x1x32xf32> to vector<1x32xf32>
    %c11_46 = arith.constant 11 : index
    %c0_47 = arith.constant 0 : index
    %71 = vector.load %arg14[%c11_46, %c0_47] : memref<64x32xf32, #tpu.memory_space<vmem>>, vector<1x32xf32>
    tpu.vector_store %arg14[%c11_46, %c0_47], %70 {strides = array<i32>} : memref<64x32xf32, #tpu.memory_space<vmem>>, vector<1x32xf32>,
    %72 = arith.index_cast %arg0 : i32 to index
    %c12 = arith.constant 12 : index
    %73 = memref.load %arg1[%72, %c12] : memref<1x64xi32, #tpu.memory_space<smem>>
    %74 = arith.index_cast %73 : i32 to index
    %c0_48 = arith.constant 0 : index
    %c0_49 = arith.constant 0 : index
    %75 = vector.load %arg2[%74, %c0_48, %c0_49] : memref<64x1x32xf32, #tpu.memory_space<vmem>>, vector<1x1x32xf32>
    %76 = vector.shape_cast %75 : vector<1x1x32xf32> to vector<1x32xf32>
    %c12_50 = arith.constant 12 : index
    %c0_51 = arith.constant 0 : index
    %77 = vector.load %arg14[%c12_50, %c0_51] : memref<64x32xf32, #tpu.memory_space<vmem>>, vector<1x32xf32>
    tpu.vector_store %arg14[%c12_50, %c0_51], %76 {strides = array<i32>} : memref<64x32xf32, #tpu.memory_space<vmem>>, vector<1x32xf32>,
    %78 = arith.index_cast %arg0 : i32 to index
    %c13 = arith.constant 13 : index
    %79 = memref.load %arg1[%78, %c13] : memref<1x64xi32, #tpu.memory_space<smem>>
    %80 = arith.index_cast %79 : i32 to index
    %c0_52 = arith.constant 0 : index
    %c0_53 = arith.constant 0 : index
    %81 = vector.load %arg2[%80, %c0_52, %c0_53] : memref<64x1x32xf32, #tpu.memory_space<vmem>>, vector<1x1x32xf32>
    %82 = vector.shape_cast %81 : vector<1x1x32xf32> to vector<1x32xf32>
    %c13_54 = arith.constant 13 : index
    %c0_55 = arith.constant 0 : index
    %83 = vector.load %arg14[%c13_54, %c0_55] : memref<64x32xf32, #tpu.memory_space<vmem>>, vector<1x32xf32>
    tpu.vector_store %arg14[%c13_54, %c0_55], %82 {strides = array<i32>} : memref<64x32xf32, #tpu.memory_space<vmem>>, vector<1x32xf32>,
    %84 = arith.index_cast %arg0 : i32 to index
    %c14 = arith.constant 14 : index
    %85 = memref.load %arg1[%84, %c14] : memref<1x64xi32, #tpu.memory_space<smem>>
    %86 = arith.index_cast %85 : i32 to index
    %c0_56 = arith.constant 0 : index
    %c0_57 = arith.constant 0 : index
    %87 = vector.load %arg2[%86, %c0_56, %c0_57] : memref<64x1x32xf32, #tpu.memory_space<vmem>>, vector<1x1x32xf32>
    %88 = vector.shape_cast %87 : vector<1x1x32xf32> to vector<1x32xf32>
    %c14_58 = arith.constant 14 : index
    %c0_59 = arith.constant 0 : index
    %89 = vector.load %arg14[%c14_58, %c0_59] : memref<64x32xf32, #tpu.memory_space<vmem>>, vector<1x32xf32>
    tpu.vector_store %arg14[%c14_58, %c0_59], %88 {strides = array<i32>} : memref<64x32xf32, #tpu.memory_space<vmem>>, vector<1x32xf32>,
    %90 = arith.index_cast %arg0 : i32 to index
    %c15 = arith.constant 15 : index
    %91 = memref.load %arg1[%90, %c15] : memref<1x64xi32, #tpu.memory_space<smem>>
    %92 = arith.index_cast %91 : i32 to index
    %c0_60 = arith.constant 0 : index
    %c0_61 = arith.constant 0 : index
    %93 = vector.load %arg2[%92, %c0_60, %c0_61] : memref<64x1x32xf32, #tpu.memory_space<vmem>>, vector<1x1x32xf32>
    %94 = vector.shape_cast %93 : vector<1x1x32xf32> to vector<1x32xf32>
    %c15_62 = arith.constant 15 : index
    %c0_63 = arith.constant 0 : index
    %95 = vector.load %arg14[%c15_62, %c0_63] : memref<64x32xf32, #tpu.memory_space<vmem>>, vector<1x32xf32>
    tpu.vector_store %arg14[%c15_62, %c0_63], %94 {strides = array<i32>} : memref<64x32xf32, #tpu.memory_space<vmem>>, vector<1x32xf32>,
    %96 = arith.index_cast %arg0 : i32 to index
    %c16 = arith.constant 16 : index
    %97 = memref.load %arg1[%96, %c16] : memref<1x64xi32, #tpu.memory_space<smem>>
    %98 = arith.index_cast %97 : i32 to index
    %c0_64 = arith.constant 0 : index
    %c0_65 = arith.constant 0 : index
    %99 = vector.load %arg2[%98, %c0_64, %c0_65] : memref<64x1x32xf32, #tpu.memory_space<vmem>>, vector<1x1x32xf32>
    %100 = vector.shape_cast %99 : vector<1x1x32xf32> to vector<1x32xf32>
    %c16_66 = arith.constant 16 : index
    %c0_67 = arith.constant 0 : index
    %101 = vector.load %arg14[%c16_66, %c0_67] : memref<64x32xf32, #tpu.memory_space<vmem>>, vector<1x32xf32>
    tpu.vector_store %arg14[%c16_66, %c0_67], %100 {strides = array<i32>} : memref<64x32xf32, #tpu.memory_space<vmem>>, vector<1x32xf32>,
    %102 = arith.index_cast %arg0 : i32 to index
    %c17 = arith.constant 17 : index
    %103 = memref.load %arg1[%102, %c17] : memref<1x64xi32, #tpu.memory_space<smem>>
    %104 = arith.index_cast %103 : i32 to index
    %c0_68 = arith.constant 0 : index
    %c0_69 = arith.constant 0 : index
    %105 = vector.load %arg2[%104, %c0_68, %c0_69] : memref<64x1x32xf32, #tpu.memory_space<vmem>>, vector<1x1x32xf32>
    %106 = vector.shape_cast %105 : vector<1x1x32xf32> to vector<1x32xf32>
    %c17_70 = arith.constant 17 : index
    %c0_71 = arith.constant 0 : index
    %107 = vector.load %arg14[%c17_70, %c0_71] : memref<64x32xf32, #tpu.memory_space<vmem>>, vector<1x32xf32>
    tpu.vector_store %arg14[%c17_70, %c0_71], %106 {strides = array<i32>} : memref<64x32xf32, #tpu.memory_space<vmem>>, vector<1x32xf32>,
    %108 = arith.index_cast %arg0 : i32 to index
    %c18 = arith.constant 18 : index
    %109 = memref.load %arg1[%108, %c18] : memref<1x64xi32, #tpu.memory_space<smem>>
    %110 = arith.index_cast %109 : i32 to index
    %c0_72 = arith.constant 0 : index
    %c0_73 = arith.constant 0 : index
    %111 = vector.load %arg2[%110, %c0_72, %c0_73] : memref<64x1x32xf32, #tpu.memory_space<vmem>>, vector<1x1x32xf32>
    %112 = vector.shape_cast %111 : vector<1x1x32xf32> to vector<1x32xf32>
    %c18_74 = arith.constant 18 : index
    %c0_75 = arith.constant 0 : index
    %113 = vector.load %arg14[%c18_74, %c0_75] : memref<64x32xf32, #tpu.memory_space<vmem>>, vector<1x32xf32>
    tpu.vector_store %arg14[%c18_74, %c0_75], %112 {strides = array<i32>} : memref<64x32xf32, #tpu.memory_space<vmem>>, vector<1x32xf32>,
    %114 = arith.index_cast %arg0 : i32 to index
    %c19 = arith.constant 19 : index
    %115 = memref.load %arg1[%114, %c19] : memref<1x64xi32, #tpu.memory_space<smem>>
    %116 = arith.index_cast %115 : i32 to index
    %c0_76 = arith.constant 0 : index
    %c0_77 = arith.constant 0 : index
    %117 = vector.load %arg2[%116, %c0_76, %c0_77] : memref<64x1x32xf32, #tpu.memory_space<vmem>>, vector<1x1x32xf32>
    %118 = vector.shape_cast %117 : vector<1x1x32xf32> to vector<1x32xf32>
    %c19_78 = arith.constant 19 : index
    %c0_79 = arith.constant 0 : index
    %119 = vector.load %arg14[%c19_78, %c0_79] : memref<64x32xf32, #tpu.memory_space<vmem>>, vector<1x32xf32>
    tpu.vector_store %arg14[%c19_78, %c0_79], %118 {strides = array<i32>} : memref<64x32xf32, #tpu.memory_space<vmem>>, vector<1x32xf32>,
    %120 = arith.index_cast %arg0 : i32 to index
    %c20 = arith.constant 20 : index
    %121 = memref.load %arg1[%120, %c20] : memref<1x64xi32, #tpu.memory_space<smem>>
    %122 = arith.index_cast %121 : i32 to index
    %c0_80 = arith.constant 0 : index
    %c0_81 = arith.constant 0 : index
    %123 = vector.load %arg2[%122, %c0_80, %c0_81] : memref<64x1x32xf32, #tpu.memory_space<vmem>>, vector<1x1x32xf32>
    %124 = vector.shape_cast %123 : vector<1x1x32xf32> to vector<1x32xf32>
    %c20_82 = arith.constant 20 : index
    %c0_83 = arith.constant 0 : index
    %125 = vector.load %arg14[%c20_82, %c0_83] : memref<64x32xf32, #tpu.memory_space<vmem>>, vector<1x32xf32>
    tpu.vector_store %arg14[%c20_82, %c0_83], %124 {strides = array<i32>} : memref<64x32xf32, #tpu.memory_space<vmem>>, vector<1x32xf32>,
    %126 = arith.index_cast %arg0 : i32 to index
    %c21 = arith.constant 21 : index
    %127 = memref.load %arg1[%126, %c21] : memref<1x64xi32, #tpu.memory_space<smem>>
    %128 = arith.index_cast %127 : i32 to index
    %c0_84 = arith.constant 0 : index
    %c0_85 = arith.constant 0 : index
    %129 = vector.load %arg2[%128, %c0_84, %c0_85] : memref<64x1x32xf32, #tpu.memory_space<vmem>>, vector<1x1x32xf32>
    %130 = vector.shape_cast %129 : vector<1x1x32xf32> to vector<1x32xf32>
    %c21_86 = arith.constant 21 : index
    %c0_87 = arith.constant 0 : index
    %131 = vector.load %arg14[%c21_86, %c0_87] : memref<64x32xf32, #tpu.memory_space<vmem>>, vector<1x32xf32>
    tpu.vector_store %arg14[%c21_86, %c0_87], %130 {strides = array<i32>} : memref<64x32xf32, #tpu.memory_space<vmem>>, vector<1x32xf32>,
    %132 = arith.index_cast %arg0 : i32 to index
    %c22 = arith.constant 22 : index
    %133 = memref.load %arg1[%132, %c22] : memref<1x64xi32, #tpu.memory_space<smem>>
    %134 = arith.index_cast %133 : i32 to index
    %c0_88 = arith.constant 0 : index
    %c0_89 = arith.constant 0 : index
    %135 = vector.load %arg2[%134, %c0_88, %c0_89] : memref<64x1x32xf32, #tpu.memory_space<vmem>>, vector<1x1x32xf32>
    %136 = vector.shape_cast %135 : vector<1x1x32xf32> to vector<1x32xf32>
    %c22_90 = arith.constant 22 : index
    %c0_91 = arith.constant 0 : index
    %137 = vector.load %arg14[%c22_90, %c0_91] : memref<64x32xf32, #tpu.memory_space<vmem>>, vector<1x32xf32>
    tpu.vector_store %arg14[%c22_90, %c0_91], %136 {strides = array<i32>} : memref<64x32xf32, #tpu.memory_space<vmem>>, vector<1x32xf32>,
    %138 = arith.index_cast %arg0 : i32 to index
    %c23 = arith.constant 23 : index
    %139 = memref.load %arg1[%138, %c23] : memref<1x64xi32, #tpu.memory_space<smem>>
    %140 = arith.index_cast %139 : i32 to index
    %c0_92 = arith.constant 0 : index
    %c0_93 = arith.constant 0 : index
    %141 = vector.load %arg2[%140, %c0_92, %c0_93] : memref<64x1x32xf32, #tpu.memory_space<vmem>>, vector<1x1x32xf32>
    %142 = vector.shape_cast %141 : vector<1x1x32xf32> to vector<1x32xf32>
    %c23_94 = arith.constant 23 : index
    %c0_95 = arith.constant 0 : index
    %143 = vector.load %arg14[%c23_94, %c0_95] : memref<64x32xf32, #tpu.memory_space<vmem>>, vector<1x32xf32>
    tpu.vector_store %arg14[%c23_94, %c0_95], %142 {strides = array<i32>} : memref<64x32xf32, #tpu.memory_space<vmem>>, vector<1x32xf32>,
    %144 = arith.index_cast %arg0 : i32 to index
    %c24 = arith.constant 24 : index
    %145 = memref.load %arg1[%144, %c24] : memref<1x64xi32, #tpu.memory_space<smem>>
    %146 = arith.index_cast %145 : i32 to index
    %c0_96 = arith.constant 0 : index
    %c0_97 = arith.constant 0 : index
    %147 = vector.load %arg2[%146, %c0_96, %c0_97] : memref<64x1x32xf32, #tpu.memory_space<vmem>>, vector<1x1x32xf32>
    %148 = vector.shape_cast %147 : vector<1x1x32xf32> to vector<1x32xf32>
    %c24_98 = arith.constant 24 : index
    %c0_99 = arith.constant 0 : index
    %149 = vector.load %arg14[%c24_98, %c0_99] : memref<64x32xf32, #tpu.memory_space<vmem>>, vector<1x32xf32>
    tpu.vector_store %arg14[%c24_98, %c0_99], %148 {strides = array<i32>} : memref<64x32xf32, #tpu.memory_space<vmem>>, vector<1x32xf32>,
    %150 = arith.index_cast %arg0 : i32 to index
    %c25 = arith.constant 25 : index
    %151 = memref.load %arg1[%150, %c25] : memref<1x64xi32, #tpu.memory_space<smem>>
    %152 = arith.index_cast %151 : i32 to index
    %c0_100 = arith.constant 0 : index
    %c0_101 = arith.constant 0 : index
    %153 = vector.load %arg2[%152, %c0_100, %c0_101] : memref<64x1x32xf32, #tpu.memory_space<vmem>>, vector<1x1x32xf32>
    %154 = vector.shape_cast %153 : vector<1x1x32xf32> to vector<1x32xf32>
    %c25_102 = arith.constant 25 : index
    %c0_103 = arith.constant 0 : index
    %155 = vector.load %arg14[%c25_102, %c0_103] : memref<64x32xf32, #tpu.memory_space<vmem>>, vector<1x32xf32>
    tpu.vector_store %arg14[%c25_102, %c0_103], %154 {strides = array<i32>} : memref<64x32xf32, #tpu.memory_space<vmem>>, vector<1x32xf32>,
    %156 = arith.index_cast %arg0 : i32 to index
    %c26 = arith.constant 26 : index
    %157 = memref.load %arg1[%156, %c26] : memref<1x64xi32, #tpu.memory_space<smem>>
    %158 = arith.index_cast %157 : i32 to index
    %c0_104 = arith.constant 0 : index
    %c0_105 = arith.constant 0 : index
    %159 = vector.load %arg2[%158, %c0_104, %c0_105] : memref<64x1x32xf32, #tpu.memory_space<vmem>>, vector<1x1x32xf32>
    %160 = vector.shape_cast %159 : vector<1x1x32xf32> to vector<1x32xf32>
    %c26_106 = arith.constant 26 : index
    %c0_107 = arith.constant 0 : index
    %161 = vector.load %arg14[%c26_106, %c0_107] : memref<64x32xf32, #tpu.memory_space<vmem>>, vector<1x32xf32>
    tpu.vector_store %arg14[%c26_106, %c0_107], %160 {strides = array<i32>} : memref<64x32xf32, #tpu.memory_space<vmem>>, vector<1x32xf32>,
    %162 = arith.index_cast %arg0 : i32 to index
    %c27 = arith.constant 27 : index
    %163 = memref.load %arg1[%162, %c27] : memref<1x64xi32, #tpu.memory_space<smem>>
    %164 = arith.index_cast %163 : i32 to index
    %c0_108 = arith.constant 0 : index
    %c0_109 = arith.constant 0 : index
    %165 = vector.load %arg2[%164, %c0_108, %c0_109] : memref<64x1x32xf32, #tpu.memory_space<vmem>>, vector<1x1x32xf32>
    %166 = vector.shape_cast %165 : vector<1x1x32xf32> to vector<1x32xf32>
    %c27_110 = arith.constant 27 : index
    %c0_111 = arith.constant 0 : index
    %167 = vector.load %arg14[%c27_110, %c0_111] : memref<64x32xf32, #tpu.memory_space<vmem>>, vector<1x32xf32>
    tpu.vector_store %arg14[%c27_110, %c0_111], %166 {strides = array<i32>} : memref<64x32xf32, #tpu.memory_space<vmem>>, vector<1x32xf32>,
    %168 = arith.index_cast %arg0 : i32 to index
    %c28 = arith.constant 28 : index
    %169 = memref.load %arg1[%168, %c28] : memref<1x64xi32, #tpu.memory_space<smem>>
    %170 = arith.index_cast %169 : i32 to index
    %c0_112 = arith.constant 0 : index
    %c0_113 = arith.constant 0 : index
    %171 = vector.load %arg2[%170, %c0_112, %c0_113] : memref<64x1x32xf32, #tpu.memory_space<vmem>>, vector<1x1x32xf32>
    %172 = vector.shape_cast %171 : vector<1x1x32xf32> to vector<1x32xf32>
    %c28_114 = arith.constant 28 : index
    %c0_115 = arith.constant 0 : index
    %173 = vector.load %arg14[%c28_114, %c0_115] : memref<64x32xf32, #tpu.memory_space<vmem>>, vector<1x32xf32>
    tpu.vector_store %arg14[%c28_114, %c0_115], %172 {strides = array<i32>} : memref<64x32xf32, #tpu.memory_space<vmem>>, vector<1x32xf32>,
    %174 = arith.index_cast %arg0 : i32 to index
    %c29 = arith.constant 29 : index
    %175 = memref.load %arg1[%174, %c29] : memref<1x64xi32, #tpu.memory_space<smem>>
    %176 = arith.index_cast %175 : i32 to index
    %c0_116 = arith.constant 0 : index
    %c0_117 = arith.constant 0 : index
    %177 = vector.load %arg2[%176, %c0_116, %c0_117] : memref<64x1x32xf32, #tpu.memory_space<vmem>>, vector<1x1x32xf32>
    %178 = vector.shape_cast %177 : vector<1x1x32xf32> to vector<1x32xf32>
    %c29_118 = arith.constant 29 : index
    %c0_119 = arith.constant 0 : index
    %179 = vector.load %arg14[%c29_118, %c0_119] : memref<64x32xf32, #tpu.memory_space<vmem>>, vector<1x32xf32>
    tpu.vector_store %arg14[%c29_118, %c0_119], %178 {strides = array<i32>} : memref<64x32xf32, #tpu.memory_space<vmem>>, vector<1x32xf32>,
    %180 = arith.index_cast %arg0 : i32 to index
    %c30 = arith.constant 30 : index
    %181 = memref.load %arg1[%180, %c30] : memref<1x64xi32, #tpu.memory_space<smem>>
    %182 = arith.index_cast %181 : i32 to index
    %c0_120 = arith.constant 0 : index
    %c0_121 = arith.constant 0 : index
    %183 = vector.load %arg2[%182, %c0_120, %c0_121] : memref<64x1x32xf32, #tpu.memory_space<vmem>>, vector<1x1x32xf32>
    %184 = vector.shape_cast %183 : vector<1x1x32xf32> to vector<1x32xf32>
    %c30_122 = arith.constant 30 : index
    %c0_123 = arith.constant 0 : index
    %185 = vector.load %arg14[%c30_122, %c0_123] : memref<64x32xf32, #tpu.memory_space<vmem>>, vector<1x32xf32>
    tpu.vector_store %arg14[%c30_122, %c0_123], %184 {strides = array<i32>} : memref<64x32xf32, #tpu.memory_space<vmem>>, vector<1x32xf32>,
    %186 = arith.index_cast %arg0 : i32 to index
    %c31 = arith.constant 31 : index
    %187 = memref.load %arg1[%186, %c31] : memref<1x64xi32, #tpu.memory_space<smem>>
    %188 = arith.index_cast %187 : i32 to index
    %c0_124 = arith.constant 0 : index
    %c0_125 = arith.constant 0 : index
    %189 = vector.load %arg2[%188, %c0_124, %c0_125] : memref<64x1x32xf32, #tpu.memory_space<vmem>>, vector<1x1x32xf32>
    %190 = vector.shape_cast %189 : vector<1x1x32xf32> to vector<1x32xf32>
    %c31_126 = arith.constant 31 : index
    %c0_127 = arith.constant 0 : index
    %191 = vector.load %arg14[%c31_126, %c0_127] : memref<64x32xf32, #tpu.memory_space<vmem>>, vector<1x32xf32>
    tpu.vector_store %arg14[%c31_126, %c0_127], %190 {strides = array<i32>} : memref<64x32xf32, #tpu.memory_space<vmem>>, vector<1x32xf32>,
    %192 = arith.index_cast %arg0 : i32 to index
    %c32 = arith.constant 32 : index
    %193 = memref.load %arg1[%192, %c32] : memref<1x64xi32, #tpu.memory_space<smem>>
    %194 = arith.index_cast %193 : i32 to index
    %c0_128 = arith.constant 0 : index
    %c0_129 = arith.constant 0 : index
    %195 = vector.load %arg2[%194, %c0_128, %c0_129] : memref<64x1x32xf32, #tpu.memory_space<vmem>>, vector<1x1x32xf32>
    %196 = vector.shape_cast %195 : vector<1x1x32xf32> to vector<1x32xf32>
    %c32_130 = arith.constant 32 : index
    %c0_131 = arith.constant 0 : index
    %197 = vector.load %arg14[%c32_130, %c0_131] : memref<64x32xf32, #tpu.memory_space<vmem>>, vector<1x32xf32>
    tpu.vector_store %arg14[%c32_130, %c0_131], %196 {strides = array<i32>} : memref<64x32xf32, #tpu.memory_space<vmem>>, vector<1x32xf32>,
    %198 = arith.index_cast %arg0 : i32 to index
    %c33 = arith.constant 33 : index
    %199 = memref.load %arg1[%198, %c33] : memref<1x64xi32, #tpu.memory_space<smem>>
    %200 = arith.index_cast %199 : i32 to index
    %c0_132 = arith.constant 0 : index
    %c0_133 = arith.constant 0 : index
    %201 = vector.load %arg2[%200, %c0_132, %c0_133] : memref<64x1x32xf32, #tpu.memory_space<vmem>>, vector<1x1x32xf32>
    %202 = vector.shape_cast %201 : vector<1x1x32xf32> to vector<1x32xf32>
    %c33_134 = arith.constant 33 : index
    %c0_135 = arith.constant 0 : index
    %203 = vector.load %arg14[%c33_134, %c0_135] : memref<64x32xf32, #tpu.memory_space<vmem>>, vector<1x32xf32>
    tpu.vector_store %arg14[%c33_134, %c0_135], %202 {strides = array<i32>} : memref<64x32xf32, #tpu.memory_space<vmem>>, vector<1x32xf32>,
    %204 = arith.index_cast %arg0 : i32 to index
    %c34 = arith.constant 34 : index
    %205 = memref.load %arg1[%204, %c34] : memref<1x64xi32, #tpu.memory_space<smem>>
    %206 = arith.index_cast %205 : i32 to index
    %c0_136 = arith.constant 0 : index
    %c0_137 = arith.constant 0 : index
    %207 = vector.load %arg2[%206, %c0_136, %c0_137] : memref<64x1x32xf32, #tpu.memory_space<vmem>>, vector<1x1x32xf32>
    %208 = vector.shape_cast %207 : vector<1x1x32xf32> to vector<1x32xf32>
    %c34_138 = arith.constant 34 : index
    %c0_139 = arith.constant 0 : index
    %209 = vector.load %arg14[%c34_138, %c0_139] : memref<64x32xf32, #tpu.memory_space<vmem>>, vector<1x32xf32>
    tpu.vector_store %arg14[%c34_138, %c0_139], %208 {strides = array<i32>} : memref<64x32xf32, #tpu.memory_space<vmem>>, vector<1x32xf32>,
    %210 = arith.index_cast %arg0 : i32 to index
    %c35 = arith.constant 35 : index
    %211 = memref.load %arg1[%210, %c35] : memref<1x64xi32, #tpu.memory_space<smem>>
    %212 = arith.index_cast %211 : i32 to index
    %c0_140 = arith.constant 0 : index
    %c0_141 = arith.constant 0 : index
    %213 = vector.load %arg2[%212, %c0_140, %c0_141] : memref<64x1x32xf32, #tpu.memory_space<vmem>>, vector<1x1x32xf32>
    %214 = vector.shape_cast %213 : vector<1x1x32xf32> to vector<1x32xf32>
    %c35_142 = arith.constant 35 : index
    %c0_143 = arith.constant 0 : index
    %215 = vector.load %arg14[%c35_142, %c0_143] : memref<64x32xf32, #tpu.memory_space<vmem>>, vector<1x32xf32>
    tpu.vector_store %arg14[%c35_142, %c0_143], %214 {strides = array<i32>} : memref<64x32xf32, #tpu.memory_space<vmem>>, vector<1x32xf32>,
    %216 = arith.index_cast %arg0 : i32 to index
    %c36 = arith.constant 36 : index
    %217 = memref.load %arg1[%216, %c36] : memref<1x64xi32, #tpu.memory_space<smem>>
    %218 = arith.index_cast %217 : i32 to index
    %c0_144 = arith.constant 0 : index
    %c0_145 = arith.constant 0 : index
    %219 = vector.load %arg2[%218, %c0_144, %c0_145] : memref<64x1x32xf32, #tpu.memory_space<vmem>>, vector<1x1x32xf32>
    %220 = vector.shape_cast %219 : vector<1x1x32xf32> to vector<1x32xf32>
    %c36_146 = arith.constant 36 : index
    %c0_147 = arith.constant 0 : index
    %221 = vector.load %arg14[%c36_146, %c0_147] : memref<64x32xf32, #tpu.memory_space<vmem>>, vector<1x32xf32>
    tpu.vector_store %arg14[%c36_146, %c0_147], %220 {strides = array<i32>} : memref<64x32xf32, #tpu.memory_space<vmem>>, vector<1x32xf32>,
    %222 = arith.index_cast %arg0 : i32 to index
    %c37 = arith.constant 37 : index
    %223 = memref.load %arg1[%222, %c37] : memref<1x64xi32, #tpu.memory_space<smem>>
    %224 = arith.index_cast %223 : i32 to index
    %c0_148 = arith.constant 0 : index
    %c0_149 = arith.constant 0 : index
    %225 = vector.load %arg2[%224, %c0_148, %c0_149] : memref<64x1x32xf32, #tpu.memory_space<vmem>>, vector<1x1x32xf32>
    %226 = vector.shape_cast %225 : vector<1x1x32xf32> to vector<1x32xf32>
    %c37_150 = arith.constant 37 : index
    %c0_151 = arith.constant 0 : index
    %227 = vector.load %arg14[%c37_150, %c0_151] : memref<64x32xf32, #tpu.memory_space<vmem>>, vector<1x32xf32>
    tpu.vector_store %arg14[%c37_150, %c0_151], %226 {strides = array<i32>} : memref<64x32xf32, #tpu.memory_space<vmem>>, vector<1x32xf32>,
    %228 = arith.index_cast %arg0 : i32 to index
    %c38 = arith.constant 38 : index
    %229 = memref.load %arg1[%228, %c38] : memref<1x64xi32, #tpu.memory_space<smem>>
    %230 = arith.index_cast %229 : i32 to index
    %c0_152 = arith.constant 0 : index
    %c0_153 = arith.constant 0 : index
    %231 = vector.load %arg2[%230, %c0_152, %c0_153] : memref<64x1x32xf32, #tpu.memory_space<vmem>>, vector<1x1x32xf32>
    %232 = vector.shape_cast %231 : vector<1x1x32xf32> to vector<1x32xf32>
    %c38_154 = arith.constant 38 : index
    %c0_155 = arith.constant 0 : index
    %233 = vector.load %arg14[%c38_154, %c0_155] : memref<64x32xf32, #tpu.memory_space<vmem>>, vector<1x32xf32>
    tpu.vector_store %arg14[%c38_154, %c0_155], %232 {strides = array<i32>} : memref<64x32xf32, #tpu.memory_space<vmem>>, vector<1x32xf32>,
    %234 = arith.index_cast %arg0 : i32 to index
    %c39 = arith.constant 39 : index
    %235 = memref.load %arg1[%234, %c39] : memref<1x64xi32, #tpu.memory_space<smem>>
    %236 = arith.index_cast %235 : i32 to index
    %c0_156 = arith.constant 0 : index
    %c0_157 = arith.constant 0 : index
    %237 = vector.load %arg2[%236, %c0_156, %c0_157] : memref<64x1x32xf32, #tpu.memory_space<vmem>>, vector<1x1x32xf32>
    %238 = vector.shape_cast %237 : vector<1x1x32xf32> to vector<1x32xf32>
    %c39_158 = arith.constant 39 : index
    %c0_159 = arith.constant 0 : index
    %239 = vector.load %arg14[%c39_158, %c0_159] : memref<64x32xf32, #tpu.memory_space<vmem>>, vector<1x32xf32>
    tpu.vector_store %arg14[%c39_158, %c0_159], %238 {strides = array<i32>} : memref<64x32xf32, #tpu.memory_space<vmem>>, vector<1x32xf32>,
    %240 = arith.index_cast %arg0 : i32 to index
    %c40 = arith.constant 40 : index
    %241 = memref.load %arg1[%240, %c40] : memref<1x64xi32, #tpu.memory_space<smem>>
    %242 = arith.index_cast %241 : i32 to index
    %c0_160 = arith.constant 0 : index
    %c0_161 = arith.constant 0 : index
    %243 = vector.load %arg2[%242, %c0_160, %c0_161] : memref<64x1x32xf32, #tpu.memory_space<vmem>>, vector<1x1x32xf32>
    %244 = vector.shape_cast %243 : vector<1x1x32xf32> to vector<1x32xf32>
    %c40_162 = arith.constant 40 : index
    %c0_163 = arith.constant 0 : index
    %245 = vector.load %arg14[%c40_162, %c0_163] : memref<64x32xf32, #tpu.memory_space<vmem>>, vector<1x32xf32>
    tpu.vector_store %arg14[%c40_162, %c0_163], %244 {strides = array<i32>} : memref<64x32xf32, #tpu.memory_space<vmem>>, vector<1x32xf32>,
    %246 = arith.index_cast %arg0 : i32 to index
    %c41 = arith.constant 41 : index
    %247 = memref.load %arg1[%246, %c41] : memref<1x64xi32, #tpu.memory_space<smem>>
    %248 = arith.index_cast %247 : i32 to index
    %c0_164 = arith.constant 0 : index
    %c0_165 = arith.constant 0 : index
    %249 = vector.load %arg2[%248, %c0_164, %c0_165] : memref<64x1x32xf32, #tpu.memory_space<vmem>>, vector<1x1x32xf32>
    %250 = vector.shape_cast %249 : vector<1x1x32xf32> to vector<1x32xf32>
    %c41_166 = arith.constant 41 : index
    %c0_167 = arith.constant 0 : index
    %251 = vector.load %arg14[%c41_166, %c0_167] : memref<64x32xf32, #tpu.memory_space<vmem>>, vector<1x32xf32>
    tpu.vector_store %arg14[%c41_166, %c0_167], %250 {strides = array<i32>} : memref<64x32xf32, #tpu.memory_space<vmem>>, vector<1x32xf32>,
    %252 = arith.index_cast %arg0 : i32 to index
    %c42 = arith.constant 42 : index
    %253 = memref.load %arg1[%252, %c42] : memref<1x64xi32, #tpu.memory_space<smem>>
    %254 = arith.index_cast %253 : i32 to index
    %c0_168 = arith.constant 0 : index
    %c0_169 = arith.constant 0 : index
    %255 = vector.load %arg2[%254, %c0_168, %c0_169] : memref<64x1x32xf32, #tpu.memory_space<vmem>>, vector<1x1x32xf32>
    %256 = vector.shape_cast %255 : vector<1x1x32xf32> to vector<1x32xf32>
    %c42_170 = arith.constant 42 : index
    %c0_171 = arith.constant 0 : index
    %257 = vector.load %arg14[%c42_170, %c0_171] : memref<64x32xf32, #tpu.memory_space<vmem>>, vector<1x32xf32>
    tpu.vector_store %arg14[%c42_170, %c0_171], %256 {strides = array<i32>} : memref<64x32xf32, #tpu.memory_space<vmem>>, vector<1x32xf32>,
    %258 = arith.index_cast %arg0 : i32 to index
    %c43 = arith.constant 43 : index
    %259 = memref.load %arg1[%258, %c43] : memref<1x64xi32, #tpu.memory_space<smem>>
    %260 = arith.index_cast %259 : i32 to index
    %c0_172 = arith.constant 0 : index
    %c0_173 = arith.constant 0 : index
    %261 = vector.load %arg2[%260, %c0_172, %c0_173] : memref<64x1x32xf32, #tpu.memory_space<vmem>>, vector<1x1x32xf32>
    %262 = vector.shape_cast %261 : vector<1x1x32xf32> to vector<1x32xf32>
    %c43_174 = arith.constant 43 : index
    %c0_175 = arith.constant 0 : index
    %263 = vector.load %arg14[%c43_174, %c0_175] : memref<64x32xf32, #tpu.memory_space<vmem>>, vector<1x32xf32>
    tpu.vector_store %arg14[%c43_174, %c0_175], %262 {strides = array<i32>} : memref<64x32xf32, #tpu.memory_space<vmem>>, vector<1x32xf32>,
    %264 = arith.index_cast %arg0 : i32 to index
    %c44 = arith.constant 44 : index
    %265 = memref.load %arg1[%264, %c44] : memref<1x64xi32, #tpu.memory_space<smem>>
    %266 = arith.index_cast %265 : i32 to index
    %c0_176 = arith.constant 0 : index
    %c0_177 = arith.constant 0 : index
    %267 = vector.load %arg2[%266, %c0_176, %c0_177] : memref<64x1x32xf32, #tpu.memory_space<vmem>>, vector<1x1x32xf32>
    %268 = vector.shape_cast %267 : vector<1x1x32xf32> to vector<1x32xf32>
    %c44_178 = arith.constant 44 : index
    %c0_179 = arith.constant 0 : index
    %269 = vector.load %arg14[%c44_178, %c0_179] : memref<64x32xf32, #tpu.memory_space<vmem>>, vector<1x32xf32>
    tpu.vector_store %arg14[%c44_178, %c0_179], %268 {strides = array<i32>} : memref<64x32xf32, #tpu.memory_space<vmem>>, vector<1x32xf32>,
    %270 = arith.index_cast %arg0 : i32 to index
    %c45 = arith.constant 45 : index
    %271 = memref.load %arg1[%270, %c45] : memref<1x64xi32, #tpu.memory_space<smem>>
    %272 = arith.index_cast %271 : i32 to index
    %c0_180 = arith.constant 0 : index
    %c0_181 = arith.constant 0 : index
    %273 = vector.load %arg2[%272, %c0_180, %c0_181] : memref<64x1x32xf32, #tpu.memory_space<vmem>>, vector<1x1x32xf32>
    %274 = vector.shape_cast %273 : vector<1x1x32xf32> to vector<1x32xf32>
    %c45_182 = arith.constant 45 : index
    %c0_183 = arith.constant 0 : index
    %275 = vector.load %arg14[%c45_182, %c0_183] : memref<64x32xf32, #tpu.memory_space<vmem>>, vector<1x32xf32>
    tpu.vector_store %arg14[%c45_182, %c0_183], %274 {strides = array<i32>} : memref<64x32xf32, #tpu.memory_space<vmem>>, vector<1x32xf32>,
    %276 = arith.index_cast %arg0 : i32 to index
    %c46 = arith.constant 46 : index
    %277 = memref.load %arg1[%276, %c46] : memref<1x64xi32, #tpu.memory_space<smem>>
    %278 = arith.index_cast %277 : i32 to index
    %c0_184 = arith.constant 0 : index
    %c0_185 = arith.constant 0 : index
    %279 = vector.load %arg2[%278, %c0_184, %c0_185] : memref<64x1x32xf32, #tpu.memory_space<vmem>>, vector<1x1x32xf32>
    %280 = vector.shape_cast %279 : vector<1x1x32xf32> to vector<1x32xf32>
    %c46_186 = arith.constant 46 : index
    %c0_187 = arith.constant 0 : index
    %281 = vector.load %arg14[%c46_186, %c0_187] : memref<64x32xf32, #tpu.memory_space<vmem>>, vector<1x32xf32>
    tpu.vector_store %arg14[%c46_186, %c0_187], %280 {strides = array<i32>} : memref<64x32xf32, #tpu.memory_space<vmem>>, vector<1x32xf32>,
    %282 = arith.index_cast %arg0 : i32 to index
    %c47 = arith.constant 47 : index
    %283 = memref.load %arg1[%282, %c47] : memref<1x64xi32, #tpu.memory_space<smem>>
    %284 = arith.index_cast %283 : i32 to index
    %c0_188 = arith.constant 0 : index
    %c0_189 = arith.constant 0 : index
    %285 = vector.load %arg2[%284, %c0_188, %c0_189] : memref<64x1x32xf32, #tpu.memory_space<vmem>>, vector<1x1x32xf32>
    %286 = vector.shape_cast %285 : vector<1x1x32xf32> to vector<1x32xf32>
    %c47_190 = arith.constant 47 : index
    %c0_191 = arith.constant 0 : index
    %287 = vector.load %arg14[%c47_190, %c0_191] : memref<64x32xf32, #tpu.memory_space<vmem>>, vector<1x32xf32>
    tpu.vector_store %arg14[%c47_190, %c0_191], %286 {strides = array<i32>} : memref<64x32xf32, #tpu.memory_space<vmem>>, vector<1x32xf32>,
    %288 = arith.index_cast %arg0 : i32 to index
    %c48 = arith.constant 48 : index
    %289 = memref.load %arg1[%288, %c48] : memref<1x64xi32, #tpu.memory_space<smem>>
    %290 = arith.index_cast %289 : i32 to index
    %c0_192 = arith.constant 0 : index
    %c0_193 = arith.constant 0 : index
    %291 = vector.load %arg2[%290, %c0_192, %c0_193] : memref<64x1x32xf32, #tpu.memory_space<vmem>>, vector<1x1x32xf32>
    %292 = vector.shape_cast %291 : vector<1x1x32xf32> to vector<1x32xf32>
    %c48_194 = arith.constant 48 : index
    %c0_195 = arith.constant 0 : index
    %293 = vector.load %arg14[%c48_194, %c0_195] : memref<64x32xf32, #tpu.memory_space<vmem>>, vector<1x32xf32>
    tpu.vector_store %arg14[%c48_194, %c0_195], %292 {strides = array<i32>} : memref<64x32xf32, #tpu.memory_space<vmem>>, vector<1x32xf32>,
    %294 = arith.index_cast %arg0 : i32 to index
    %c49 = arith.constant 49 : index
    %295 = memref.load %arg1[%294, %c49] : memref<1x64xi32, #tpu.memory_space<smem>>
    %296 = arith.index_cast %295 : i32 to index
    %c0_196 = arith.constant 0 : index
    %c0_197 = arith.constant 0 : index
    %297 = vector.load %arg2[%296, %c0_196, %c0_197] : memref<64x1x32xf32, #tpu.memory_space<vmem>>, vector<1x1x32xf32>
    %298 = vector.shape_cast %297 : vector<1x1x32xf32> to vector<1x32xf32>
    %c49_198 = arith.constant 49 : index
    %c0_199 = arith.constant 0 : index
    %299 = vector.load %arg14[%c49_198, %c0_199] : memref<64x32xf32, #tpu.memory_space<vmem>>, vector<1x32xf32>
    tpu.vector_store %arg14[%c49_198, %c0_199], %298 {strides = array<i32>} : memref<64x32xf32, #tpu.memory_space<vmem>>, vector<1x32xf32>,
    %300 = arith.index_cast %arg0 : i32 to index
    %c50 = arith.constant 50 : index
    %301 = memref.load %arg1[%300, %c50] : memref<1x64xi32, #tpu.memory_space<smem>>
    %302 = arith.index_cast %301 : i32 to index
    %c0_200 = arith.constant 0 : index
    %c0_201 = arith.constant 0 : index
    %303 = vector.load %arg2[%302, %c0_200, %c0_201] : memref<64x1x32xf32, #tpu.memory_space<vmem>>, vector<1x1x32xf32>
    %304 = vector.shape_cast %303 : vector<1x1x32xf32> to vector<1x32xf32>
    %c50_202 = arith.constant 50 : index
    %c0_203 = arith.constant 0 : index
    %305 = vector.load %arg14[%c50_202, %c0_203] : memref<64x32xf32, #tpu.memory_space<vmem>>, vector<1x32xf32>
    tpu.vector_store %arg14[%c50_202, %c0_203], %304 {strides = array<i32>} : memref<64x32xf32, #tpu.memory_space<vmem>>, vector<1x32xf32>,
    %306 = arith.index_cast %arg0 : i32 to index
    %c51 = arith.constant 51 : index
    %307 = memref.load %arg1[%306, %c51] : memref<1x64xi32, #tpu.memory_space<smem>>
    %308 = arith.index_cast %307 : i32 to index
    %c0_204 = arith.constant 0 : index
    %c0_205 = arith.constant 0 : index
    %309 = vector.load %arg2[%308, %c0_204, %c0_205] : memref<64x1x32xf32, #tpu.memory_space<vmem>>, vector<1x1x32xf32>
    %310 = vector.shape_cast %309 : vector<1x1x32xf32> to vector<1x32xf32>
    %c51_206 = arith.constant 51 : index
    %c0_207 = arith.constant 0 : index
    %311 = vector.load %arg14[%c51_206, %c0_207] : memref<64x32xf32, #tpu.memory_space<vmem>>, vector<1x32xf32>
    tpu.vector_store %arg14[%c51_206, %c0_207], %310 {strides = array<i32>} : memref<64x32xf32, #tpu.memory_space<vmem>>, vector<1x32xf32>,
    %312 = arith.index_cast %arg0 : i32 to index
    %c52 = arith.constant 52 : index
    %313 = memref.load %arg1[%312, %c52] : memref<1x64xi32, #tpu.memory_space<smem>>
    %314 = arith.index_cast %313 : i32 to index
    %c0_208 = arith.constant 0 : index
    %c0_209 = arith.constant 0 : index
    %315 = vector.load %arg2[%314, %c0_208, %c0_209] : memref<64x1x32xf32, #tpu.memory_space<vmem>>, vector<1x1x32xf32>
    %316 = vector.shape_cast %315 : vector<1x1x32xf32> to vector<1x32xf32>
    %c52_210 = arith.constant 52 : index
    %c0_211 = arith.constant 0 : index
    %317 = vector.load %arg14[%c52_210, %c0_211] : memref<64x32xf32, #tpu.memory_space<vmem>>, vector<1x32xf32>
    tpu.vector_store %arg14[%c52_210, %c0_211], %316 {strides = array<i32>} : memref<64x32xf32, #tpu.memory_space<vmem>>, vector<1x32xf32>,
    %318 = arith.index_cast %arg0 : i32 to index
    %c53 = arith.constant 53 : index
    %319 = memref.load %arg1[%318, %c53] : memref<1x64xi32, #tpu.memory_space<smem>>
    %320 = arith.index_cast %319 : i32 to index
    %c0_212 = arith.constant 0 : index
    %c0_213 = arith.constant 0 : index
    %321 = vector.load %arg2[%320, %c0_212, %c0_213] : memref<64x1x32xf32, #tpu.memory_space<vmem>>, vector<1x1x32xf32>
    %322 = vector.shape_cast %321 : vector<1x1x32xf32> to vector<1x32xf32>
    %c53_214 = arith.constant 53 : index
    %c0_215 = arith.constant 0 : index
    %323 = vector.load %arg14[%c53_214, %c0_215] : memref<64x32xf32, #tpu.memory_space<vmem>>, vector<1x32xf32>
    tpu.vector_store %arg14[%c53_214, %c0_215], %322 {strides = array<i32>} : memref<64x32xf32, #tpu.memory_space<vmem>>, vector<1x32xf32>,
    %324 = arith.index_cast %arg0 : i32 to index
    %c54 = arith.constant 54 : index
    %325 = memref.load %arg1[%324, %c54] : memref<1x64xi32, #tpu.memory_space<smem>>
    %326 = arith.index_cast %325 : i32 to index
    %c0_216 = arith.constant 0 : index
    %c0_217 = arith.constant 0 : index
    %327 = vector.load %arg2[%326, %c0_216, %c0_217] : memref<64x1x32xf32, #tpu.memory_space<vmem>>, vector<1x1x32xf32>
    %328 = vector.shape_cast %327 : vector<1x1x32xf32> to vector<1x32xf32>
    %c54_218 = arith.constant 54 : index
    %c0_219 = arith.constant 0 : index
    %329 = vector.load %arg14[%c54_218, %c0_219] : memref<64x32xf32, #tpu.memory_space<vmem>>, vector<1x32xf32>
    tpu.vector_store %arg14[%c54_218, %c0_219], %328 {strides = array<i32>} : memref<64x32xf32, #tpu.memory_space<vmem>>, vector<1x32xf32>,
    %330 = arith.index_cast %arg0 : i32 to index
    %c55 = arith.constant 55 : index
    %331 = memref.load %arg1[%330, %c55] : memref<1x64xi32, #tpu.memory_space<smem>>
    %332 = arith.index_cast %331 : i32 to index
    %c0_220 = arith.constant 0 : index
    %c0_221 = arith.constant 0 : index
    %333 = vector.load %arg2[%332, %c0_220, %c0_221] : memref<64x1x32xf32, #tpu.memory_space<vmem>>, vector<1x1x32xf32>
    %334 = vector.shape_cast %333 : vector<1x1x32xf32> to vector<1x32xf32>
    %c55_222 = arith.constant 55 : index
    %c0_223 = arith.constant 0 : index
    %335 = vector.load %arg14[%c55_222, %c0_223] : memref<64x32xf32, #tpu.memory_space<vmem>>, vector<1x32xf32>
    tpu.vector_store %arg14[%c55_222, %c0_223], %334 {strides = array<i32>} : memref<64x32xf32, #tpu.memory_space<vmem>>, vector<1x32xf32>,
    %336 = arith.index_cast %arg0 : i32 to index
    %c56 = arith.constant 56 : index
    %337 = memref.load %arg1[%336, %c56] : memref<1x64xi32, #tpu.memory_space<smem>>
    %338 = arith.index_cast %337 : i32 to index
    %c0_224 = arith.constant 0 : index
    %c0_225 = arith.constant 0 : index
    %339 = vector.load %arg2[%338, %c0_224, %c0_225] : memref<64x1x32xf32, #tpu.memory_space<vmem>>, vector<1x1x32xf32>
    %340 = vector.shape_cast %339 : vector<1x1x32xf32> to vector<1x32xf32>
    %c56_226 = arith.constant 56 : index
    %c0_227 = arith.constant 0 : index
    %341 = vector.load %arg14[%c56_226, %c0_227] : memref<64x32xf32, #tpu.memory_space<vmem>>, vector<1x32xf32>
    tpu.vector_store %arg14[%c56_226, %c0_227], %340 {strides = array<i32>} : memref<64x32xf32, #tpu.memory_space<vmem>>, vector<1x32xf32>,
    %342 = arith.index_cast %arg0 : i32 to index
    %c57 = arith.constant 57 : index
    %343 = memref.load %arg1[%342, %c57] : memref<1x64xi32, #tpu.memory_space<smem>>
    %344 = arith.index_cast %343 : i32 to index
    %c0_228 = arith.constant 0 : index
    %c0_229 = arith.constant 0 : index
    %345 = vector.load %arg2[%344, %c0_228, %c0_229] : memref<64x1x32xf32, #tpu.memory_space<vmem>>, vector<1x1x32xf32>
    %346 = vector.shape_cast %345 : vector<1x1x32xf32> to vector<1x32xf32>
    %c57_230 = arith.constant 57 : index
    %c0_231 = arith.constant 0 : index
    %347 = vector.load %arg14[%c57_230, %c0_231] : memref<64x32xf32, #tpu.memory_space<vmem>>, vector<1x32xf32>
    tpu.vector_store %arg14[%c57_230, %c0_231], %346 {strides = array<i32>} : memref<64x32xf32, #tpu.memory_space<vmem>>, vector<1x32xf32>,
    %348 = arith.index_cast %arg0 : i32 to index
    %c58 = arith.constant 58 : index
    %349 = memref.load %arg1[%348, %c58] : memref<1x64xi32, #tpu.memory_space<smem>>
    %350 = arith.index_cast %349 : i32 to index
    %c0_232 = arith.constant 0 : index
    %c0_233 = arith.constant 0 : index
    %351 = vector.load %arg2[%350, %c0_232, %c0_233] : memref<64x1x32xf32, #tpu.memory_space<vmem>>, vector<1x1x32xf32>
    %352 = vector.shape_cast %351 : vector<1x1x32xf32> to vector<1x32xf32>
    %c58_234 = arith.constant 58 : index
    %c0_235 = arith.constant 0 : index
    %353 = vector.load %arg14[%c58_234, %c0_235] : memref<64x32xf32, #tpu.memory_space<vmem>>, vector<1x32xf32>
    tpu.vector_store %arg14[%c58_234, %c0_235], %352 {strides = array<i32>} : memref<64x32xf32, #tpu.memory_space<vmem>>, vector<1x32xf32>,
    %354 = arith.index_cast %arg0 : i32 to index
    %c59 = arith.constant 59 : index
    %355 = memref.load %arg1[%354, %c59] : memref<1x64xi32, #tpu.memory_space<smem>>
    %356 = arith.index_cast %355 : i32 to index
    %c0_236 = arith.constant 0 : index
    %c0_237 = arith.constant 0 : index
    %357 = vector.load %arg2[%356, %c0_236, %c0_237] : memref<64x1x32xf32, #tpu.memory_space<vmem>>, vector<1x1x32xf32>
    %358 = vector.shape_cast %357 : vector<1x1x32xf32> to vector<1x32xf32>
    %c59_238 = arith.constant 59 : index
    %c0_239 = arith.constant 0 : index
    %359 = vector.load %arg14[%c59_238, %c0_239] : memref<64x32xf32, #tpu.memory_space<vmem>>, vector<1x32xf32>
    tpu.vector_store %arg14[%c59_238, %c0_239], %358 {strides = array<i32>} : memref<64x32xf32, #tpu.memory_space<vmem>>, vector<1x32xf32>,
    %360 = arith.index_cast %arg0 : i32 to index
    %c60 = arith.constant 60 : index
    %361 = memref.load %arg1[%360, %c60] : memref<1x64xi32, #tpu.memory_space<smem>>
    %362 = arith.index_cast %361 : i32 to index
    %c0_240 = arith.constant 0 : index
    %c0_241 = arith.constant 0 : index
    %363 = vector.load %arg2[%362, %c0_240, %c0_241] : memref<64x1x32xf32, #tpu.memory_space<vmem>>, vector<1x1x32xf32>
    %364 = vector.shape_cast %363 : vector<1x1x32xf32> to vector<1x32xf32>
    %c60_242 = arith.constant 60 : index
    %c0_243 = arith.constant 0 : index
    %365 = vector.load %arg14[%c60_242, %c0_243] : memref<64x32xf32, #tpu.memory_space<vmem>>, vector<1x32xf32>
    tpu.vector_store %arg14[%c60_242, %c0_243], %364 {strides = array<i32>} : memref<64x32xf32, #tpu.memory_space<vmem>>, vector<1x32xf32>,
    %366 = arith.index_cast %arg0 : i32 to index
    %c61 = arith.constant 61 : index
    %367 = memref.load %arg1[%366, %c61] : memref<1x64xi32, #tpu.memory_space<smem>>
    %368 = arith.index_cast %367 : i32 to index
    %c0_244 = arith.constant 0 : index
    %c0_245 = arith.constant 0 : index
    %369 = vector.load %arg2[%368, %c0_244, %c0_245] : memref<64x1x32xf32, #tpu.memory_space<vmem>>, vector<1x1x32xf32>
    %370 = vector.shape_cast %369 : vector<1x1x32xf32> to vector<1x32xf32>
    %c61_246 = arith.constant 61 : index
    %c0_247 = arith.constant 0 : index
    %371 = vector.load %arg14[%c61_246, %c0_247] : memref<64x32xf32, #tpu.memory_space<vmem>>, vector<1x32xf32>
    tpu.vector_store %arg14[%c61_246, %c0_247], %370 {strides = array<i32>} : memref<64x32xf32, #tpu.memory_space<vmem>>, vector<1x32xf32>,
    %372 = arith.index_cast %arg0 : i32 to index
    %c62 = arith.constant 62 : index
    %373 = memref.load %arg1[%372, %c62] : memref<1x64xi32, #tpu.memory_space<smem>>
    %374 = arith.index_cast %373 : i32 to index
    %c0_248 = arith.constant 0 : index
    %c0_249 = arith.constant 0 : index
    %375 = vector.load %arg2[%374, %c0_248, %c0_249] : memref<64x1x32xf32, #tpu.memory_space<vmem>>, vector<1x1x32xf32>
    %376 = vector.shape_cast %375 : vector<1x1x32xf32> to vector<1x32xf32>
    %c62_250 = arith.constant 62 : index
    %c0_251 = arith.constant 0 : index
    %377 = vector.load %arg14[%c62_250, %c0_251] : memref<64x32xf32, #tpu.memory_space<vmem>>, vector<1x32xf32>
    tpu.vector_store %arg14[%c62_250, %c0_251], %376 {strides = array<i32>} : memref<64x32xf32, #tpu.memory_space<vmem>>, vector<1x32xf32>,
    %378 = arith.index_cast %arg0 : i32 to index
    %c63 = arith.constant 63 : index
    %379 = memref.load %arg1[%378, %c63] : memref<1x64xi32, #tpu.memory_space<smem>>
    %380 = arith.index_cast %379 : i32 to index
    %c0_252 = arith.constant 0 : index
    %c0_253 = arith.constant 0 : index
    %381 = vector.load %arg2[%380, %c0_252, %c0_253] : memref<64x1x32xf32, #tpu.memory_space<vmem>>, vector<1x1x32xf32>
    %382 = vector.shape_cast %381 : vector<1x1x32xf32> to vector<1x32xf32>
    %c63_254 = arith.constant 63 : index
    %c0_255 = arith.constant 0 : index
    %383 = vector.load %arg14[%c63_254, %c0_255] : memref<64x32xf32, #tpu.memory_space<vmem>>, vector<1x32xf32>
    tpu.vector_store %arg14[%c63_254, %c0_255], %382 {strides = array<i32>} : memref<64x32xf32, #tpu.memory_space<vmem>>, vector<1x32xf32>,
    %c0_256 = arith.constant 0 : index
    %c0_257 = arith.constant 0 : index
    %384 = vector.load %arg3[%c0_256, %c0_257] : memref<32x128xbf16, #tpu.memory_space<vmem>>, vector<32x128xbf16>
    %c0_258 = arith.constant 0 : index
    %c0_259 = arith.constant 0 : index
    %385 = vector.load %arg4[%c0_258, %c0_259] : memref<32x128xbf16, #tpu.memory_space<vmem>>, vector<32x128xbf16>
    %c0_260 = arith.constant 0 : index
    %c0_261 = arith.constant 0 : index
    %386 = vector.load %arg5[%c0_260, %c0_261] : memref<1x128xf32, #tpu.memory_space<vmem>>, vector<1x128xf32>
    %c0_262 = arith.constant 0 : index
    %c0_263 = arith.constant 0 : index
    %387 = vector.load %arg14[%c0_262, %c0_263] : memref<64x32xf32, #tpu.memory_space<vmem>>, vector<64x32xf32>
    %388 = arith.truncf %387 : vector<64x32xf32> to vector<64x32xbf16>
    %cst = arith.constant dense<0.000000e+00> : vector<64x128xf32>
    %389 = tpu.matmul %388, %384, %cst {dimension_numbers = #tpu.dot_dimension_numbers<[1], [0], [0], [1], [0, 0, 1, 1], [], []>} : vector<64x32xbf16>, vector<32x128xbf16>, vector<64x128xf32> -> vector<64x128xf32>
    %390 = vector.broadcast %386 : vector<1x128xf32> to vector<64x128xf32>
    %391 = arith.addf %389, %390 : vector<64x128xf32>
    %c0_264 = arith.constant 0 : index
    %c0_265 = arith.constant 0 : index
    %392 = vector.load %arg15[%c0_264, %c0_265] : memref<64x128xf32, #tpu.memory_space<vmem>>, vector<64x128xf32>
    tpu.vector_store %arg15[%c0_264, %c0_265], %391 {strides = array<i32>} : memref<64x128xf32, #tpu.memory_space<vmem>>, vector<64x128xf32>,
    %cst_266 = arith.constant 0.000000e+00 : f32
    %393 = vector.broadcast %cst_266 : f32 to vector<8x32xf32>
    %cst_267 = arith.constant 0.000000e+00 : f32
    %394 = vector.broadcast %cst_267 : f32 to vector<8x32xf32>
    %c0_268 = arith.constant 0 : index
    %c0_269 = arith.constant 0 : index
    %395 = vector.load %arg15[%c0_268, %c0_269] : memref<64x128xf32, #tpu.memory_space<vmem>>, vector<8x128xf32>
    %396 = arith.truncf %393 : vector<8x32xf32> to vector<8x32xbf16>
    %cst_270 = arith.constant dense<0.000000e+00> : vector<8x128xf32>
    %397 = tpu.matmul %396, %385, %cst_270 {dimension_numbers = #tpu.dot_dimension_numbers<[1], [0], [0], [1], [0, 0, 1, 1], [], []>} : vector<8x32xbf16>, vector<32x128xbf16>, vector<8x128xf32> -> vector<8x128xf32>
    %398 = arith.addf %395, %397 : vector<8x128xf32>
    %399 = arith.negf %398 : vector<8x128xf32>
    %400 = math.exp %399 : vector<8x128xf32>
    %cst_271 = arith.constant 1.000000e+00 : f32
    %401 = vector.broadcast %cst_271 : f32 to vector<8x128xf32>
    %402 = arith.addf %401, %400 : vector<8x128xf32>
    %403 = arith.divf %401, %402 : vector<8x128xf32>
    %404 = math.tanh %398 : vector<8x128xf32>
    %405 = vector.extract_strided_slice %403 {offsets = [0, 0], sizes = [8, 32], strides = [1, 1]} : vector<8x128xf32> to vector<8x32xf32>
    %406 = vector.extract_strided_slice %403 {offsets = [0, 32], sizes = [8, 32], strides = [1, 1]} : vector<8x128xf32> to vector<8x32xf32>
    %407 = vector.extract_strided_slice %404 {offsets = [0, 64], sizes = [8, 32], strides = [1, 1]} : vector<8x128xf32> to vector<8x32xf32>
    %408 = vector.extract_strided_slice %403 {offsets = [0, 96], sizes = [8, 32], strides = [1, 1]} : vector<8x128xf32> to vector<8x32xf32>
    %409 = arith.mulf %406, %394 : vector<8x32xf32>
    %410 = arith.mulf %405, %407 : vector<8x32xf32>
    %411 = arith.addf %409, %410 : vector<8x32xf32>
    %412 = math.tanh %411 : vector<8x32xf32>
    %413 = arith.mulf %408, %412 : vector<8x32xf32>
    %c0_272 = arith.constant 0 : index
    %c0_273 = arith.constant 0 : index
    %414 = vector.load %arg14[%c0_272, %c0_273] : memref<64x32xf32, #tpu.memory_space<vmem>>, vector<8x32xf32>
    tpu.vector_store %arg14[%c0_272, %c0_273], %413 {strides = array<i32>} : memref<64x32xf32, #tpu.memory_space<vmem>>, vector<8x32xf32>,
    %c8_274 = arith.constant 8 : index
    %c0_275 = arith.constant 0 : index
    %415 = vector.load %arg15[%c8_274, %c0_275] : memref<64x128xf32, #tpu.memory_space<vmem>>, vector<8x128xf32>
    %416 = arith.truncf %413 : vector<8x32xf32> to vector<8x32xbf16>
    %cst_276 = arith.constant dense<0.000000e+00> : vector<8x128xf32>
    %417 = tpu.matmul %416, %385, %cst_276 {dimension_numbers = #tpu.dot_dimension_numbers<[1], [0], [0], [1], [0, 0, 1, 1], [], []>} : vector<8x32xbf16>, vector<32x128xbf16>, vector<8x128xf32> -> vector<8x128xf32>
    %418 = arith.addf %415, %417 : vector<8x128xf32>
    %419 = arith.negf %418 : vector<8x128xf32>
    %420 = math.exp %419 : vector<8x128xf32>
    %cst_277 = arith.constant 1.000000e+00 : f32
    %421 = vector.broadcast %cst_277 : f32 to vector<8x128xf32>
    %422 = arith.addf %421, %420 : vector<8x128xf32>
    %423 = arith.divf %421, %422 : vector<8x128xf32>
    %424 = math.tanh %418 : vector<8x128xf32>
    %425 = vector.extract_strided_slice %423 {offsets = [0, 0], sizes = [8, 32], strides = [1, 1]} : vector<8x128xf32> to vector<8x32xf32>
    %426 = vector.extract_strided_slice %423 {offsets = [0, 32], sizes = [8, 32], strides = [1, 1]} : vector<8x128xf32> to vector<8x32xf32>
    %427 = vector.extract_strided_slice %424 {offsets = [0, 64], sizes = [8, 32], strides = [1, 1]} : vector<8x128xf32> to vector<8x32xf32>
    %428 = vector.extract_strided_slice %423 {offsets = [0, 96], sizes = [8, 32], strides = [1, 1]} : vector<8x128xf32> to vector<8x32xf32>
    %429 = arith.mulf %426, %411 : vector<8x32xf32>
    %430 = arith.mulf %425, %427 : vector<8x32xf32>
    %431 = arith.addf %429, %430 : vector<8x32xf32>
    %432 = math.tanh %431 : vector<8x32xf32>
    %433 = arith.mulf %428, %432 : vector<8x32xf32>
    %c8_278 = arith.constant 8 : index
    %c0_279 = arith.constant 0 : index
    %434 = vector.load %arg14[%c8_278, %c0_279] : memref<64x32xf32, #tpu.memory_space<vmem>>, vector<8x32xf32>
    tpu.vector_store %arg14[%c8_278, %c0_279], %433 {strides = array<i32>} : memref<64x32xf32, #tpu.memory_space<vmem>>, vector<8x32xf32>,
    %c16_280 = arith.constant 16 : index
    %c0_281 = arith.constant 0 : index
    %435 = vector.load %arg15[%c16_280, %c0_281] : memref<64x128xf32, #tpu.memory_space<vmem>>, vector<8x128xf32>
    %436 = arith.truncf %433 : vector<8x32xf32> to vector<8x32xbf16>
    %cst_282 = arith.constant dense<0.000000e+00> : vector<8x128xf32>
    %437 = tpu.matmul %436, %385, %cst_282 {dimension_numbers = #tpu.dot_dimension_numbers<[1], [0], [0], [1], [0, 0, 1, 1], [], []>} : vector<8x32xbf16>, vector<32x128xbf16>, vector<8x128xf32> -> vector<8x128xf32>
    %438 = arith.addf %435, %437 : vector<8x128xf32>
    %439 = arith.negf %438 : vector<8x128xf32>
    %440 = math.exp %439 : vector<8x128xf32>
    %cst_283 = arith.constant 1.000000e+00 : f32
    %441 = vector.broadcast %cst_283 : f32 to vector<8x128xf32>
    %442 = arith.addf %441, %440 : vector<8x128xf32>
    %443 = arith.divf %441, %442 : vector<8x128xf32>
    %444 = math.tanh %438 : vector<8x128xf32>
    %445 = vector.extract_strided_slice %443 {offsets = [0, 0], sizes = [8, 32], strides = [1, 1]} : vector<8x128xf32> to vector<8x32xf32>
    %446 = vector.extract_strided_slice %443 {offsets = [0, 32], sizes = [8, 32], strides = [1, 1]} : vector<8x128xf32> to vector<8x32xf32>
    %447 = vector.extract_strided_slice %444 {offsets = [0, 64], sizes = [8, 32], strides = [1, 1]} : vector<8x128xf32> to vector<8x32xf32>
    %448 = vector.extract_strided_slice %443 {offsets = [0, 96], sizes = [8, 32], strides = [1, 1]} : vector<8x128xf32> to vector<8x32xf32>
    %449 = arith.mulf %446, %431 : vector<8x32xf32>
    %450 = arith.mulf %445, %447 : vector<8x32xf32>
    %451 = arith.addf %449, %450 : vector<8x32xf32>
    %452 = math.tanh %451 : vector<8x32xf32>
    %453 = arith.mulf %448, %452 : vector<8x32xf32>
    %c16_284 = arith.constant 16 : index
    %c0_285 = arith.constant 0 : index
    %454 = vector.load %arg14[%c16_284, %c0_285] : memref<64x32xf32, #tpu.memory_space<vmem>>, vector<8x32xf32>
    tpu.vector_store %arg14[%c16_284, %c0_285], %453 {strides = array<i32>} : memref<64x32xf32, #tpu.memory_space<vmem>>, vector<8x32xf32>,
    %c24_286 = arith.constant 24 : index
    %c0_287 = arith.constant 0 : index
    %455 = vector.load %arg15[%c24_286, %c0_287] : memref<64x128xf32, #tpu.memory_space<vmem>>, vector<8x128xf32>
    %456 = arith.truncf %453 : vector<8x32xf32> to vector<8x32xbf16>
    %cst_288 = arith.constant dense<0.000000e+00> : vector<8x128xf32>
    %457 = tpu.matmul %456, %385, %cst_288 {dimension_numbers = #tpu.dot_dimension_numbers<[1], [0], [0], [1], [0, 0, 1, 1], [], []>} : vector<8x32xbf16>, vector<32x128xbf16>, vector<8x128xf32> -> vector<8x128xf32>
    %458 = arith.addf %455, %457 : vector<8x128xf32>
    %459 = arith.negf %458 : vector<8x128xf32>
    %460 = math.exp %459 : vector<8x128xf32>
    %cst_289 = arith.constant 1.000000e+00 : f32
    %461 = vector.broadcast %cst_289 : f32 to vector<8x128xf32>
    %462 = arith.addf %461, %460 : vector<8x128xf32>
    %463 = arith.divf %461, %462 : vector<8x128xf32>
    %464 = math.tanh %458 : vector<8x128xf32>
    %465 = vector.extract_strided_slice %463 {offsets = [0, 0], sizes = [8, 32], strides = [1, 1]} : vector<8x128xf32> to vector<8x32xf32>
    %466 = vector.extract_strided_slice %463 {offsets = [0, 32], sizes = [8, 32], strides = [1, 1]} : vector<8x128xf32> to vector<8x32xf32>
    %467 = vector.extract_strided_slice %464 {offsets = [0, 64], sizes = [8, 32], strides = [1, 1]} : vector<8x128xf32> to vector<8x32xf32>
    %468 = vector.extract_strided_slice %463 {offsets = [0, 96], sizes = [8, 32], strides = [1, 1]} : vector<8x128xf32> to vector<8x32xf32>
    %469 = arith.mulf %466, %451 : vector<8x32xf32>
    %470 = arith.mulf %465, %467 : vector<8x32xf32>
    %471 = arith.addf %469, %470 : vector<8x32xf32>
    %472 = math.tanh %471 : vector<8x32xf32>
    %473 = arith.mulf %468, %472 : vector<8x32xf32>
    %c24_290 = arith.constant 24 : index
    %c0_291 = arith.constant 0 : index
    %474 = vector.load %arg14[%c24_290, %c0_291] : memref<64x32xf32, #tpu.memory_space<vmem>>, vector<8x32xf32>
    tpu.vector_store %arg14[%c24_290, %c0_291], %473 {strides = array<i32>} : memref<64x32xf32, #tpu.memory_space<vmem>>, vector<8x32xf32>,
    %c32_292 = arith.constant 32 : index
    %c0_293 = arith.constant 0 : index
    %475 = vector.load %arg15[%c32_292, %c0_293] : memref<64x128xf32, #tpu.memory_space<vmem>>, vector<8x128xf32>
    %476 = arith.truncf %473 : vector<8x32xf32> to vector<8x32xbf16>
    %cst_294 = arith.constant dense<0.000000e+00> : vector<8x128xf32>
    %477 = tpu.matmul %476, %385, %cst_294 {dimension_numbers = #tpu.dot_dimension_numbers<[1], [0], [0], [1], [0, 0, 1, 1], [], []>} : vector<8x32xbf16>, vector<32x128xbf16>, vector<8x128xf32> -> vector<8x128xf32>
    %478 = arith.addf %475, %477 : vector<8x128xf32>
    %479 = arith.negf %478 : vector<8x128xf32>
    %480 = math.exp %479 : vector<8x128xf32>
    %cst_295 = arith.constant 1.000000e+00 : f32
    %481 = vector.broadcast %cst_295 : f32 to vector<8x128xf32>
    %482 = arith.addf %481, %480 : vector<8x128xf32>
    %483 = arith.divf %481, %482 : vector<8x128xf32>
    %484 = math.tanh %478 : vector<8x128xf32>
    %485 = vector.extract_strided_slice %483 {offsets = [0, 0], sizes = [8, 32], strides = [1, 1]} : vector<8x128xf32> to vector<8x32xf32>
    %486 = vector.extract_strided_slice %483 {offsets = [0, 32], sizes = [8, 32], strides = [1, 1]} : vector<8x128xf32> to vector<8x32xf32>
    %487 = vector.extract_strided_slice %484 {offsets = [0, 64], sizes = [8, 32], strides = [1, 1]} : vector<8x128xf32> to vector<8x32xf32>
    %488 = vector.extract_strided_slice %483 {offsets = [0, 96], sizes = [8, 32], strides = [1, 1]} : vector<8x128xf32> to vector<8x32xf32>
    %489 = arith.mulf %486, %471 : vector<8x32xf32>
    %490 = arith.mulf %485, %487 : vector<8x32xf32>
    %491 = arith.addf %489, %490 : vector<8x32xf32>
    %492 = math.tanh %491 : vector<8x32xf32>
    %493 = arith.mulf %488, %492 : vector<8x32xf32>
    %c32_296 = arith.constant 32 : index
    %c0_297 = arith.constant 0 : index
    %494 = vector.load %arg14[%c32_296, %c0_297] : memref<64x32xf32, #tpu.memory_space<vmem>>, vector<8x32xf32>
    tpu.vector_store %arg14[%c32_296, %c0_297], %493 {strides = array<i32>} : memref<64x32xf32, #tpu.memory_space<vmem>>, vector<8x32xf32>,
    %c40_298 = arith.constant 40 : index
    %c0_299 = arith.constant 0 : index
    %495 = vector.load %arg15[%c40_298, %c0_299] : memref<64x128xf32, #tpu.memory_space<vmem>>, vector<8x128xf32>
    %496 = arith.truncf %493 : vector<8x32xf32> to vector<8x32xbf16>
    %cst_300 = arith.constant dense<0.000000e+00> : vector<8x128xf32>
    %497 = tpu.matmul %496, %385, %cst_300 {dimension_numbers = #tpu.dot_dimension_numbers<[1], [0], [0], [1], [0, 0, 1, 1], [], []>} : vector<8x32xbf16>, vector<32x128xbf16>, vector<8x128xf32> -> vector<8x128xf32>
    %498 = arith.addf %495, %497 : vector<8x128xf32>
    %499 = arith.negf %498 : vector<8x128xf32>
    %500 = math.exp %499 : vector<8x128xf32>
    %cst_301 = arith.constant 1.000000e+00 : f32
    %501 = vector.broadcast %cst_301 : f32 to vector<8x128xf32>
    %502 = arith.addf %501, %500 : vector<8x128xf32>
    %503 = arith.divf %501, %502 : vector<8x128xf32>
    %504 = math.tanh %498 : vector<8x128xf32>
    %505 = vector.extract_strided_slice %503 {offsets = [0, 0], sizes = [8, 32], strides = [1, 1]} : vector<8x128xf32> to vector<8x32xf32>
    %506 = vector.extract_strided_slice %503 {offsets = [0, 32], sizes = [8, 32], strides = [1, 1]} : vector<8x128xf32> to vector<8x32xf32>
    %507 = vector.extract_strided_slice %504 {offsets = [0, 64], sizes = [8, 32], strides = [1, 1]} : vector<8x128xf32> to vector<8x32xf32>
    %508 = vector.extract_strided_slice %503 {offsets = [0, 96], sizes = [8, 32], strides = [1, 1]} : vector<8x128xf32> to vector<8x32xf32>
    %509 = arith.mulf %506, %491 : vector<8x32xf32>
    %510 = arith.mulf %505, %507 : vector<8x32xf32>
    %511 = arith.addf %509, %510 : vector<8x32xf32>
    %512 = math.tanh %511 : vector<8x32xf32>
    %513 = arith.mulf %508, %512 : vector<8x32xf32>
    %c40_302 = arith.constant 40 : index
    %c0_303 = arith.constant 0 : index
    %514 = vector.load %arg14[%c40_302, %c0_303] : memref<64x32xf32, #tpu.memory_space<vmem>>, vector<8x32xf32>
    tpu.vector_store %arg14[%c40_302, %c0_303], %513 {strides = array<i32>} : memref<64x32xf32, #tpu.memory_space<vmem>>, vector<8x32xf32>,
    %c48_304 = arith.constant 48 : index
    %c0_305 = arith.constant 0 : index
    %515 = vector.load %arg15[%c48_304, %c0_305] : memref<64x128xf32, #tpu.memory_space<vmem>>, vector<8x128xf32>
    %516 = arith.truncf %513 : vector<8x32xf32> to vector<8x32xbf16>
    %cst_306 = arith.constant dense<0.000000e+00> : vector<8x128xf32>
    %517 = tpu.matmul %516, %385, %cst_306 {dimension_numbers = #tpu.dot_dimension_numbers<[1], [0], [0], [1], [0, 0, 1, 1], [], []>} : vector<8x32xbf16>, vector<32x128xbf16>, vector<8x128xf32> -> vector<8x128xf32>
    %518 = arith.addf %515, %517 : vector<8x128xf32>
    %519 = arith.negf %518 : vector<8x128xf32>
    %520 = math.exp %519 : vector<8x128xf32>
    %cst_307 = arith.constant 1.000000e+00 : f32
    %521 = vector.broadcast %cst_307 : f32 to vector<8x128xf32>
    %522 = arith.addf %521, %520 : vector<8x128xf32>
    %523 = arith.divf %521, %522 : vector<8x128xf32>
    %524 = math.tanh %518 : vector<8x128xf32>
    %525 = vector.extract_strided_slice %523 {offsets = [0, 0], sizes = [8, 32], strides = [1, 1]} : vector<8x128xf32> to vector<8x32xf32>
    %526 = vector.extract_strided_slice %523 {offsets = [0, 32], sizes = [8, 32], strides = [1, 1]} : vector<8x128xf32> to vector<8x32xf32>
    %527 = vector.extract_strided_slice %524 {offsets = [0, 64], sizes = [8, 32], strides = [1, 1]} : vector<8x128xf32> to vector<8x32xf32>
    %528 = vector.extract_strided_slice %523 {offsets = [0, 96], sizes = [8, 32], strides = [1, 1]} : vector<8x128xf32> to vector<8x32xf32>
    %529 = arith.mulf %526, %511 : vector<8x32xf32>
    %530 = arith.mulf %525, %527 : vector<8x32xf32>
    %531 = arith.addf %529, %530 : vector<8x32xf32>
    %532 = math.tanh %531 : vector<8x32xf32>
    %533 = arith.mulf %528, %532 : vector<8x32xf32>
    %c48_308 = arith.constant 48 : index
    %c0_309 = arith.constant 0 : index
    %534 = vector.load %arg14[%c48_308, %c0_309] : memref<64x32xf32, #tpu.memory_space<vmem>>, vector<8x32xf32>
    tpu.vector_store %arg14[%c48_308, %c0_309], %533 {strides = array<i32>} : memref<64x32xf32, #tpu.memory_space<vmem>>, vector<8x32xf32>,
    %c56_310 = arith.constant 56 : index
    %c0_311 = arith.constant 0 : index
    %535 = vector.load %arg15[%c56_310, %c0_311] : memref<64x128xf32, #tpu.memory_space<vmem>>, vector<8x128xf32>
    %536 = arith.truncf %533 : vector<8x32xf32> to vector<8x32xbf16>
    %cst_312 = arith.constant dense<0.000000e+00> : vector<8x128xf32>
    %537 = tpu.matmul %536, %385, %cst_312 {dimension_numbers = #tpu.dot_dimension_numbers<[1], [0], [0], [1], [0, 0, 1, 1], [], []>} : vector<8x32xbf16>, vector<32x128xbf16>, vector<8x128xf32> -> vector<8x128xf32>
    %538 = arith.addf %535, %537 : vector<8x128xf32>
    %539 = arith.negf %538 : vector<8x128xf32>
    %540 = math.exp %539 : vector<8x128xf32>
    %cst_313 = arith.constant 1.000000e+00 : f32
    %541 = vector.broadcast %cst_313 : f32 to vector<8x128xf32>
    %542 = arith.addf %541, %540 : vector<8x128xf32>
    %543 = arith.divf %541, %542 : vector<8x128xf32>
    %544 = math.tanh %538 : vector<8x128xf32>
    %545 = vector.extract_strided_slice %543 {offsets = [0, 0], sizes = [8, 32], strides = [1, 1]} : vector<8x128xf32> to vector<8x32xf32>
    %546 = vector.extract_strided_slice %543 {offsets = [0, 32], sizes = [8, 32], strides = [1, 1]} : vector<8x128xf32> to vector<8x32xf32>
    %547 = vector.extract_strided_slice %544 {offsets = [0, 64], sizes = [8, 32], strides = [1, 1]} : vector<8x128xf32> to vector<8x32xf32>
    %548 = vector.extract_strided_slice %543 {offsets = [0, 96], sizes = [8, 32], strides = [1, 1]} : vector<8x128xf32> to vector<8x32xf32>
    %549 = arith.mulf %546, %531 : vector<8x32xf32>
    %550 = arith.mulf %545, %547 : vector<8x32xf32>
    %551 = arith.addf %549, %550 : vector<8x32xf32>
    %552 = math.tanh %551 : vector<8x32xf32>
    %553 = arith.mulf %548, %552 : vector<8x32xf32>
    %c56_314 = arith.constant 56 : index
    %c0_315 = arith.constant 0 : index
    %554 = vector.load %arg14[%c56_314, %c0_315] : memref<64x32xf32, #tpu.memory_space<vmem>>, vector<8x32xf32>
    tpu.vector_store %arg14[%c56_314, %c0_315], %553 {strides = array<i32>} : memref<64x32xf32, #tpu.memory_space<vmem>>, vector<8x32xf32>,
    %c0_316 = arith.constant 0 : index
    %c0_317 = arith.constant 0 : index
    %555 = vector.load %arg6[%c0_316, %c0_317] : memref<32x128xbf16, #tpu.memory_space<vmem>>, vector<32x128xbf16>
    %c0_318 = arith.constant 0 : index
    %c0_319 = arith.constant 0 : index
    %556 = vector.load %arg7[%c0_318, %c0_319] : memref<32x128xbf16, #tpu.memory_space<vmem>>, vector<32x128xbf16>
    %c0_320 = arith.constant 0 : index
    %c0_321 = arith.constant 0 : index
    %557 = vector.load %arg8[%c0_320, %c0_321] : memref<1x128xf32, #tpu.memory_space<vmem>>, vector<1x128xf32>
    %c0_322 = arith.constant 0 : index
    %c0_323 = arith.constant 0 : index
    %558 = vector.load %arg14[%c0_322, %c0_323] : memref<64x32xf32, #tpu.memory_space<vmem>>, vector<64x32xf32>
    %559 = arith.truncf %558 : vector<64x32xf32> to vector<64x32xbf16>
    %cst_324 = arith.constant dense<0.000000e+00> : vector<64x128xf32>
    %560 = tpu.matmul %559, %555, %cst_324 {dimension_numbers = #tpu.dot_dimension_numbers<[1], [0], [0], [1], [0, 0, 1, 1], [], []>} : vector<64x32xbf16>, vector<32x128xbf16>, vector<64x128xf32> -> vector<64x128xf32>
    %561 = vector.broadcast %557 : vector<1x128xf32> to vector<64x128xf32>
    %562 = arith.addf %560, %561 : vector<64x128xf32>
    %c0_325 = arith.constant 0 : index
    %c0_326 = arith.constant 0 : index
    %563 = vector.load %arg15[%c0_325, %c0_326] : memref<64x128xf32, #tpu.memory_space<vmem>>, vector<64x128xf32>
    tpu.vector_store %arg15[%c0_325, %c0_326], %562 {strides = array<i32>} : memref<64x128xf32, #tpu.memory_space<vmem>>, vector<64x128xf32>,
    %cst_327 = arith.constant 0.000000e+00 : f32
    %564 = vector.broadcast %cst_327 : f32 to vector<8x32xf32>
    %cst_328 = arith.constant 0.000000e+00 : f32
    %565 = vector.broadcast %cst_328 : f32 to vector<8x32xf32>
    %c0_329 = arith.constant 0 : index
    %c0_330 = arith.constant 0 : index
    %566 = vector.load %arg15[%c0_329, %c0_330] : memref<64x128xf32, #tpu.memory_space<vmem>>, vector<8x128xf32>
    %567 = arith.truncf %564 : vector<8x32xf32> to vector<8x32xbf16>
    %cst_331 = arith.constant dense<0.000000e+00> : vector<8x128xf32>
    %568 = tpu.matmul %567, %556, %cst_331 {dimension_numbers = #tpu.dot_dimension_numbers<[1], [0], [0], [1], [0, 0, 1, 1], [], []>} : vector<8x32xbf16>, vector<32x128xbf16>, vector<8x128xf32> -> vector<8x128xf32>
    %569 = arith.addf %566, %568 : vector<8x128xf32>
    %570 = arith.negf %569 : vector<8x128xf32>
    %571 = math.exp %570 : vector<8x128xf32>
    %cst_332 = arith.constant 1.000000e+00 : f32
    %572 = vector.broadcast %cst_332 : f32 to vector<8x128xf32>
    %573 = arith.addf %572, %571 : vector<8x128xf32>
    %574 = arith.divf %572, %573 : vector<8x128xf32>
    %575 = math.tanh %569 : vector<8x128xf32>
    %576 = vector.extract_strided_slice %574 {offsets = [0, 0], sizes = [8, 32], strides = [1, 1]} : vector<8x128xf32> to vector<8x32xf32>
    %577 = vector.extract_strided_slice %574 {offsets = [0, 32], sizes = [8, 32], strides = [1, 1]} : vector<8x128xf32> to vector<8x32xf32>
    %578 = vector.extract_strided_slice %575 {offsets = [0, 64], sizes = [8, 32], strides = [1, 1]} : vector<8x128xf32> to vector<8x32xf32>
    %579 = vector.extract_strided_slice %574 {offsets = [0, 96], sizes = [8, 32], strides = [1, 1]} : vector<8x128xf32> to vector<8x32xf32>
    %580 = arith.mulf %577, %565 : vector<8x32xf32>
    %581 = arith.mulf %576, %578 : vector<8x32xf32>
    %582 = arith.addf %580, %581 : vector<8x32xf32>
    %583 = math.tanh %582 : vector<8x32xf32>
    %584 = arith.mulf %579, %583 : vector<8x32xf32>
    %c0_333 = arith.constant 0 : index
    %c0_334 = arith.constant 0 : index
    %585 = vector.load %arg14[%c0_333, %c0_334] : memref<64x32xf32, #tpu.memory_space<vmem>>, vector<8x32xf32>
    tpu.vector_store %arg14[%c0_333, %c0_334], %584 {strides = array<i32>} : memref<64x32xf32, #tpu.memory_space<vmem>>, vector<8x32xf32>,
    %c8_335 = arith.constant 8 : index
    %c0_336 = arith.constant 0 : index
    %586 = vector.load %arg15[%c8_335, %c0_336] : memref<64x128xf32, #tpu.memory_space<vmem>>, vector<8x128xf32>
    %587 = arith.truncf %584 : vector<8x32xf32> to vector<8x32xbf16>
    %cst_337 = arith.constant dense<0.000000e+00> : vector<8x128xf32>
    %588 = tpu.matmul %587, %556, %cst_337 {dimension_numbers = #tpu.dot_dimension_numbers<[1], [0], [0], [1], [0, 0, 1, 1], [], []>} : vector<8x32xbf16>, vector<32x128xbf16>, vector<8x128xf32> -> vector<8x128xf32>
    %589 = arith.addf %586, %588 : vector<8x128xf32>
    %590 = arith.negf %589 : vector<8x128xf32>
    %591 = math.exp %590 : vector<8x128xf32>
    %cst_338 = arith.constant 1.000000e+00 : f32
    %592 = vector.broadcast %cst_338 : f32 to vector<8x128xf32>
    %593 = arith.addf %592, %591 : vector<8x128xf32>
    %594 = arith.divf %592, %593 : vector<8x128xf32>
    %595 = math.tanh %589 : vector<8x128xf32>
    %596 = vector.extract_strided_slice %594 {offsets = [0, 0], sizes = [8, 32], strides = [1, 1]} : vector<8x128xf32> to vector<8x32xf32>
    %597 = vector.extract_strided_slice %594 {offsets = [0, 32], sizes = [8, 32], strides = [1, 1]} : vector<8x128xf32> to vector<8x32xf32>
    %598 = vector.extract_strided_slice %595 {offsets = [0, 64], sizes = [8, 32], strides = [1, 1]} : vector<8x128xf32> to vector<8x32xf32>
    %599 = vector.extract_strided_slice %594 {offsets = [0, 96], sizes = [8, 32], strides = [1, 1]} : vector<8x128xf32> to vector<8x32xf32>
    %600 = arith.mulf %597, %582 : vector<8x32xf32>
    %601 = arith.mulf %596, %598 : vector<8x32xf32>
    %602 = arith.addf %600, %601 : vector<8x32xf32>
    %603 = math.tanh %602 : vector<8x32xf32>
    %604 = arith.mulf %599, %603 : vector<8x32xf32>
    %c8_339 = arith.constant 8 : index
    %c0_340 = arith.constant 0 : index
    %605 = vector.load %arg14[%c8_339, %c0_340] : memref<64x32xf32, #tpu.memory_space<vmem>>, vector<8x32xf32>
    tpu.vector_store %arg14[%c8_339, %c0_340], %604 {strides = array<i32>} : memref<64x32xf32, #tpu.memory_space<vmem>>, vector<8x32xf32>,
    %c16_341 = arith.constant 16 : index
    %c0_342 = arith.constant 0 : index
    %606 = vector.load %arg15[%c16_341, %c0_342] : memref<64x128xf32, #tpu.memory_space<vmem>>, vector<8x128xf32>
    %607 = arith.truncf %604 : vector<8x32xf32> to vector<8x32xbf16>
    %cst_343 = arith.constant dense<0.000000e+00> : vector<8x128xf32>
    %608 = tpu.matmul %607, %556, %cst_343 {dimension_numbers = #tpu.dot_dimension_numbers<[1], [0], [0], [1], [0, 0, 1, 1], [], []>} : vector<8x32xbf16>, vector<32x128xbf16>, vector<8x128xf32> -> vector<8x128xf32>
    %609 = arith.addf %606, %608 : vector<8x128xf32>
    %610 = arith.negf %609 : vector<8x128xf32>
    %611 = math.exp %610 : vector<8x128xf32>
    %cst_344 = arith.constant 1.000000e+00 : f32
    %612 = vector.broadcast %cst_344 : f32 to vector<8x128xf32>
    %613 = arith.addf %612, %611 : vector<8x128xf32>
    %614 = arith.divf %612, %613 : vector<8x128xf32>
    %615 = math.tanh %609 : vector<8x128xf32>
    %616 = vector.extract_strided_slice %614 {offsets = [0, 0], sizes = [8, 32], strides = [1, 1]} : vector<8x128xf32> to vector<8x32xf32>
    %617 = vector.extract_strided_slice %614 {offsets = [0, 32], sizes = [8, 32], strides = [1, 1]} : vector<8x128xf32> to vector<8x32xf32>
    %618 = vector.extract_strided_slice %615 {offsets = [0, 64], sizes = [8, 32], strides = [1, 1]} : vector<8x128xf32> to vector<8x32xf32>
    %619 = vector.extract_strided_slice %614 {offsets = [0, 96], sizes = [8, 32], strides = [1, 1]} : vector<8x128xf32> to vector<8x32xf32>
    %620 = arith.mulf %617, %602 : vector<8x32xf32>
    %621 = arith.mulf %616, %618 : vector<8x32xf32>
    %622 = arith.addf %620, %621 : vector<8x32xf32>
    %623 = math.tanh %622 : vector<8x32xf32>
    %624 = arith.mulf %619, %623 : vector<8x32xf32>
    %c16_345 = arith.constant 16 : index
    %c0_346 = arith.constant 0 : index
    %625 = vector.load %arg14[%c16_345, %c0_346] : memref<64x32xf32, #tpu.memory_space<vmem>>, vector<8x32xf32>
    tpu.vector_store %arg14[%c16_345, %c0_346], %624 {strides = array<i32>} : memref<64x32xf32, #tpu.memory_space<vmem>>, vector<8x32xf32>,
    %c24_347 = arith.constant 24 : index
    %c0_348 = arith.constant 0 : index
    %626 = vector.load %arg15[%c24_347, %c0_348] : memref<64x128xf32, #tpu.memory_space<vmem>>, vector<8x128xf32>
    %627 = arith.truncf %624 : vector<8x32xf32> to vector<8x32xbf16>
    %cst_349 = arith.constant dense<0.000000e+00> : vector<8x128xf32>
    %628 = tpu.matmul %627, %556, %cst_349 {dimension_numbers = #tpu.dot_dimension_numbers<[1], [0], [0], [1], [0, 0, 1, 1], [], []>} : vector<8x32xbf16>, vector<32x128xbf16>, vector<8x128xf32> -> vector<8x128xf32>
    %629 = arith.addf %626, %628 : vector<8x128xf32>
    %630 = arith.negf %629 : vector<8x128xf32>
    %631 = math.exp %630 : vector<8x128xf32>
    %cst_350 = arith.constant 1.000000e+00 : f32
    %632 = vector.broadcast %cst_350 : f32 to vector<8x128xf32>
    %633 = arith.addf %632, %631 : vector<8x128xf32>
    %634 = arith.divf %632, %633 : vector<8x128xf32>
    %635 = math.tanh %629 : vector<8x128xf32>
    %636 = vector.extract_strided_slice %634 {offsets = [0, 0], sizes = [8, 32], strides = [1, 1]} : vector<8x128xf32> to vector<8x32xf32>
    %637 = vector.extract_strided_slice %634 {offsets = [0, 32], sizes = [8, 32], strides = [1, 1]} : vector<8x128xf32> to vector<8x32xf32>
    %638 = vector.extract_strided_slice %635 {offsets = [0, 64], sizes = [8, 32], strides = [1, 1]} : vector<8x128xf32> to vector<8x32xf32>
    %639 = vector.extract_strided_slice %634 {offsets = [0, 96], sizes = [8, 32], strides = [1, 1]} : vector<8x128xf32> to vector<8x32xf32>
    %640 = arith.mulf %637, %622 : vector<8x32xf32>
    %641 = arith.mulf %636, %638 : vector<8x32xf32>
    %642 = arith.addf %640, %641 : vector<8x32xf32>
    %643 = math.tanh %642 : vector<8x32xf32>
    %644 = arith.mulf %639, %643 : vector<8x32xf32>
    %c24_351 = arith.constant 24 : index
    %c0_352 = arith.constant 0 : index
    %645 = vector.load %arg14[%c24_351, %c0_352] : memref<64x32xf32, #tpu.memory_space<vmem>>, vector<8x32xf32>
    tpu.vector_store %arg14[%c24_351, %c0_352], %644 {strides = array<i32>} : memref<64x32xf32, #tpu.memory_space<vmem>>, vector<8x32xf32>,
    %c32_353 = arith.constant 32 : index
    %c0_354 = arith.constant 0 : index
    %646 = vector.load %arg15[%c32_353, %c0_354] : memref<64x128xf32, #tpu.memory_space<vmem>>, vector<8x128xf32>
    %647 = arith.truncf %644 : vector<8x32xf32> to vector<8x32xbf16>
    %cst_355 = arith.constant dense<0.000000e+00> : vector<8x128xf32>
    %648 = tpu.matmul %647, %556, %cst_355 {dimension_numbers = #tpu.dot_dimension_numbers<[1], [0], [0], [1], [0, 0, 1, 1], [], []>} : vector<8x32xbf16>, vector<32x128xbf16>, vector<8x128xf32> -> vector<8x128xf32>
    %649 = arith.addf %646, %648 : vector<8x128xf32>
    %650 = arith.negf %649 : vector<8x128xf32>
    %651 = math.exp %650 : vector<8x128xf32>
    %cst_356 = arith.constant 1.000000e+00 : f32
    %652 = vector.broadcast %cst_356 : f32 to vector<8x128xf32>
    %653 = arith.addf %652, %651 : vector<8x128xf32>
    %654 = arith.divf %652, %653 : vector<8x128xf32>
    %655 = math.tanh %649 : vector<8x128xf32>
    %656 = vector.extract_strided_slice %654 {offsets = [0, 0], sizes = [8, 32], strides = [1, 1]} : vector<8x128xf32> to vector<8x32xf32>
    %657 = vector.extract_strided_slice %654 {offsets = [0, 32], sizes = [8, 32], strides = [1, 1]} : vector<8x128xf32> to vector<8x32xf32>
    %658 = vector.extract_strided_slice %655 {offsets = [0, 64], sizes = [8, 32], strides = [1, 1]} : vector<8x128xf32> to vector<8x32xf32>
    %659 = vector.extract_strided_slice %654 {offsets = [0, 96], sizes = [8, 32], strides = [1, 1]} : vector<8x128xf32> to vector<8x32xf32>
    %660 = arith.mulf %657, %642 : vector<8x32xf32>
    %661 = arith.mulf %656, %658 : vector<8x32xf32>
    %662 = arith.addf %660, %661 : vector<8x32xf32>
    %663 = math.tanh %662 : vector<8x32xf32>
    %664 = arith.mulf %659, %663 : vector<8x32xf32>
    %c32_357 = arith.constant 32 : index
    %c0_358 = arith.constant 0 : index
    %665 = vector.load %arg14[%c32_357, %c0_358] : memref<64x32xf32, #tpu.memory_space<vmem>>, vector<8x32xf32>
    tpu.vector_store %arg14[%c32_357, %c0_358], %664 {strides = array<i32>} : memref<64x32xf32, #tpu.memory_space<vmem>>, vector<8x32xf32>,
    %c40_359 = arith.constant 40 : index
    %c0_360 = arith.constant 0 : index
    %666 = vector.load %arg15[%c40_359, %c0_360] : memref<64x128xf32, #tpu.memory_space<vmem>>, vector<8x128xf32>
    %667 = arith.truncf %664 : vector<8x32xf32> to vector<8x32xbf16>
    %cst_361 = arith.constant dense<0.000000e+00> : vector<8x128xf32>
    %668 = tpu.matmul %667, %556, %cst_361 {dimension_numbers = #tpu.dot_dimension_numbers<[1], [0], [0], [1], [0, 0, 1, 1], [], []>} : vector<8x32xbf16>, vector<32x128xbf16>, vector<8x128xf32> -> vector<8x128xf32>
    %669 = arith.addf %666, %668 : vector<8x128xf32>
    %670 = arith.negf %669 : vector<8x128xf32>
    %671 = math.exp %670 : vector<8x128xf32>
    %cst_362 = arith.constant 1.000000e+00 : f32
    %672 = vector.broadcast %cst_362 : f32 to vector<8x128xf32>
    %673 = arith.addf %672, %671 : vector<8x128xf32>
    %674 = arith.divf %672, %673 : vector<8x128xf32>
    %675 = math.tanh %669 : vector<8x128xf32>
    %676 = vector.extract_strided_slice %674 {offsets = [0, 0], sizes = [8, 32], strides = [1, 1]} : vector<8x128xf32> to vector<8x32xf32>
    %677 = vector.extract_strided_slice %674 {offsets = [0, 32], sizes = [8, 32], strides = [1, 1]} : vector<8x128xf32> to vector<8x32xf32>
    %678 = vector.extract_strided_slice %675 {offsets = [0, 64], sizes = [8, 32], strides = [1, 1]} : vector<8x128xf32> to vector<8x32xf32>
    %679 = vector.extract_strided_slice %674 {offsets = [0, 96], sizes = [8, 32], strides = [1, 1]} : vector<8x128xf32> to vector<8x32xf32>
    %680 = arith.mulf %677, %662 : vector<8x32xf32>
    %681 = arith.mulf %676, %678 : vector<8x32xf32>
    %682 = arith.addf %680, %681 : vector<8x32xf32>
    %683 = math.tanh %682 : vector<8x32xf32>
    %684 = arith.mulf %679, %683 : vector<8x32xf32>
    %c40_363 = arith.constant 40 : index
    %c0_364 = arith.constant 0 : index
    %685 = vector.load %arg14[%c40_363, %c0_364] : memref<64x32xf32, #tpu.memory_space<vmem>>, vector<8x32xf32>
    tpu.vector_store %arg14[%c40_363, %c0_364], %684 {strides = array<i32>} : memref<64x32xf32, #tpu.memory_space<vmem>>, vector<8x32xf32>,
    %c48_365 = arith.constant 48 : index
    %c0_366 = arith.constant 0 : index
    %686 = vector.load %arg15[%c48_365, %c0_366] : memref<64x128xf32, #tpu.memory_space<vmem>>, vector<8x128xf32>
    %687 = arith.truncf %684 : vector<8x32xf32> to vector<8x32xbf16>
    %cst_367 = arith.constant dense<0.000000e+00> : vector<8x128xf32>
    %688 = tpu.matmul %687, %556, %cst_367 {dimension_numbers = #tpu.dot_dimension_numbers<[1], [0], [0], [1], [0, 0, 1, 1], [], []>} : vector<8x32xbf16>, vector<32x128xbf16>, vector<8x128xf32> -> vector<8x128xf32>
    %689 = arith.addf %686, %688 : vector<8x128xf32>
    %690 = arith.negf %689 : vector<8x128xf32>
    %691 = math.exp %690 : vector<8x128xf32>
    %cst_368 = arith.constant 1.000000e+00 : f32
    %692 = vector.broadcast %cst_368 : f32 to vector<8x128xf32>
    %693 = arith.addf %692, %691 : vector<8x128xf32>
    %694 = arith.divf %692, %693 : vector<8x128xf32>
    %695 = math.tanh %689 : vector<8x128xf32>
    %696 = vector.extract_strided_slice %694 {offsets = [0, 0], sizes = [8, 32], strides = [1, 1]} : vector<8x128xf32> to vector<8x32xf32>
    %697 = vector.extract_strided_slice %694 {offsets = [0, 32], sizes = [8, 32], strides = [1, 1]} : vector<8x128xf32> to vector<8x32xf32>
    %698 = vector.extract_strided_slice %695 {offsets = [0, 64], sizes = [8, 32], strides = [1, 1]} : vector<8x128xf32> to vector<8x32xf32>
    %699 = vector.extract_strided_slice %694 {offsets = [0, 96], sizes = [8, 32], strides = [1, 1]} : vector<8x128xf32> to vector<8x32xf32>
    %700 = arith.mulf %697, %682 : vector<8x32xf32>
    %701 = arith.mulf %696, %698 : vector<8x32xf32>
    %702 = arith.addf %700, %701 : vector<8x32xf32>
    %703 = math.tanh %702 : vector<8x32xf32>
    %704 = arith.mulf %699, %703 : vector<8x32xf32>
    %c48_369 = arith.constant 48 : index
    %c0_370 = arith.constant 0 : index
    %705 = vector.load %arg14[%c48_369, %c0_370] : memref<64x32xf32, #tpu.memory_space<vmem>>, vector<8x32xf32>
    tpu.vector_store %arg14[%c48_369, %c0_370], %704 {strides = array<i32>} : memref<64x32xf32, #tpu.memory_space<vmem>>, vector<8x32xf32>,
    %c56_371 = arith.constant 56 : index
    %c0_372 = arith.constant 0 : index
    %706 = vector.load %arg15[%c56_371, %c0_372] : memref<64x128xf32, #tpu.memory_space<vmem>>, vector<8x128xf32>
    %707 = arith.truncf %704 : vector<8x32xf32> to vector<8x32xbf16>
    %cst_373 = arith.constant dense<0.000000e+00> : vector<8x128xf32>
    %708 = tpu.matmul %707, %556, %cst_373 {dimension_numbers = #tpu.dot_dimension_numbers<[1], [0], [0], [1], [0, 0, 1, 1], [], []>} : vector<8x32xbf16>, vector<32x128xbf16>, vector<8x128xf32> -> vector<8x128xf32>
    %709 = arith.addf %706, %708 : vector<8x128xf32>
    %710 = arith.negf %709 : vector<8x128xf32>
    %711 = math.exp %710 : vector<8x128xf32>
    %cst_374 = arith.constant 1.000000e+00 : f32
    %712 = vector.broadcast %cst_374 : f32 to vector<8x128xf32>
    %713 = arith.addf %712, %711 : vector<8x128xf32>
    %714 = arith.divf %712, %713 : vector<8x128xf32>
    %715 = math.tanh %709 : vector<8x128xf32>
    %716 = vector.extract_strided_slice %714 {offsets = [0, 0], sizes = [8, 32], strides = [1, 1]} : vector<8x128xf32> to vector<8x32xf32>
    %717 = vector.extract_strided_slice %714 {offsets = [0, 32], sizes = [8, 32], strides = [1, 1]} : vector<8x128xf32> to vector<8x32xf32>
    %718 = vector.extract_strided_slice %715 {offsets = [0, 64], sizes = [8, 32], strides = [1, 1]} : vector<8x128xf32> to vector<8x32xf32>
    %719 = vector.extract_strided_slice %714 {offsets = [0, 96], sizes = [8, 32], strides = [1, 1]} : vector<8x128xf32> to vector<8x32xf32>
    %720 = arith.mulf %717, %702 : vector<8x32xf32>
    %721 = arith.mulf %716, %718 : vector<8x32xf32>
    %722 = arith.addf %720, %721 : vector<8x32xf32>
    %723 = math.tanh %722 : vector<8x32xf32>
    %724 = arith.mulf %719, %723 : vector<8x32xf32>
    %c56_375 = arith.constant 56 : index
    %c0_376 = arith.constant 0 : index
    %725 = vector.load %arg14[%c56_375, %c0_376] : memref<64x32xf32, #tpu.memory_space<vmem>>, vector<8x32xf32>
    tpu.vector_store %arg14[%c56_375, %c0_376], %724 {strides = array<i32>} : memref<64x32xf32, #tpu.memory_space<vmem>>, vector<8x32xf32>,
    %c0_377 = arith.constant 0 : index
    %c0_378 = arith.constant 0 : index
    %726 = vector.load %arg14[%c0_377, %c0_378] : memref<64x32xf32, #tpu.memory_space<vmem>>, vector<64x32xf32>
    %c0_379 = arith.constant 0 : index
    %c0_380 = arith.constant 0 : index
    %727 = vector.load %arg9[%c0_379, %c0_380] : memref<32x1xf32, #tpu.memory_space<vmem>>, vector<32x1xf32>
    %cst_381 = arith.constant dense<0.000000e+00> : vector<64x1xf32>
    %728 = tpu.matmul %726, %727, %cst_381 {dimension_numbers = #tpu.dot_dimension_numbers<[1], [0], [0], [1], [0, 0, 1, 1], [], []>} : vector<64x32xf32>, vector<32x1xf32>, vector<64x1xf32> -> vector<64x1xf32>
    %c0_382 = arith.constant 0 : index
    %c0_383 = arith.constant 0 : index
    %729 = vector.load %arg10[%c0_382, %c0_383] : memref<1x1xf32, #tpu.memory_space<vmem>>, vector<1x1xf32>
    %730 = vector.broadcast %729 : vector<1x1xf32> to vector<64x1xf32>
    %731 = arith.addf %728, %730 : vector<64x1xf32>
    %732 = vector.extract_strided_slice %731 {offsets = [0, 0], sizes = [8, 1], strides = [1, 1]} : vector<64x1xf32> to vector<8x1xf32>
    %733 = vector.extract_strided_slice %731 {offsets = [8, 0], sizes = [8, 1], strides = [1, 1]} : vector<64x1xf32> to vector<8x1xf32>
    %734 = vector.extract_strided_slice %731 {offsets = [16, 0], sizes = [8, 1], strides = [1, 1]} : vector<64x1xf32> to vector<8x1xf32>
    %735 = vector.extract_strided_slice %731 {offsets = [24, 0], sizes = [8, 1], strides = [1, 1]} : vector<64x1xf32> to vector<8x1xf32>
    %736 = vector.extract_strided_slice %731 {offsets = [32, 0], sizes = [8, 1], strides = [1, 1]} : vector<64x1xf32> to vector<8x1xf32>
    %737 = vector.extract_strided_slice %731 {offsets = [40, 0], sizes = [8, 1], strides = [1, 1]} : vector<64x1xf32> to vector<8x1xf32>
    %738 = vector.extract_strided_slice %731 {offsets = [48, 0], sizes = [8, 1], strides = [1, 1]} : vector<64x1xf32> to vector<8x1xf32>
    %739 = vector.extract_strided_slice %731 {offsets = [56, 0], sizes = [8, 1], strides = [1, 1]} : vector<64x1xf32> to vector<8x1xf32>
    %740 = arith.maximumf %732, %733 : vector<8x1xf32>
    %741 = arith.maximumf %740, %734 : vector<8x1xf32>
    %742 = arith.maximumf %741, %735 : vector<8x1xf32>
    %743 = arith.maximumf %742, %736 : vector<8x1xf32>
    %744 = arith.maximumf %743, %737 : vector<8x1xf32>
    %745 = arith.maximumf %744, %738 : vector<8x1xf32>
    %746 = arith.maximumf %745, %739 : vector<8x1xf32>
    %747 = arith.subf %732, %746 : vector<8x1xf32>
    %748 = math.exp %747 : vector<8x1xf32>
    %749 = arith.subf %733, %746 : vector<8x1xf32>
    %750 = math.exp %749 : vector<8x1xf32>
    %751 = arith.subf %734, %746 : vector<8x1xf32>
    %752 = math.exp %751 : vector<8x1xf32>
    %753 = arith.subf %735, %746 : vector<8x1xf32>
    %754 = math.exp %753 : vector<8x1xf32>
    %755 = arith.subf %736, %746 : vector<8x1xf32>
    %756 = math.exp %755 : vector<8x1xf32>
    %757 = arith.subf %737, %746 : vector<8x1xf32>
    %758 = math.exp %757 : vector<8x1xf32>
    %759 = arith.subf %738, %746 : vector<8x1xf32>
    %760 = math.exp %759 : vector<8x1xf32>
    %761 = arith.subf %739, %746 : vector<8x1xf32>
    %762 = math.exp %761 : vector<8x1xf32>
    %763 = arith.addf %748, %750 : vector<8x1xf32>
    %764 = arith.addf %763, %752 : vector<8x1xf32>
    %765 = arith.addf %764, %754 : vector<8x1xf32>
    %766 = arith.addf %765, %756 : vector<8x1xf32>
    %767 = arith.addf %766, %758 : vector<8x1xf32>
    %768 = arith.addf %767, %760 : vector<8x1xf32>
    %769 = arith.addf %768, %762 : vector<8x1xf32>
    %770 = tpu.reciprocal %769 {approx = true} : vector<8x1xf32> -> vector<8x1xf32>
    %cst_384 = arith.constant 0.000000e+00 : f32
    %771 = vector.broadcast %cst_384 : f32 to vector<8x32xf32>
    %772 = arith.mulf %748, %770 : vector<8x1xf32>
    %773 = vector.extract_strided_slice %726 {offsets = [0, 0], sizes = [8, 32], strides = [1, 1]} : vector<64x32xf32> to vector<8x32xf32>
    %774 = vector.broadcast %772 : vector<8x1xf32> to vector<8x32xf32>
    %775 = arith.mulf %774, %773 : vector<8x32xf32>
    %776 = arith.addf %771, %775 : vector<8x32xf32>
    %777 = arith.mulf %750, %770 : vector<8x1xf32>
    %778 = vector.extract_strided_slice %726 {offsets = [8, 0], sizes = [8, 32], strides = [1, 1]} : vector<64x32xf32> to vector<8x32xf32>
    %779 = vector.broadcast %777 : vector<8x1xf32> to vector<8x32xf32>
    %780 = arith.mulf %779, %778 : vector<8x32xf32>
    %781 = arith.addf %776, %780 : vector<8x32xf32>
    %782 = arith.mulf %752, %770 : vector<8x1xf32>
    %783 = vector.extract_strided_slice %726 {offsets = [16, 0], sizes = [8, 32], strides = [1, 1]} : vector<64x32xf32> to vector<8x32xf32>
    %784 = vector.broadcast %782 : vector<8x1xf32> to vector<8x32xf32>
    %785 = arith.mulf %784, %783 : vector<8x32xf32>
    %786 = arith.addf %781, %785 : vector<8x32xf32>
    %787 = arith.mulf %754, %770 : vector<8x1xf32>
    %788 = vector.extract_strided_slice %726 {offsets = [24, 0], sizes = [8, 32], strides = [1, 1]} : vector<64x32xf32> to vector<8x32xf32>
    %789 = vector.broadcast %787 : vector<8x1xf32> to vector<8x32xf32>
    %790 = arith.mulf %789, %788 : vector<8x32xf32>
    %791 = arith.addf %786, %790 : vector<8x32xf32>
    %792 = arith.mulf %756, %770 : vector<8x1xf32>
    %793 = vector.extract_strided_slice %726 {offsets = [32, 0], sizes = [8, 32], strides = [1, 1]} : vector<64x32xf32> to vector<8x32xf32>
    %794 = vector.broadcast %792 : vector<8x1xf32> to vector<8x32xf32>
    %795 = arith.mulf %794, %793 : vector<8x32xf32>
    %796 = arith.addf %791, %795 : vector<8x32xf32>
    %797 = arith.mulf %758, %770 : vector<8x1xf32>
    %798 = vector.extract_strided_slice %726 {offsets = [40, 0], sizes = [8, 32], strides = [1, 1]} : vector<64x32xf32> to vector<8x32xf32>
    %799 = vector.broadcast %797 : vector<8x1xf32> to vector<8x32xf32>
    %800 = arith.mulf %799, %798 : vector<8x32xf32>
    %801 = arith.addf %796, %800 : vector<8x32xf32>
    %802 = arith.mulf %760, %770 : vector<8x1xf32>
    %803 = vector.extract_strided_slice %726 {offsets = [48, 0], sizes = [8, 32], strides = [1, 1]} : vector<64x32xf32> to vector<8x32xf32>
    %804 = vector.broadcast %802 : vector<8x1xf32> to vector<8x32xf32>
    %805 = arith.mulf %804, %803 : vector<8x32xf32>
    %806 = arith.addf %801, %805 : vector<8x32xf32>
    %807 = arith.mulf %762, %770 : vector<8x1xf32>
    %808 = vector.extract_strided_slice %726 {offsets = [56, 0], sizes = [8, 32], strides = [1, 1]} : vector<64x32xf32> to vector<8x32xf32>
    %809 = vector.broadcast %807 : vector<8x1xf32> to vector<8x32xf32>
    %810 = arith.mulf %809, %808 : vector<8x32xf32>
    %811 = arith.addf %806, %810 : vector<8x32xf32>
    %812 = arith.truncf %811 : vector<8x32xf32> to vector<8x32xbf16>
    %c0_385 = arith.constant 0 : index
    %c0_386 = arith.constant 0 : index
    %813 = vector.load %arg11[%c0_385, %c0_386] : memref<32x128xbf16, #tpu.memory_space<vmem>>, vector<32x128xbf16>
    %cst_387 = arith.constant dense<0.000000e+00> : vector<8x128xf32>
    %814 = tpu.matmul %812, %813, %cst_387 {dimension_numbers = #tpu.dot_dimension_numbers<[1], [0], [0], [1], [0, 0, 1, 1], [], []>} : vector<8x32xbf16>, vector<32x128xbf16>, vector<8x128xf32> -> vector<8x128xf32>
    %c0_388 = arith.constant 0 : index
    %c0_389 = arith.constant 0 : index
    %815 = vector.load %arg12[%c0_388, %c0_389] : memref<1x128xf32, #tpu.memory_space<vmem>>, vector<1x128xf32>
    %816 = vector.broadcast %815 : vector<1x128xf32> to vector<8x128xf32>
    %817 = arith.addf %814, %816 : vector<8x128xf32>
    %c0_390 = arith.constant 0 : index
    %c0_391 = arith.constant 0 : index
    %818 = vector.load %arg13[%c0_390, %c0_391] : memref<8x128xf32, #tpu.memory_space<vmem>>, vector<8x128xf32>
    tpu.vector_store %arg13[%c0_390, %c0_391], %817 {strides = array<i32>} : memref<8x128xf32, #tpu.memory_space<vmem>>, vector<8x128xf32>,
    return
  }
  func.func @transform_0(%arg0: i32, %arg1: memref<1x64xi32, #tpu.memory_space<smem>>) -> (i32, i32, i32) {
    %c0_i32 = arith.constant 0 : i32
    %c0_i32_0 = arith.constant 0 : i32
    %c0_i32_1 = arith.constant 0 : i32
    %c0_i32_2 = arith.constant 0 : i32
    return %c0_i32, %c0_i32_0, %c0_i32_1 : i32, i32, i32
  }
  func.func @transform_1(%arg0: i32, %arg1: memref<1x64xi32, #tpu.memory_space<smem>>) -> (i32, i32) {
    %c0_i32 = arith.constant 0 : i32
    %c0_i32_0 = arith.constant 0 : i32
    %c0_i32_1 = arith.constant 0 : i32
    return %c0_i32, %c0_i32_0 : i32, i32
  }
  func.func @transform_2(%arg0: i32, %arg1: memref<1x64xi32, #tpu.memory_space<smem>>) -> (i32, i32) {
    %c0_i32 = arith.constant 0 : i32
    %c0_i32_0 = arith.constant 0 : i32
    %c0_i32_1 = arith.constant 0 : i32
    return %c0_i32, %c0_i32_0 : i32, i32
  }
  func.func @transform_3(%arg0: i32, %arg1: memref<1x64xi32, #tpu.memory_space<smem>>) -> (i32, i32) {
    %c0_i32 = arith.constant 0 : i32
    %c0_i32_0 = arith.constant 0 : i32
    %c0_i32_1 = arith.constant 0 : i32
    return %c0_i32, %c0_i32_0 : i32, i32
  }
  func.func @transform_4(%arg0: i32, %arg1: memref<1x64xi32, #tpu.memory_space<smem>>) -> (i32, i32) {
    %c0_i32 = arith.constant 0 : i32
    %c0_i32_0 = arith.constant 0 : i32
    %c0_i32_1 = arith.constant 0 : i32
    return %c0_i32, %c0_i32_0 : i32, i32
  }
  func.func @transform_5(%arg0: i32, %arg1: memref<1x64xi32, #tpu.memory_space<smem>>) -> (i32, i32) {
    %c0_i32 = arith.constant 0 : i32
    %c0_i32_0 = arith.constant 0 : i32
    %c0_i32_1 = arith.constant 0 : i32
    return %c0_i32, %c0_i32_0 : i32, i32
  }
  func.func @transform_6(%arg0: i32, %arg1: memref<1x64xi32, #tpu.memory_space<smem>>) -> (i32, i32) {
    %c0_i32 = arith.constant 0 : i32
    %c0_i32_0 = arith.constant 0 : i32
    %c0_i32_1 = arith.constant 0 : i32
    return %c0_i32, %c0_i32_0 : i32, i32
  }
  func.func @transform_7(%arg0: i32, %arg1: memref<1x64xi32, #tpu.memory_space<smem>>) -> (i32, i32) {
    %c0_i32 = arith.constant 0 : i32
    %c0_i32_0 = arith.constant 0 : i32
    %c0_i32_1 = arith.constant 0 : i32
    return %c0_i32, %c0_i32_0 : i32, i32
  }
  func.func @transform_8(%arg0: i32, %arg1: memref<1x64xi32, #tpu.memory_space<smem>>) -> (i32, i32) {
    %c0_i32 = arith.constant 0 : i32
    %c0_i32_0 = arith.constant 0 : i32
    %c0_i32_1 = arith.constant 0 : i32
    return %c0_i32, %c0_i32_0 : i32, i32
  }
  func.func @transform_9(%arg0: i32, %arg1: memref<1x64xi32, #tpu.memory_space<smem>>) -> (i32, i32) {
    %c0_i32 = arith.constant 0 : i32
    %c0_i32_0 = arith.constant 0 : i32
    %c0_i32_1 = arith.constant 0 : i32
    return %c0_i32, %c0_i32_0 : i32, i32
  }
  func.func @transform_10(%arg0: i32, %arg1: memref<1x64xi32, #tpu.memory_space<smem>>) -> (i32, i32) {
    %c0_i32 = arith.constant 0 : i32
    %c0_i32_0 = arith.constant 0 : i32
    %c0_i32_1 = arith.constant 0 : i32
    return %c0_i32, %c0_i32_0 : i32, i32
  }
  func.func @transform_11(%arg0: i32, %arg1: memref<1x64xi32, #tpu.memory_space<smem>>) -> (i32, i32) {
    %c0_i32 = arith.constant 0 : i32
    %c0_i32_0 = arith.constant 0 : i32
    return %arg0, %c0_i32 : i32, i32
  }
}

</mosaic_0001>

<llo_original>
// kernel: tpu_custom_call.1
$region0: #{tpu_custom_call.1}
  #allocation0 [shape = 'u32[]', space=smem, size = 0x4, offset = 0x4, fixed_abs, tag = 'smem constant byte address 0x4 - core index']
  #allocation1 [shape = 'u32[144,128]{1,0:T(1,128)}', space=vmem, size = 0x12000, scoped, tag = 'internal scratch']
  #allocation2 [shape = 'f32[64,32]{1,0:T(8,128)}', space=vmem, size = 0x8000, scoped, tag = 'scratch operand']
  #allocation3 [shape = 'f32[64,128]{1,0:T(8,128)}', space=vmem, size = 0x8000, scoped, tag = 'scratch operand']
  #allocation4 [shape = 's32[1]{0}', space=sflag, size = 0x4, scoped, tag = 'scoped memory for tpu_custom_call.1']
  #allocation5 [shape = 'u8[512]{0}', space=smem, size = 0x200, scoped, tag = 'prefetched SMEM operand 0']
  #allocation6 [shape = 'f32[1,1]{1,0:T(1,128)S(1)}', space=vmem, size = 0x200, scoped, tag = 'scoped memory for tpu_custom_call.1']
  %s0 = inlined_call_operand.vmem [shape: s32[1,64], index: 0, kind: input, shape index: {}]
  %s1 = inlined_call_operand.vmem [shape: f32[64,1,32], index: 1, kind: input, shape index: {}]
  %s2 = inlined_call_operand.vmem [shape: bf16[32,128], index: 2, kind: input, shape index: {}]
  %s3 = inlined_call_operand.vmem [shape: bf16[32,128], index: 3, kind: input, shape index: {}]
  %s4 = inlined_call_operand.vmem [shape: f32[1,128], index: 4, kind: input, shape index: {}]
  %s5 = inlined_call_operand.vmem [shape: bf16[32,128], index: 5, kind: input, shape index: {}]
  %s6 = inlined_call_operand.vmem [shape: bf16[32,128], index: 6, kind: input, shape index: {}]
  %s7 = inlined_call_operand.vmem [shape: f32[1,128], index: 7, kind: input, shape index: {}]
  %s8 = inlined_call_operand.vmem [shape: f32[32,1], index: 8, kind: input, shape index: {}]
  %s9 = inlined_call_operand.<no memory space> [shape: f32[1,1], index: 9, kind: input, shape index: {}]
  %s10 = inlined_call_operand.vmem [shape: bf16[32,128], index: 10, kind: input, shape index: {}]
  %s11 = inlined_call_operand.vmem [shape: f32[1,128], index: 11, kind: input, shape index: {}]
  %s12 = inlined_call_operand.hbm [shape: f32[8,128], index: 12, kind: output, shape index: {}]
  %s13 = sld [smem:[#allocation0]]
  $region54: #{tpu_custom_call.1} parent=0
    _
  %s15 = ssub.s32 1, %s13
  %s16 = scalar_select 0, %s15, %s13
  %s17 = sshll.u32 %s0, 4
  %s18 = int_to_ptr.vmem [resolvable:$true] %s17
  %20 = dma.vmem_to_smem %s18, 16, [#allocation5], [#allocation4]
  %v21 = vstv %s9
  %22 = vst [vmem:[#allocation6] sm:$0x1] %v21
  %23 = dma.done [#allocation4], 16
  %24 = sfence
  $region1: #{tpu_custom_call.1} parent=0
    #allocation7 [shape = 'u8[4096]{0}', space=vmem, size = 0x1000, scoped, tag = 'output window, operand 0, single buffered']
    #allocation8 [shape = 's32[1]{0}', space=sflag, size = 0x4, scoped, tag = 'scoped memory for tpu_custom_call.1']
    %25 = vsyncpa [#allocation8], 0
    // Predicated region
    $region2: #{tpu_custom_call.1} parent=1 // pred_check
      _
    $region3: #{tpu_custom_call.1} parent=1 // pred_check_branch
      %27 = sbr.rel (0) target = $region5
    $region4: #{tpu_custom_call.1} parent=1 // pred_region
      _
    $region5: #{tpu_custom_call.1} parent=1 // pred_fallthru
      _
    // Predicated region
    $region6: #{tpu_custom_call.1} parent=1 // pred_check
      _
    $region7: #{tpu_custom_call.1} parent=1 // pred_check_branch
      %29 = sbr.rel (0) target = $region9
    $region8: #{tpu_custom_call.1} parent=1 // pred_region
      _
    $region9: #{tpu_custom_call.1} parent=1 // pred_fallthru
      _
    // Predicated region
    $region10: #{tpu_custom_call.1} parent=1 // pred_check
      _
    $region11: #{tpu_custom_call.1} parent=1 // pred_check_branch
      %31 = sbr.rel (0) target = $region13
    $region12: #{tpu_custom_call.1} parent=1 // pred_region
      _
    $region13: #{tpu_custom_call.1} parent=1 // pred_fallthru
      _
    // Predicated region
    $region14: #{tpu_custom_call.1} parent=1 // pred_check
      _
    $region15: #{tpu_custom_call.1} parent=1 // pred_check_branch
      %33 = sbr.rel (0) target = $region17
    $region16: #{tpu_custom_call.1} parent=1 // pred_region
      _
    $region17: #{tpu_custom_call.1} parent=1 // pred_fallthru
      _
    // Predicated region
    $region18: #{tpu_custom_call.1} parent=1 // pred_check
      _
    $region19: #{tpu_custom_call.1} parent=1 // pred_check_branch
      %35 = sbr.rel (0) target = $region21
    $region20: #{tpu_custom_call.1} parent=1 // pred_region
      _
    $region21: #{tpu_custom_call.1} parent=1 // pred_fallthru
      _
    // Predicated region
    $region22: #{tpu_custom_call.1} parent=1 // pred_check
      _
    $region23: #{tpu_custom_call.1} parent=1 // pred_check_branch
      %37 = sbr.rel (0) target = $region25
    $region24: #{tpu_custom_call.1} parent=1 // pred_region
      _
    $region25: #{tpu_custom_call.1} parent=1 // pred_fallthru
      _
    // Predicated region
    $region26: #{tpu_custom_call.1} parent=1 // pred_check
      _
    $region27: #{tpu_custom_call.1} parent=1 // pred_check_branch
      %39 = sbr.rel (0) target = $region29
    $region28: #{tpu_custom_call.1} parent=1 // pred_region
      _
    $region29: #{tpu_custom_call.1} parent=1 // pred_fallthru
      _
    // Predicated region
    $region30: #{tpu_custom_call.1} parent=1 // pred_check
      _
    $region31: #{tpu_custom_call.1} parent=1 // pred_check_branch
      %41 = sbr.rel (0) target = $region33
    $region32: #{tpu_custom_call.1} parent=1 // pred_region
      _
    $region33: #{tpu_custom_call.1} parent=1 // pred_fallthru
      _
    // Predicated region
    $region34: #{tpu_custom_call.1} parent=1 // pred_check
      _
    $region35: #{tpu_custom_call.1} parent=1 // pred_check_branch
      %43 = sbr.rel (0) target = $region37
    $region36: #{tpu_custom_call.1} parent=1 // pred_region
      _
    $region37: #{tpu_custom_call.1} parent=1 // pred_fallthru
      _
    // Predicated region
    $region38: #{tpu_custom_call.1} parent=1 // pred_check
      _
    $region39: #{tpu_custom_call.1} parent=1 // pred_check_branch
      %45 = sbr.rel (0) target = $region41
    $region40: #{tpu_custom_call.1} parent=1 // pred_region
      _
    $region41: #{tpu_custom_call.1} parent=1 // pred_fallthru
      _
    // Predicated region
    $region42: #{tpu_custom_call.1} parent=1 // pred_check
      _
    $region43: #{tpu_custom_call.1} parent=1 // pred_check_branch
      %47 = sbr.rel (0) target = $region45
    $region44: #{tpu_custom_call.1} parent=1 // pred_region
      _
    $region45: #{tpu_custom_call.1} parent=1 // pred_fallthru
      _
    %s49 = smul.u32 0, 128
    %s50 = sld [smem:[#allocation5 + %s49]]
    %s51 = scalar_lea.vmem %s1, %s50
    %v52 = vld [vmem:[%s51] sm:$0x1]
    %vm53 = vcmask 253952
    %54 = vst.msk [vmem:[#allocation2] sm:$0x1] %vm53, %v52
    %s55 = sadd.s32 %s49, 1
    %s56 = sld [smem:[#allocation5 + %s55]]
    %s57 = scalar_lea.vmem %s1, %s56
    %v58 = vld [vmem:[%s57] sm:$0x1]
    %59 = vst.msk [vmem:[#allocation2 + $0x1] sm:$0x1] %vm53, %v58
    %s60 = sadd.s32 %s49, 2
    %s61 = sld [smem:[#allocation5 + %s60]]
    %s62 = scalar_lea.vmem %s1, %s61
    %v63 = vld [vmem:[%s62] sm:$0x1]
    %64 = vst.msk [vmem:[#allocation2 + $0x2] sm:$0x1] %vm53, %v63
    %s65 = sadd.s32 %s49, 3
    %s66 = sld [smem:[#allocation5 + %s65]]
    %s67 = scalar_lea.vmem %s1, %s66
    %v68 = vld [vmem:[%s67] sm:$0x1]
    %69 = vst.msk [vmem:[#allocation2 + $0x3] sm:$0x1] %vm53, %v68
    %s70 = sadd.s32 %s49, 4
    %s71 = sld [smem:[#allocation5 + %s70]]
    %s72 = scalar_lea.vmem %s1, %s71
    %v73 = vld [vmem:[%s72] sm:$0x1]
    %74 = vst.msk [vmem:[#allocation2 + $0x4] sm:$0x1] %vm53, %v73
    %s75 = sadd.s32 %s49, 5
    %s76 = sld [smem:[#allocation5 + %s75]]
    %s77 = scalar_lea.vmem %s1, %s76
    %v78 = vld [vmem:[%s77] sm:$0x1]
    %79 = vst.msk [vmem:[#allocation2 + $0x5] sm:$0x1] %vm53, %v78
    %s80 = sadd.s32 %s49, 6
    %s81 = sld [smem:[#allocation5 + %s80]]
    %s82 = scalar_lea.vmem %s1, %s81
    %v83 = vld [vmem:[%s82] sm:$0x1]
    %84 = vst.msk [vmem:[#allocation2 + $0x6] sm:$0x1] %vm53, %v83
    %s85 = sadd.s32 %s49, 7
    %s86 = sld [smem:[#allocation5 + %s85]]
    %s87 = scalar_lea.vmem %s1, %s86
    %v88 = vld [vmem:[%s87] sm:$0x1]
    %89 = vst.msk [vmem:[#allocation2 + $0x7] sm:$0x1] %vm53, %v88
    %s90 = sadd.s32 %s49, 8
    %s91 = sld [smem:[#allocation5 + %s90]]
    %s92 = scalar_lea.vmem %s1, %s91
    %v93 = vld [vmem:[%s92] sm:$0x1]
    %94 = vst.msk [vmem:[#allocation2 + $0x8] sm:$0x1] %vm53, %v93
    %s95 = sadd.s32 %s49, 9
    %s96 = sld [smem:[#allocation5 + %s95]]
    %s97 = scalar_lea.vmem %s1, %s96
    %v98 = vld [vmem:[%s97] sm:$0x1]
    %99 = vst.msk [vmem:[#allocation2 + $0x9] sm:$0x1] %vm53, %v98
    %s100 = sadd.s32 %s49, 10
    %s101 = sld [smem:[#allocation5 + %s100]]
    %s102 = scalar_lea.vmem %s1, %s101
    %v103 = vld [vmem:[%s102] sm:$0x1]
    %104 = vst.msk [vmem:[#allocation2 + $0xa] sm:$0x1] %vm53, %v103
    %s105 = sadd.s32 %s49, 11
    %s106 = sld [smem:[#allocation5 + %s105]]
    %s107 = scalar_lea.vmem %s1, %s106
    %v108 = vld [vmem:[%s107] sm:$0x1]
    %109 = vst.msk [vmem:[#allocation2 + $0xb] sm:$0x1] %vm53, %v108
    %s110 = sadd.s32 %s49, 12
    %s111 = sld [smem:[#allocation5 + %s110]]
    %s112 = scalar_lea.vmem %s1, %s111
    %v113 = vld [vmem:[%s112] sm:$0x1]
    %114 = vst.msk [vmem:[#allocation2 + $0xc] sm:$0x1] %vm53, %v113
    %s115 = sadd.s32 %s49, 13
    %s116 = sld [smem:[#allocation5 + %s115]]
    %s117 = scalar_lea.vmem %s1, %s116
    %v118 = vld [vmem:[%s117] sm:$0x1]
    %119 = vst.msk [vmem:[#allocation2 + $0xd] sm:$0x1] %vm53, %v118
    %s120 = sadd.s32 %s49, 14
    %s121 = sld [smem:[#allocation5 + %s120]]
    %s122 = scalar_lea.vmem %s1, %s121
    %v123 = vld [vmem:[%s122] sm:$0x1]
    %124 = vst.msk [vmem:[#allocation2 + $0xe] sm:$0x1] %vm53, %v123
    %s125 = sadd.s32 %s49, 15
    %s126 = sld [smem:[#allocation5 + %s125]]
    %s127 = scalar_lea.vmem %s1, %s126
    %v128 = vld [vmem:[%s127] sm:$0x1]
    %129 = vst.msk [vmem:[#allocation2 + $0xf] sm:$0x1] %vm53, %v128
    %s130 = sadd.s32 %s49, 16
    %s131 = sld [smem:[#allocation5 + %s130]]
    %s132 = scalar_lea.vmem %s1, %s131
    %v133 = vld [vmem:[%s132] sm:$0x1]
    %134 = vst.msk [vmem:[#allocation2 + $0x10] sm:$0x1] %vm53, %v133
    %s135 = sadd.s32 %s49, 17
    %s136 = sld [smem:[#allocation5 + %s135]]
    %s137 = scalar_lea.vmem %s1, %s136
    %v138 = vld [vmem:[%s137] sm:$0x1]
    %139 = vst.msk [vmem:[#allocation2 + $0x11] sm:$0x1] %vm53, %v138
    %s140 = sadd.s32 %s49, 18
    %s141 = sld [smem:[#allocation5 + %s140]]
    %s142 = scalar_lea.vmem %s1, %s141
    %v143 = vld [vmem:[%s142] sm:$0x1]
    %144 = vst.msk [vmem:[#allocation2 + $0x12] sm:$0x1] %vm53, %v143
    %s145 = sadd.s32 %s49, 19
    %s146 = sld [smem:[#allocation5 + %s145]]
    %s147 = scalar_lea.vmem %s1, %s146
    %v148 = vld [vmem:[%s147] sm:$0x1]
    %149 = vst.msk [vmem:[#allocation2 + $0x13] sm:$0x1] %vm53, %v148
    %s150 = sadd.s32 %s49, 20
    %s151 = sld [smem:[#allocation5 + %s150]]
    %s152 = scalar_lea.vmem %s1, %s151
    %v153 = vld [vmem:[%s152] sm:$0x1]
    %154 = vst.msk [vmem:[#allocation2 + $0x14] sm:$0x1] %vm53, %v153
    %s155 = sadd.s32 %s49, 21
    %s156 = sld [smem:[#allocation5 + %s155]]
    %s157 = scalar_lea.vmem %s1, %s156
    %v158 = vld [vmem:[%s157] sm:$0x1]
    %159 = vst.msk [vmem:[#allocation2 + $0x15] sm:$0x1] %vm53, %v158
    %s160 = sadd.s32 %s49, 22
    %s161 = sld [smem:[#allocation5 + %s160]]
    %s162 = scalar_lea.vmem %s1, %s161
    %v163 = vld [vmem:[%s162] sm:$0x1]
    %164 = vst.msk [vmem:[#allocation2 + $0x16] sm:$0x1] %vm53, %v163
    %s165 = sadd.s32 %s49, 23
    %s166 = sld [smem:[#allocation5 + %s165]]
    %s167 = scalar_lea.vmem %s1, %s166
    %v168 = vld [vmem:[%s167] sm:$0x1]
    %169 = vst.msk [vmem:[#allocation2 + $0x17] sm:$0x1] %vm53, %v168
    %s170 = sadd.s32 %s49, 24
    %s171 = sld [smem:[#allocation5 + %s170]]
    %s172 = scalar_lea.vmem %s1, %s171
    %v173 = vld [vmem:[%s172] sm:$0x1]
    %174 = vst.msk [vmem:[#allocation2 + $0x18] sm:$0x1] %vm53, %v173
    %s175 = sadd.s32 %s49, 25
    %s176 = sld [smem:[#allocation5 + %s175]]
    %s177 = scalar_lea.vmem %s1, %s176
    %v178 = vld [vmem:[%s177] sm:$0x1]
    %179 = vst.msk [vmem:[#allocation2 + $0x19] sm:$0x1] %vm53, %v178
    %s180 = sadd.s32 %s49, 26
    %s181 = sld [smem:[#allocation5 + %s180]]
    %s182 = scalar_lea.vmem %s1, %s181
    %v183 = vld [vmem:[%s182] sm:$0x1]
    %184 = vst.msk [vmem:[#allocation2 + $0x1a] sm:$0x1] %vm53, %v183
    %s185 = sadd.s32 %s49, 27
    %s186 = sld [smem:[#allocation5 + %s185]]
    %s187 = scalar_lea.vmem %s1, %s186
    %v188 = vld [vmem:[%s187] sm:$0x1]
    %189 = vst.msk [vmem:[#allocation2 + $0x1b] sm:$0x1] %vm53, %v188
    %s190 = sadd.s32 %s49, 28
    %s191 = sld [smem:[#allocation5 + %s190]]
    %s192 = scalar_lea.vmem %s1, %s191
    %v193 = vld [vmem:[%s192] sm:$0x1]
    %194 = vst.msk [vmem:[#allocation2 + $0x1c] sm:$0x1] %vm53, %v193
    %s195 = sadd.s32 %s49, 29
    %s196 = sld [smem:[#allocation5 + %s195]]
    %s197 = scalar_lea.vmem %s1, %s196
    %v198 = vld [vmem:[%s197] sm:$0x1]
    %199 = vst.msk [vmem:[#allocation2 + $0x1d] sm:$0x1] %vm53, %v198
    %s200 = sadd.s32 %s49, 30
    %s201 = sld [smem:[#allocation5 + %s200]]
    %s202 = scalar_lea.vmem %s1, %s201
    %v203 = vld [vmem:[%s202] sm:$0x1]
    %204 = vst.msk [vmem:[#allocation2 + $0x1e] sm:$0x1] %vm53, %v203
    %s205 = sadd.s32 %s49, 31
    %s206 = sld [smem:[#allocation5 + %s205]]
    %s207 = scalar_lea.vmem %s1, %s206
    %v208 = vld [vmem:[%s207] sm:$0x1]
    %209 = vst.msk [vmem:[#allocation2 + $0x1f] sm:$0x1] %vm53, %v208
    %s210 = sadd.s32 %s49, 32
    %s211 = sld [smem:[#allocation5 + %s210]]
    %s212 = scalar_lea.vmem %s1, %s211
    %v213 = vld [vmem:[%s212] sm:$0x1]
    %214 = vst.msk [vmem:[#allocation2 + $0x20] sm:$0x1] %vm53, %v213
    %s215 = sadd.s32 %s49, 33
    %s216 = sld [smem:[#allocation5 + %s215]]
    %s217 = scalar_lea.vmem %s1, %s216
    %v218 = vld [vmem:[%s217] sm:$0x1]
    %219 = vst.msk [vmem:[#allocation2 + $0x21] sm:$0x1] %vm53, %v218
    %s220 = sadd.s32 %s49, 34
    %s221 = sld [smem:[#allocation5 + %s220]]
    %s222 = scalar_lea.vmem %s1, %s221
    %v223 = vld [vmem:[%s222] sm:$0x1]
    %224 = vst.msk [vmem:[#allocation2 + $0x22] sm:$0x1] %vm53, %v223
    %s225 = sadd.s32 %s49, 35
    %s226 = sld [smem:[#allocation5 + %s225]]
    %s227 = scalar_lea.vmem %s1, %s226
    %v228 = vld [vmem:[%s227] sm:$0x1]
    %229 = vst.msk [vmem:[#allocation2 + $0x23] sm:$0x1] %vm53, %v228
    %s230 = sadd.s32 %s49, 36
    %s231 = sld [smem:[#allocation5 + %s230]]
    %s232 = scalar_lea.vmem %s1, %s231
    %v233 = vld [vmem:[%s232] sm:$0x1]
    %234 = vst.msk [vmem:[#allocation2 + $0x24] sm:$0x1] %vm53, %v233
    %s235 = sadd.s32 %s49, 37
    %s236 = sld [smem:[#allocation5 + %s235]]
    %s237 = scalar_lea.vmem %s1, %s236
    %v238 = vld [vmem:[%s237] sm:$0x1]
    %239 = vst.msk [vmem:[#allocation2 + $0x25] sm:$0x1] %vm53, %v238
    %s240 = sadd.s32 %s49, 38
    %s241 = sld [smem:[#allocation5 + %s240]]
    %s242 = scalar_lea.vmem %s1, %s241
    %v243 = vld [vmem:[%s242] sm:$0x1]
    %244 = vst.msk [vmem:[#allocation2 + $0x26] sm:$0x1] %vm53, %v243
    %s245 = sadd.s32 %s49, 39
    %s246 = sld [smem:[#allocation5 + %s245]]
    %s247 = scalar_lea.vmem %s1, %s246
    %v248 = vld [vmem:[%s247] sm:$0x1]
    %249 = vst.msk [vmem:[#allocation2 + $0x27] sm:$0x1] %vm53, %v248
    %s250 = sadd.s32 %s49, 40
    %s251 = sld [smem:[#allocation5 + %s250]]
    %s252 = scalar_lea.vmem %s1, %s251
    %v253 = vld [vmem:[%s252] sm:$0x1]
    %254 = vst.msk [vmem:[#allocation2 + $0x28] sm:$0x1] %vm53, %v253
    %s255 = sadd.s32 %s49, 41
    %s256 = sld [smem:[#allocation5 + %s255]]
    %s257 = scalar_lea.vmem %s1, %s256
    %v258 = vld [vmem:[%s257] sm:$0x1]
    %259 = vst.msk [vmem:[#allocation2 + $0x29] sm:$0x1] %vm53, %v258
    %s260 = sadd.s32 %s49, 42
    %s261 = sld [smem:[#allocation5 + %s260]]
    %s262 = scalar_lea.vmem %s1, %s261
    %v263 = vld [vmem:[%s262] sm:$0x1]
    %264 = vst.msk [vmem:[#allocation2 + $0x2a] sm:$0x1] %vm53, %v263
    %s265 = sadd.s32 %s49, 43
    %s266 = sld [smem:[#allocation5 + %s265]]
    %s267 = scalar_lea.vmem %s1, %s266
    %v268 = vld [vmem:[%s267] sm:$0x1]
    %269 = vst.msk [vmem:[#allocation2 + $0x2b] sm:$0x1] %vm53, %v268
    %s270 = sadd.s32 %s49, 44
    %s271 = sld [smem:[#allocation5 + %s270]]
    %s272 = scalar_lea.vmem %s1, %s271
    %v273 = vld [vmem:[%s272] sm:$0x1]
    %274 = vst.msk [vmem:[#allocation2 + $0x2c] sm:$0x1] %vm53, %v273
    %s275 = sadd.s32 %s49, 45
    %s276 = sld [smem:[#allocation5 + %s275]]
    %s277 = scalar_lea.vmem %s1, %s276
    %v278 = vld [vmem:[%s277] sm:$0x1]
    %279 = vst.msk [vmem:[#allocation2 + $0x2d] sm:$0x1] %vm53, %v278
    %s280 = sadd.s32 %s49, 46
    %s281 = sld [smem:[#allocation5 + %s280]]
    %s282 = scalar_lea.vmem %s1, %s281
    %v283 = vld [vmem:[%s282] sm:$0x1]
    %284 = vst.msk [vmem:[#allocation2 + $0x2e] sm:$0x1] %vm53, %v283
    %s285 = sadd.s32 %s49, 47
    %s286 = sld [smem:[#allocation5 + %s285]]
    %s287 = scalar_lea.vmem %s1, %s286
    %v288 = vld [vmem:[%s287] sm:$0x1]
    %289 = vst.msk [vmem:[#allocation2 + $0x2f] sm:$0x1] %vm53, %v288
    %s290 = sadd.s32 %s49, 48
    %s291 = sld [smem:[#allocation5 + %s290]]
    %s292 = scalar_lea.vmem %s1, %s291
    %v293 = vld [vmem:[%s292] sm:$0x1]
    %294 = vst.msk [vmem:[#allocation2 + $0x30] sm:$0x1] %vm53, %v293
    %s295 = sadd.s32 %s49, 49
    %s296 = sld [smem:[#allocation5 + %s295]]
    %s297 = scalar_lea.vmem %s1, %s296
    %v298 = vld [vmem:[%s297] sm:$0x1]
    %299 = vst.msk [vmem:[#allocation2 + $0x31] sm:$0x1] %vm53, %v298
    %s300 = sadd.s32 %s49, 50
    %s301 = sld [smem:[#allocation5 + %s300]]
    %s302 = scalar_lea.vmem %s1, %s301
    %v303 = vld [vmem:[%s302] sm:$0x1]
    %304 = vst.msk [vmem:[#allocation2 + $0x32] sm:$0x1] %vm53, %v303
    %s305 = sadd.s32 %s49, 51
    %s306 = sld [smem:[#allocation5 + %s305]]
    %s307 = scalar_lea.vmem %s1, %s306
    %v308 = vld [vmem:[%s307] sm:$0x1]
    %309 = vst.msk [vmem:[#allocation2 + $0x33] sm:$0x1] %vm53, %v308
    %s310 = sadd.s32 %s49, 52
    %s311 = sld [smem:[#allocation5 + %s310]]
    %s312 = scalar_lea.vmem %s1, %s311
    %v313 = vld [vmem:[%s312] sm:$0x1]
    %314 = vst.msk [vmem:[#allocation2 + $0x34] sm:$0x1] %vm53, %v313
    %s315 = sadd.s32 %s49, 53
    %s316 = sld [smem:[#allocation5 + %s315]]
    %s317 = scalar_lea.vmem %s1, %s316
    %v318 = vld [vmem:[%s317] sm:$0x1]
    %319 = vst.msk [vmem:[#allocation2 + $0x35] sm:$0x1] %vm53, %v318
    %s320 = sadd.s32 %s49, 54
    %s321 = sld [smem:[#allocation5 + %s320]]
    %s322 = scalar_lea.vmem %s1, %s321
    %v323 = vld [vmem:[%s322] sm:$0x1]
    %324 = vst.msk [vmem:[#allocation2 + $0x36] sm:$0x1] %vm53, %v323
    %s325 = sadd.s32 %s49, 55
    %s326 = sld [smem:[#allocation5 + %s325]]
    %s327 = scalar_lea.vmem %s1, %s326
    %v328 = vld [vmem:[%s327] sm:$0x1]
    %329 = vst.msk [vmem:[#allocation2 + $0x37] sm:$0x1] %vm53, %v328
    %s330 = sadd.s32 %s49, 56
    %s331 = sld [smem:[#allocation5 + %s330]]
    %s332 = scalar_lea.vmem %s1, %s331
    %v333 = vld [vmem:[%s332] sm:$0x1]
    %334 = vst.msk [vmem:[#allocation2 + $0x38] sm:$0x1] %vm53, %v333
    %s335 = sadd.s32 %s49, 57
    %s336 = sld [smem:[#allocation5 + %s335]]
    %s337 = scalar_lea.vmem %s1, %s336
    %v338 = vld [vmem:[%s337] sm:$0x1]
    %339 = vst.msk [vmem:[#allocation2 + $0x39] sm:$0x1] %vm53, %v338
    %s340 = sadd.s32 %s49, 58
    %s341 = sld [smem:[#allocation5 + %s340]]
    %s342 = scalar_lea.vmem %s1, %s341
    %v343 = vld [vmem:[%s342] sm:$0x1]
    %344 = vst.msk [vmem:[#allocation2 + $0x3a] sm:$0x1] %vm53, %v343
    %s345 = sadd.s32 %s49, 59
    %s346 = sld [smem:[#allocation5 + %s345]]
    %s347 = scalar_lea.vmem %s1, %s346
    %v348 = vld [vmem:[%s347] sm:$0x1]
    %349 = vst.msk [vmem:[#allocation2 + $0x3b] sm:$0x1] %vm53, %v348
    %s350 = sadd.s32 %s49, 60
    %s351 = sld [smem:[#allocation5 + %s350]]
    %s352 = scalar_lea.vmem %s1, %s351
    %v353 = vld [vmem:[%s352] sm:$0x1]
    %354 = vst.msk [vmem:[#allocation2 + $0x3c] sm:$0x1] %vm53, %v353
    %s355 = sadd.s32 %s49, 61
    %s356 = sld [smem:[#allocation5 + %s355]]
    %s357 = scalar_lea.vmem %s1, %s356
    %v358 = vld [vmem:[%s357] sm:$0x1]
    %359 = vst.msk [vmem:[#allocation2 + $0x3d] sm:$0x1] %vm53, %v358
    %s360 = sadd.s32 %s49, 62
    %s361 = sld [smem:[#allocation5 + %s360]]
    %s362 = scalar_lea.vmem %s1, %s361
    %v363 = vld [vmem:[%s362] sm:$0x1]
    %364 = vst.msk [vmem:[#allocation2 + $0x3e] sm:$0x1] %vm53, %v363
    %s365 = sadd.s32 %s49, 63
    %s366 = sld [smem:[#allocation5 + %s365]]
    %s367 = scalar_lea.vmem %s1, %s366
    %v368 = vld [vmem:[%s367] sm:$0x1]
    %369 = vst.msk [vmem:[#allocation2 + $0x3f] sm:$0x1] %vm53, %v368
    %v370 = vld [vmem:[%s2] sm:$0xf]
    %v371 = vld [vmem:[%s2 + $0x4] sm:$0xf]
    %v372 = vld [vmem:[%s2 + $0x8] sm:$0xf]
    %v373 = vld [vmem:[%s2 + $0xc] sm:$0xf]
    %v374 = vld [vmem:[%s3] sm:$0xf]
    %v375 = vld [vmem:[%s3 + $0x4] sm:$0xf]
    %v376 = vld [vmem:[%s3 + $0x8] sm:$0xf]
    %v377 = vld [vmem:[%s3 + $0xc] sm:$0xf]
    %v378 = vld [vmem:[%s4] sm:$0x1]
    %v379 = vld [vmem:[#allocation2] sm:$0xff]
    %v380 = vld [vmem:[#allocation2 + $0x8] sm:$0xff]
    %v381 = vld [vmem:[#allocation2 + $0x10] sm:$0xff]
    %v382 = vld [vmem:[#allocation2 + $0x18] sm:$0xff]
    %v383 = vld [vmem:[#allocation2 + $0x20] sm:$0xff]
    %v384 = vld [vmem:[#allocation2 + $0x28] sm:$0xff]
    %v385 = vld [vmem:[#allocation2 + $0x30] sm:$0xff]
    %v386 = vld [vmem:[#allocation2 + $0x38] sm:$0xff]
    %v387 = vpack.c.bf16 %v380, %v379
    %v388 = vpack.c.bf16 %v382, %v381
    %v389 = vpack.c.bf16 %v384, %v383
    %v390 = vpack.c.bf16 %v386, %v385
    %v392 = vlaneseq
    %v393 = vshrl.u32 %v392, 7
    %v394 = vsub.s32 0, %v393
    %v395 = vrot.slane %v378, %v394
    %v401 = vunpack.c.l.b16 %v370
    %v402 = vunpack.c.l.b16 %v371
    %v403 = vunpack.c.l.b16 %v372
    %v404 = vunpack.c.l.b16 %v373
    %v405 = vpack.c.b16 %v402, %v401
    %v406 = vpack.c.b16 %v404, %v403
    %vm409 = vcmask 261120
    %v411 = vsel %vm409, %v387, 0
    %v414 = vsel %vm409, %v388, 0
    %v417 = vsel %vm409, %v389, 0
    %v420 = vsel %vm409, %v390, 0
    %422 = vmatprep.subr.bf16.mxu0 0
    %423 = vmatpush1.bf16.msra.mxu0 %v405
    %424 = vmatprep.subr.bf16.mxu0 0
    %425 = vmatpush1.bf16.msra.mxu0 %v406
    %426 = vmatprep.subr.bf16.mxu0 0
    %427 = vmatpush1.bf16.msra.mxu0 0
    %428 = vmatprep.subr.bf16.mxu0 0
    %429 = vmatpush1.bf16.msra.mxu0 0
    %430 = vmatprep.subr.bf16.mxu0 0
    %431 = vmatpush1.bf16.msra.mxu0 0
    %432 = vmatprep.subr.bf16.mxu0 0
    %433 = vmatpush1.bf16.msra.mxu0 0
    %434 = vmatprep.subr.bf16.mxu0 0
    %435 = vmatpush1.bf16.msra.mxu0 0
    %436 = vmatprep.subr.bf16.mxu0 0
    %437 = vmatpush1.bf16.msra.mxu0 0
    %438 = vmatprep.subr.bf16.mxu0 0
    %439 = vmatpush1.bf16.msra.mxu0 0
    %440 = vmatprep.subr.bf16.mxu0 0
    %441 = vmatpush1.bf16.msra.mxu0 0
    %442 = vmatprep.subr.bf16.mxu0 0
    %443 = vmatpush1.bf16.msra.mxu0 0
    %444 = vmatprep.subr.bf16.mxu0 0
    %445 = vmatpush1.bf16.msra.mxu0 0
    %446 = vmatprep.subr.bf16.mxu0 0
    %447 = vmatpush1.bf16.msra.mxu0 0
    %448 = vmatprep.subr.bf16.mxu0 0
    %449 = vmatpush1.bf16.msra.mxu0 0
    %450 = vmatprep.subr.bf16.mxu0 0
    %451 = vmatpush1.bf16.msra.mxu0 0
    %452 = vmatprep.subr.bf16.mxu0 0
    %453 = vmatpush1.bf16.msra.mxu0 0
    %454 = vmatprep.mubr.bf16.mxu0 0
    %455 = vmatmul.mubr.bf16.gmra.mrb[0].mxu0 %v411
    %v456 = vpop.f32.mrb[0].mxu0
    %v457 = vadd.f32 %v395, %v456
    %v458 = vpop.f32.mrb[0].mxu0
    %v459 = vpop.f32.mrb[0].mxu0
    %v460 = vadd.f32 %v395, %v459
    %v461 = vpop.f32.mrb[0].mxu0
    %462 = vmatprep.mubr.bf16.mxu0 0
    %463 = vmatmul.mubr.bf16.gmra.mrb[0].mxu0 %v414
    %v464 = vpop.f32.mrb[0].mxu0
    %v465 = vadd.f32 %v395, %v464
    %v466 = vpop.f32.mrb[0].mxu0
    %v467 = vpop.f32.mrb[0].mxu0
    %v468 = vadd.f32 %v395, %v467
    %v469 = vpop.f32.mrb[0].mxu0
    %470 = vmatprep.mubr.bf16.mxu0 0
    %471 = vmatmul.mubr.bf16.gmra.mrb[0].mxu0 %v417
    %v472 = vpop.f32.mrb[0].mxu0
    %v473 = vadd.f32 %v395, %v472
    %v474 = vpop.f32.mrb[0].mxu0
    %v475 = vpop.f32.mrb[0].mxu0
    %v476 = vadd.f32 %v395, %v475
    %v477 = vpop.f32.mrb[0].mxu0
    %478 = vmatprep.mubr.bf16.mxu0 0
    %479 = vmatmul.mubr.bf16.gmra.mrb[0].mxu0 %v420
    %v480 = vpop.f32.mrb[0].mxu0
    %v481 = vadd.f32 %v395, %v480
    %v482 = vpop.f32.mrb[0].mxu0
    %v483 = vpop.f32.mrb[0].mxu0
    %v484 = vadd.f32 %v395, %v483
    %v485 = vpop.f32.mrb[0].mxu0
    %486 = vdwg.mxu0
    %487 = vst [vmem:[#allocation3] sm:$0xff] %v457
    %488 = vst [vmem:[#allocation3 + $0x8] sm:$0xff] %v460
    %489 = vst [vmem:[#allocation3 + $0x10] sm:$0xff] %v465
    %490 = vst [vmem:[#allocation3 + $0x18] sm:$0xff] %v468
    %491 = vst [vmem:[#allocation3 + $0x20] sm:$0xff] %v473
    %492 = vst [vmem:[#allocation3 + $0x28] sm:$0xff] %v476
    %493 = vst [vmem:[#allocation3 + $0x30] sm:$0xff] %v481
    %494 = vst [vmem:[#allocation3 + $0x38] sm:$0xff] %v484
    %v495 = vld [vmem:[#allocation3] sm:$0xff]
    %v500 = vunpack.c.l.b16 %v374
    %v501 = vunpack.c.l.b16 %v375
    %v502 = vunpack.c.l.b16 %v376
    %v503 = vunpack.c.l.b16 %v377
    %v504 = vpack.c.b16 %v501, %v500
    %v505 = vpack.c.b16 %v503, %v502
    %v509 = vsel %vm409, 0, 0
    %511 = vmatprep.subr.bf16.mxu0 0
    %512 = vmatpush1.bf16.msra.mxu0 %v504
    %513 = vmatprep.subr.bf16.mxu0 0
    %514 = vmatpush1.bf16.msra.mxu0 %v505
    %515 = vmatprep.subr.bf16.mxu0 0
    %516 = vmatpush1.bf16.msra.mxu0 0
    %517 = vmatprep.subr.bf16.mxu0 0
    %518 = vmatpush1.bf16.msra.mxu0 0
    %519 = vmatprep.subr.bf16.mxu0 0
    %520 = vmatpush1.bf16.msra.mxu0 0
    %521 = vmatprep.subr.bf16.mxu0 0
    %522 = vmatpush1.bf16.msra.mxu0 0
    %523 = vmatprep.subr.bf16.mxu0 0
    %524 = vmatpush1.bf16.msra.mxu0 0
    %525 = vmatprep.subr.bf16.mxu0 0
    %526 = vmatpush1.bf16.msra.mxu0 0
    %527 = vmatprep.subr.bf16.mxu0 0
    %528 = vmatpush1.bf16.msra.mxu0 0
    %529 = vmatprep.subr.bf16.mxu0 0
    %530 = vmatpush1.bf16.msra.mxu0 0
    %531 = vmatprep.subr.bf16.mxu0 0
    %532 = vmatpush1.bf16.msra.mxu0 0
    %533 = vmatprep.subr.bf16.mxu0 0
    %534 = vmatpush1.bf16.msra.mxu0 0
    %535 = vmatprep.subr.bf16.mxu0 0
    %536 = vmatpush1.bf16.msra.mxu0 0
    %537 = vmatprep.subr.bf16.mxu0 0
    %538 = vmatpush1.bf16.msra.mxu0 0
    %539 = vmatprep.subr.bf16.mxu0 0
    %540 = vmatpush1.bf16.msra.mxu0 0
    %541 = vmatprep.subr.bf16.mxu0 0
    %542 = vmatpush1.bf16.msra.mxu0 0
    %543 = vmatprep.mubr.bf16.mxu0 0
    %544 = vmatmul.mubr.bf16.gmra.mrb[0].mxu0 %v509
    %v545 = vpop.f32.mrb[0].mxu0
    %v546 = vadd.f32 0.0, %v545
    %v547 = vpop.f32.mrb[0].mxu0
    %v548 = vpop.f32.mrb[0].mxu0
    %v549 = vpop.f32.mrb[0].mxu0
    %550 = vdwg.mxu0
    %v551 = vadd.f32 %v495, %v546
    %v552 = vxor.u32 %v551, 2147483648
    %v553 = vmul.f32 %v552, 1.442695
    %v554 = vpow.pop %v553
    %v555 = vadd.f32 %v554, 1.0
    %v556 = vrcp.pop %v555
    %v557 = vmul.f32 1.0, %v556
    %v558 = vtanh.pop %v551
    %v559 = vmul.f32 %v557, 0.0
    %561 = vrot.lane.b32.xlu0 %v558, 64
    %v562 = vpop.permute.xlu0 %561
    %v564 = vmul.f32 %v557, %v562
    %566 = vrot.lane.b32.xlu0 %v564, 32
    %v567 = vpop.permute.xlu0 %566
    %v569 = vadd.f32 %v559, %v567
    %v570 = vtanh.pop %v569
    %572 = vrot.lane.b32.xlu0 %v570, 64
    %v573 = vpop.permute.xlu0 %572
    %v575 = vmul.f32 %v557, %v573
    %577 = vrot.lane.b32.xlu0 %v575, 32
    %v578 = vpop.permute.xlu0 %577
    %580 = vst.msk [vmem:[#allocation2] sm:$0xff] %vm409, %v578
    %v581 = vld [vmem:[#allocation3 + $0x8] sm:$0xff]
    %v582 = vpack.c.bf16 %v575, %v575
    %584 = vrot.lane.b32.xlu0 %v582, 32
    %v585 = vpop.permute.xlu0 %584
    %v587 = vsel %vm409, %v585, 0
    %589 = vmatprep.subr.bf16.mxu0 0
    %590 = vmatpush1.bf16.msra.mxu0 %v504
    %591 = vmatprep.subr.bf16.mxu0 0
    %592 = vmatpush1.bf16.msra.mxu0 %v505
    %593 = vmatprep.subr.bf16.mxu0 0
    %594 = vmatpush1.bf16.msra.mxu0 0
    %595 = vmatprep.subr.bf16.mxu0 0
    %596 = vmatpush1.bf16.msra.mxu0 0
    %597 = vmatprep.subr.bf16.mxu0 0
    %598 = vmatpush1.bf16.msra.mxu0 0
    %599 = vmatprep.subr.bf16.mxu0 0
    %600 = vmatpush1.bf16.msra.mxu0 0
    %601 = vmatprep.subr.bf16.mxu0 0
    %602 = vmatpush1.bf16.msra.mxu0 0
    %603 = vmatprep.subr.bf16.mxu0 0
    %604 = vmatpush1.bf16.msra.mxu0 0
    %605 = vmatprep.subr.bf16.mxu0 0
    %606 = vmatpush1.bf16.msra.mxu0 0
    %607 = vmatprep.subr.bf16.mxu0 0
    %608 = vmatpush1.bf16.msra.mxu0 0
    %609 = vmatprep.subr.bf16.mxu0 0
    %610 = vmatpush1.bf16.msra.mxu0 0
    %611 = vmatprep.subr.bf16.mxu0 0
    %612 = vmatpush1.bf16.msra.mxu0 0
    %613 = vmatprep.subr.bf16.mxu0 0
    %614 = vmatpush1.bf16.msra.mxu0 0
    %615 = vmatprep.subr.bf16.mxu0 0
    %616 = vmatpush1.bf16.msra.mxu0 0
    %617 = vmatprep.subr.bf16.mxu0 0
    %618 = vmatpush1.bf16.msra.mxu0 0
    %619 = vmatprep.subr.bf16.mxu0 0
    %620 = vmatpush1.bf16.msra.mxu0 0
    %621 = vmatprep.mubr.bf16.mxu0 0
    %622 = vmatmul.mubr.bf16.gmra.mrb[0].mxu0 %v587
    %v623 = vpop.f32.mrb[0].mxu0
    %v624 = vadd.f32 0.0, %v623
    %v625 = vpop.f32.mrb[0].mxu0
    %v626 = vpop.f32.mrb[0].mxu0
    %v627 = vpop.f32.mrb[0].mxu0
    %628 = vdwg.mxu0
    %v629 = vadd.f32 %v581, %v624
    %v630 = vxor.u32 %v629, 2147483648
    %v631 = vmul.f32 %v630, 1.442695
    %v632 = vpow.pop %v631
    %v633 = vadd.f32 %v632, 1.0
    %v634 = vrcp.pop %v633
    %v635 = vmul.f32 1.0, %v634
    %v636 = vtanh.pop %v629
    %v637 = vmul.f32 %v635, %v569
    %639 = vrot.lane.b32.xlu0 %v636, 64
    %v640 = vpop.permute.xlu0 %639
    %v642 = vmul.f32 %v635, %v640
    %644 = vrot.lane.b32.xlu0 %v642, 32
    %v645 = vpop.permute.xlu0 %644
    %v647 = vadd.f32 %v637, %v645
    %v648 = vtanh.pop %v647
    %650 = vrot.lane.b32.xlu0 %v648, 64
    %v651 = vpop.permute.xlu0 %650
    %v653 = vmul.f32 %v635, %v651
    %655 = vrot.lane.b32.xlu0 %v653, 32
    %v656 = vpop.permute.xlu0 %655
    %658 = vst.msk [vmem:[#allocation2 + $0x8] sm:$0xff] %vm409, %v656
    %v659 = vld [vmem:[#allocation3 + $0x10] sm:$0xff]
    %v660 = vpack.c.bf16 %v653, %v653
    %662 = vrot.lane.b32.xlu0 %v660, 32
    %v663 = vpop.permute.xlu0 %662
    %v665 = vsel %vm409, %v663, 0
    %667 = vmatprep.subr.bf16.mxu0 0
    %668 = vmatpush1.bf16.msra.mxu0 %v504
    %669 = vmatprep.subr.bf16.mxu0 0
    %670 = vmatpush1.bf16.msra.mxu0 %v505
    %671 = vmatprep.subr.bf16.mxu0 0
    %672 = vmatpush1.bf16.msra.mxu0 0
    %673 = vmatprep.subr.bf16.mxu0 0
    %674 = vmatpush1.bf16.msra.mxu0 0
    %675 = vmatprep.subr.bf16.mxu0 0
    %676 = vmatpush1.bf16.msra.mxu0 0
    %677 = vmatprep.subr.bf16.mxu0 0
    %678 = vmatpush1.bf16.msra.mxu0 0
    %679 = vmatprep.subr.bf16.mxu0 0
    %680 = vmatpush1.bf16.msra.mxu0 0
    %681 = vmatprep.subr.bf16.mxu0 0
    %682 = vmatpush1.bf16.msra.mxu0 0
    %683 = vmatprep.subr.bf16.mxu0 0
    %684 = vmatpush1.bf16.msra.mxu0 0
    %685 = vmatprep.subr.bf16.mxu0 0
    %686 = vmatpush1.bf16.msra.mxu0 0
    %687 = vmatprep.subr.bf16.mxu0 0
    %688 = vmatpush1.bf16.msra.mxu0 0
    %689 = vmatprep.subr.bf16.mxu0 0
    %690 = vmatpush1.bf16.msra.mxu0 0
    %691 = vmatprep.subr.bf16.mxu0 0
    %692 = vmatpush1.bf16.msra.mxu0 0
    %693 = vmatprep.subr.bf16.mxu0 0
    %694 = vmatpush1.bf16.msra.mxu0 0
    %695 = vmatprep.subr.bf16.mxu0 0
    %696 = vmatpush1.bf16.msra.mxu0 0
    %697 = vmatprep.subr.bf16.mxu0 0
    %698 = vmatpush1.bf16.msra.mxu0 0
    %699 = vmatprep.mubr.bf16.mxu0 0
    %700 = vmatmul.mubr.bf16.gmra.mrb[0].mxu0 %v665
    %v701 = vpop.f32.mrb[0].mxu0
    %v702 = vadd.f32 0.0, %v701
    %v703 = vpop.f32.mrb[0].mxu0
    %v704 = vpop.f32.mrb[0].mxu0
    %v705 = vpop.f32.mrb[0].mxu0
    %706 = vdwg.mxu0
    %v707 = vadd.f32 %v659, %v702
    %v708 = vxor.u32 %v707, 2147483648
    %v709 = vmul.f32 %v708, 1.442695
    %v710 = vpow.pop %v709
    %v711 = vadd.f32 %v710, 1.0
    %v712 = vrcp.pop %v711
    %v713 = vmul.f32 1.0, %v712
    %v714 = vtanh.pop %v707
    %v715 = vmul.f32 %v713, %v647
    %717 = vrot.lane.b32.xlu0 %v714, 64
    %v718 = vpop.permute.xlu0 %717
    %v720 = vmul.f32 %v713, %v718
    %722 = vrot.lane.b32.xlu0 %v720, 32
    %v723 = vpop.permute.xlu0 %722
    %v725 = vadd.f32 %v715, %v723
    %v726 = vtanh.pop %v725
    %728 = vrot.lane.b32.xlu0 %v726, 64
    %v729 = vpop.permute.xlu0 %728
    %v731 = vmul.f32 %v713, %v729
    %733 = vrot.lane.b32.xlu0 %v731, 32
    %v734 = vpop.permute.xlu0 %733
    %736 = vst.msk [vmem:[#allocation2 + $0x10] sm:$0xff] %vm409, %v734
    %v737 = vld [vmem:[#allocation3 + $0x18] sm:$0xff]
    %v738 = vpack.c.bf16 %v731, %v731
    %740 = vrot.lane.b32.xlu0 %v738, 32
    %v741 = vpop.permute.xlu0 %740
    %v743 = vsel %vm409, %v741, 0
    %745 = vmatprep.subr.bf16.mxu0 0
    %746 = vmatpush1.bf16.msra.mxu0 %v504
    %747 = vmatprep.subr.bf16.mxu0 0
    %748 = vmatpush1.bf16.msra.mxu0 %v505
    %749 = vmatprep.subr.bf16.mxu0 0
    %750 = vmatpush1.bf16.msra.mxu0 0
    %751 = vmatprep.subr.bf16.mxu0 0
    %752 = vmatpush1.bf16.msra.mxu0 0
    %753 = vmatprep.subr.bf16.mxu0 0
    %754 = vmatpush1.bf16.msra.mxu0 0
    %755 = vmatprep.subr.bf16.mxu0 0
    %756 = vmatpush1.bf16.msra.mxu0 0
    %757 = vmatprep.subr.bf16.mxu0 0
    %758 = vmatpush1.bf16.msra.mxu0 0
    %759 = vmatprep.subr.bf16.mxu0 0
    %760 = vmatpush1.bf16.msra.mxu0 0
    %761 = vmatprep.subr.bf16.mxu0 0
    %762 = vmatpush1.bf16.msra.mxu0 0
    %763 = vmatprep.subr.bf16.mxu0 0
    %764 = vmatpush1.bf16.msra.mxu0 0
    %765 = vmatprep.subr.bf16.mxu0 0
    %766 = vmatpush1.bf16.msra.mxu0 0
    %767 = vmatprep.subr.bf16.mxu0 0
    %768 = vmatpush1.bf16.msra.mxu0 0
    %769 = vmatprep.subr.bf16.mxu0 0
    %770 = vmatpush1.bf16.msra.mxu0 0
    %771 = vmatprep.subr.bf16.mxu0 0
    %772 = vmatpush1.bf16.msra.mxu0 0
    %773 = vmatprep.subr.bf16.mxu0 0
    %774 = vmatpush1.bf16.msra.mxu0 0
    %775 = vmatprep.subr.bf16.mxu0 0
    %776 = vmatpush1.bf16.msra.mxu0 0
    %777 = vmatprep.mubr.bf16.mxu0 0
    %778 = vmatmul.mubr.bf16.gmra.mrb[0].mxu0 %v743
    %v779 = vpop.f32.mrb[0].mxu0
    %v780 = vadd.f32 0.0, %v779
    %v781 = vpop.f32.mrb[0].mxu0
    %v782 = vpop.f32.mrb[0].mxu0
    %v783 = vpop.f32.mrb[0].mxu0
    %784 = vdwg.mxu0
    %v785 = vadd.f32 %v737, %v780
    %v786 = vxor.u32 %v785, 2147483648
    %v787 = vmul.f32 %v786, 1.442695
    %v788 = vpow.pop %v787
    %v789 = vadd.f32 %v788, 1.0
    %v790 = vrcp.pop %v789
    %v791 = vmul.f32 1.0, %v790
    %v792 = vtanh.pop %v785
    %v793 = vmul.f32 %v791, %v725
    %795 = vrot.lane.b32.xlu0 %v792, 64
    %v796 = vpop.permute.xlu0 %795
    %v798 = vmul.f32 %v791, %v796
    %800 = vrot.lane.b32.xlu0 %v798, 32
    %v801 = vpop.permute.xlu0 %800
    %v803 = vadd.f32 %v793, %v801
    %v804 = vtanh.pop %v803
    %806 = vrot.lane.b32.xlu0 %v804, 64
    %v807 = vpop.permute.xlu0 %806
    %v809 = vmul.f32 %v791, %v807
    %811 = vrot.lane.b32.xlu0 %v809, 32
    %v812 = vpop.permute.xlu0 %811
    %814 = vst.msk [vmem:[#allocation2 + $0x18] sm:$0xff] %vm409, %v812
    %v815 = vld [vmem:[#allocation3 + $0x20] sm:$0xff]
    %v816 = vpack.c.bf16 %v809, %v809
    %818 = vrot.lane.b32.xlu0 %v816, 32
    %v819 = vpop.permute.xlu0 %818
    %v821 = vsel %vm409, %v819, 0
    %823 = vmatprep.subr.bf16.mxu0 0
    %824 = vmatpush1.bf16.msra.mxu0 %v504
    %825 = vmatprep.subr.bf16.mxu0 0
    %826 = vmatpush1.bf16.msra.mxu0 %v505
    %827 = vmatprep.subr.bf16.mxu0 0
    %828 = vmatpush1.bf16.msra.mxu0 0
    %829 = vmatprep.subr.bf16.mxu0 0
    %830 = vmatpush1.bf16.msra.mxu0 0
    %831 = vmatprep.subr.bf16.mxu0 0
    %832 = vmatpush1.bf16.msra.mxu0 0
    %833 = vmatprep.subr.bf16.mxu0 0
    %834 = vmatpush1.bf16.msra.mxu0 0
    %835 = vmatprep.subr.bf16.mxu0 0
    %836 = vmatpush1.bf16.msra.mxu0 0
    %837 = vmatprep.subr.bf16.mxu0 0
    %838 = vmatpush1.bf16.msra.mxu0 0
    %839 = vmatprep.subr.bf16.mxu0 0
    %840 = vmatpush1.bf16.msra.mxu0 0
    %841 = vmatprep.subr.bf16.mxu0 0
    %842 = vmatpush1.bf16.msra.mxu0 0
    %843 = vmatprep.subr.bf16.mxu0 0
    %844 = vmatpush1.bf16.msra.mxu0 0
    %845 = vmatprep.subr.bf16.mxu0 0
    %846 = vmatpush1.bf16.msra.mxu0 0
    %847 = vmatprep.subr.bf16.mxu0 0
    %848 = vmatpush1.bf16.msra.mxu0 0
    %849 = vmatprep.subr.bf16.mxu0 0
    %850 = vmatpush1.bf16.msra.mxu0 0
    %851 = vmatprep.subr.bf16.mxu0 0
    %852 = vmatpush1.bf16.msra.mxu0 0
    %853 = vmatprep.subr.bf16.mxu0 0
    %854 = vmatpush1.bf16.msra.mxu0 0
    %855 = vmatprep.mubr.bf16.mxu0 0
    %856 = vmatmul.mubr.bf16.gmra.mrb[0].mxu0 %v821
    %v857 = vpop.f32.mrb[0].mxu0
    %v858 = vadd.f32 0.0, %v857
    %v859 = vpop.f32.mrb[0].mxu0
    %v860 = vpop.f32.mrb[0].mxu0
    %v861 = vpop.f32.mrb[0].mxu0
    %862 = vdwg.mxu0
    %v863 = vadd.f32 %v815, %v858
    %v864 = vxor.u32 %v863, 2147483648
    %v865 = vmul.f32 %v864, 1.442695
    %v866 = vpow.pop %v865
    %v867 = vadd.f32 %v866, 1.0
    %v868 = vrcp.pop %v867
    %v869 = vmul.f32 1.0, %v868
    %v870 = vtanh.pop %v863
    %v871 = vmul.f32 %v869, %v803
    %873 = vrot.lane.b32.xlu0 %v870, 64
    %v874 = vpop.permute.xlu0 %873
    %v876 = vmul.f32 %v869, %v874
    %878 = vrot.lane.b32.xlu0 %v876, 32
    %v879 = vpop.permute.xlu0 %878
    %v881 = vadd.f32 %v871, %v879
    %v882 = vtanh.pop %v881
    %884 = vrot.lane.b32.xlu0 %v882, 64
    %v885 = vpop.permute.xlu0 %884
    %v887 = vmul.f32 %v869, %v885
    %889 = vrot.lane.b32.xlu0 %v887, 32
    %v890 = vpop.permute.xlu0 %889
    %892 = vst.msk [vmem:[#allocation2 + $0x20] sm:$0xff] %vm409, %v890
    %v893 = vld [vmem:[#allocation3 + $0x28] sm:$0xff]
    %v894 = vpack.c.bf16 %v887, %v887
    %896 = vrot.lane.b32.xlu0 %v894, 32
    %v897 = vpop.permute.xlu0 %896
    %v899 = vsel %vm409, %v897, 0
    %901 = vmatprep.subr.bf16.mxu0 0
    %902 = vmatpush1.bf16.msra.mxu0 %v504
    %903 = vmatprep.subr.bf16.mxu0 0
    %904 = vmatpush1.bf16.msra.mxu0 %v505
    %905 = vmatprep.subr.bf16.mxu0 0
    %906 = vmatpush1.bf16.msra.mxu0 0
    %907 = vmatprep.subr.bf16.mxu0 0
    %908 = vmatpush1.bf16.msra.mxu0 0
    %909 = vmatprep.subr.bf16.mxu0 0
    %910 = vmatpush1.bf16.msra.mxu0 0
    %911 = vmatprep.subr.bf16.mxu0 0
    %912 = vmatpush1.bf16.msra.mxu0 0
    %913 = vmatprep.subr.bf16.mxu0 0
    %914 = vmatpush1.bf16.msra.mxu0 0
    %915 = vmatprep.subr.bf16.mxu0 0
    %916 = vmatpush1.bf16.msra.mxu0 0
    %917 = vmatprep.subr.bf16.mxu0 0
    %918 = vmatpush1.bf16.msra.mxu0 0
    %919 = vmatprep.subr.bf16.mxu0 0
    %920 = vmatpush1.bf16.msra.mxu0 0
    %921 = vmatprep.subr.bf16.mxu0 0
    %922 = vmatpush1.bf16.msra.mxu0 0
    %923 = vmatprep.subr.bf16.mxu0 0
    %924 = vmatpush1.bf16.msra.mxu0 0
    %925 = vmatprep.subr.bf16.mxu0 0
    %926 = vmatpush1.bf16.msra.mxu0 0
    %927 = vmatprep.subr.bf16.mxu0 0
    %928 = vmatpush1.bf16.msra.mxu0 0
    %929 = vmatprep.subr.bf16.mxu0 0
    %930 = vmatpush1.bf16.msra.mxu0 0
    %931 = vmatprep.subr.bf16.mxu0 0
    %932 = vmatpush1.bf16.msra.mxu0 0
    %933 = vmatprep.mubr.bf16.mxu0 0
    %934 = vmatmul.mubr.bf16.gmra.mrb[0].mxu0 %v899
    %v935 = vpop.f32.mrb[0].mxu0
    %v936 = vadd.f32 0.0, %v935
    %v937 = vpop.f32.mrb[0].mxu0
    %v938 = vpop.f32.mrb[0].mxu0
    %v939 = vpop.f32.mrb[0].mxu0
    %940 = vdwg.mxu0
    %v941 = vadd.f32 %v893, %v936
    %v942 = vxor.u32 %v941, 2147483648
    %v943 = vmul.f32 %v942, 1.442695
    %v944 = vpow.pop %v943
    %v945 = vadd.f32 %v944, 1.0
    %v946 = vrcp.pop %v945
    %v947 = vmul.f32 1.0, %v946
    %v948 = vtanh.pop %v941
    %v949 = vmul.f32 %v947, %v881
    %951 = vrot.lane.b32.xlu0 %v948, 64
    %v952 = vpop.permute.xlu0 %951
    %v954 = vmul.f32 %v947, %v952
    %956 = vrot.lane.b32.xlu0 %v954, 32
    %v957 = vpop.permute.xlu0 %956
    %v959 = vadd.f32 %v949, %v957
    %v960 = vtanh.pop %v959
    %962 = vrot.lane.b32.xlu0 %v960, 64
    %v963 = vpop.permute.xlu0 %962
    %v965 = vmul.f32 %v947, %v963
    %967 = vrot.lane.b32.xlu0 %v965, 32
    %v968 = vpop.permute.xlu0 %967
    %970 = vst.msk [vmem:[#allocation2 + $0x28] sm:$0xff] %vm409, %v968
    %v971 = vld [vmem:[#allocation3 + $0x30] sm:$0xff]
    %v972 = vpack.c.bf16 %v965, %v965
    %974 = vrot.lane.b32.xlu0 %v972, 32
    %v975 = vpop.permute.xlu0 %974
    %v977 = vsel %vm409, %v975, 0
    %979 = vmatprep.subr.bf16.mxu0 0
    %980 = vmatpush1.bf16.msra.mxu0 %v504
    %981 = vmatprep.subr.bf16.mxu0 0
    %982 = vmatpush1.bf16.msra.mxu0 %v505
    %983 = vmatprep.subr.bf16.mxu0 0
    %984 = vmatpush1.bf16.msra.mxu0 0
    %985 = vmatprep.subr.bf16.mxu0 0
    %986 = vmatpush1.bf16.msra.mxu0 0
    %987 = vmatprep.subr.bf16.mxu0 0
    %988 = vmatpush1.bf16.msra.mxu0 0
    %989 = vmatprep.subr.bf16.mxu0 0
    %990 = vmatpush1.bf16.msra.mxu0 0
    %991 = vmatprep.subr.bf16.mxu0 0
    %992 = vmatpush1.bf16.msra.mxu0 0
    %993 = vmatprep.subr.bf16.mxu0 0
    %994 = vmatpush1.bf16.msra.mxu0 0
    %995 = vmatprep.subr.bf16.mxu0 0
    %996 = vmatpush1.bf16.msra.mxu0 0
    %997 = vmatprep.subr.bf16.mxu0 0
    %998 = vmatpush1.bf16.msra.mxu0 0
    %999 = vmatprep.subr.bf16.mxu0 0
    %1000 = vmatpush1.bf16.msra.mxu0 0
    %1001 = vmatprep.subr.bf16.mxu0 0
    %1002 = vmatpush1.bf16.msra.mxu0 0
    %1003 = vmatprep.subr.bf16.mxu0 0
    %1004 = vmatpush1.bf16.msra.mxu0 0
    %1005 = vmatprep.subr.bf16.mxu0 0
    %1006 = vmatpush1.bf16.msra.mxu0 0
    %1007 = vmatprep.subr.bf16.mxu0 0
    %1008 = vmatpush1.bf16.msra.mxu0 0
    %1009 = vmatprep.subr.bf16.mxu0 0
    %1010 = vmatpush1.bf16.msra.mxu0 0
    %1011 = vmatprep.mubr.bf16.mxu0 0
    %1012 = vmatmul.mubr.bf16.gmra.mrb[0].mxu0 %v977
    %v1013 = vpop.f32.mrb[0].mxu0
    %v1014 = vadd.f32 0.0, %v1013
    %v1015 = vpop.f32.mrb[0].mxu0
    %v1016 = vpop.f32.mrb[0].mxu0
    %v1017 = vpop.f32.mrb[0].mxu0
    %1018 = vdwg.mxu0
    %v1019 = vadd.f32 %v971, %v1014
    %v1020 = vxor.u32 %v1019, 2147483648
    %v1021 = vmul.f32 %v1020, 1.442695
    %v1022 = vpow.pop %v1021
    %v1023 = vadd.f32 %v1022, 1.0
    %v1024 = vrcp.pop %v1023
    %v1025 = vmul.f32 1.0, %v1024
    %v1026 = vtanh.pop %v1019
    %v1027 = vmul.f32 %v1025, %v959
    %1029 = vrot.lane.b32.xlu0 %v1026, 64
    %v1030 = vpop.permute.xlu0 %1029
    %v1032 = vmul.f32 %v1025, %v1030
    %1034 = vrot.lane.b32.xlu0 %v1032, 32
    %v1035 = vpop.permute.xlu0 %1034
    %v1037 = vadd.f32 %v1027, %v1035
    %v1038 = vtanh.pop %v1037
    %1040 = vrot.lane.b32.xlu0 %v1038, 64
    %v1041 = vpop.permute.xlu0 %1040
    %v1043 = vmul.f32 %v1025, %v1041
    %1045 = vrot.lane.b32.xlu0 %v1043, 32
    %v1046 = vpop.permute.xlu0 %1045
    %1048 = vst.msk [vmem:[#allocation2 + $0x30] sm:$0xff] %vm409, %v1046
    %v1049 = vld [vmem:[#allocation3 + $0x38] sm:$0xff]
    %v1050 = vpack.c.bf16 %v1043, %v1043
    %1052 = vrot.lane.b32.xlu0 %v1050, 32
    %v1053 = vpop.permute.xlu0 %1052
    %v1055 = vsel %vm409, %v1053, 0
    %1057 = vmatprep.subr.bf16.mxu0 0
    %1058 = vmatpush1.bf16.msra.mxu0 %v504
    %1059 = vmatprep.subr.bf16.mxu0 0
    %1060 = vmatpush1.bf16.msra.mxu0 %v505
    %1061 = vmatprep.subr.bf16.mxu0 0
    %1062 = vmatpush1.bf16.msra.mxu0 0
    %1063 = vmatprep.subr.bf16.mxu0 0
    %1064 = vmatpush1.bf16.msra.mxu0 0
    %1065 = vmatprep.subr.bf16.mxu0 0
    %1066 = vmatpush1.bf16.msra.mxu0 0
    %1067 = vmatprep.subr.bf16.mxu0 0
    %1068 = vmatpush1.bf16.msra.mxu0 0
    %1069 = vmatprep.subr.bf16.mxu0 0
    %1070 = vmatpush1.bf16.msra.mxu0 0
    %1071 = vmatprep.subr.bf16.mxu0 0
    %1072 = vmatpush1.bf16.msra.mxu0 0
    %1073 = vmatprep.subr.bf16.mxu0 0
    %1074 = vmatpush1.bf16.msra.mxu0 0
    %1075 = vmatprep.subr.bf16.mxu0 0
    %1076 = vmatpush1.bf16.msra.mxu0 0
    %1077 = vmatprep.subr.bf16.mxu0 0
    %1078 = vmatpush1.bf16.msra.mxu0 0
    %1079 = vmatprep.subr.bf16.mxu0 0
    %1080 = vmatpush1.bf16.msra.mxu0 0
    %1081 = vmatprep.subr.bf16.mxu0 0
    %1082 = vmatpush1.bf16.msra.mxu0 0
    %1083 = vmatprep.subr.bf16.mxu0 0
    %1084 = vmatpush1.bf16.msra.mxu0 0
    %1085 = vmatprep.subr.bf16.mxu0 0
    %1086 = vmatpush1.bf16.msra.mxu0 0
    %1087 = vmatprep.subr.bf16.mxu0 0
    %1088 = vmatpush1.bf16.msra.mxu0 0
    %1089 = vmatprep.mubr.bf16.mxu0 0
    %1090 = vmatmul.mubr.bf16.gmra.mrb[0].mxu0 %v1055
    %v1091 = vpop.f32.mrb[0].mxu0
    %v1092 = vadd.f32 0.0, %v1091
    %v1093 = vpop.f32.mrb[0].mxu0
    %v1094 = vpop.f32.mrb[0].mxu0
    %v1095 = vpop.f32.mrb[0].mxu0
    %1096 = vdwg.mxu0
    %v1097 = vadd.f32 %v1049, %v1092
    %v1098 = vxor.u32 %v1097, 2147483648
    %v1099 = vmul.f32 %v1098, 1.442695
    %v1100 = vpow.pop %v1099
    %v1101 = vadd.f32 %v1100, 1.0
    %v1102 = vrcp.pop %v1101
    %v1103 = vmul.f32 1.0, %v1102
    %v1104 = vtanh.pop %v1097
    %v1105 = vmul.f32 %v1103, %v1037
    %1107 = vrot.lane.b32.xlu0 %v1104, 64
    %v1108 = vpop.permute.xlu0 %1107
    %v1110 = vmul.f32 %v1103, %v1108
    %1112 = vrot.lane.b32.xlu0 %v1110, 32
    %v1113 = vpop.permute.xlu0 %1112
    %v1115 = vadd.f32 %v1105, %v1113
    %v1116 = vtanh.pop %v1115
    %1118 = vrot.lane.b32.xlu0 %v1116, 64
    %v1119 = vpop.permute.xlu0 %1118
    %v1121 = vmul.f32 %v1103, %v1119
    %1123 = vrot.lane.b32.xlu0 %v1121, 32
    %v1124 = vpop.permute.xlu0 %1123
    %1126 = vst.msk [vmem:[#allocation2 + $0x38] sm:$0xff] %vm409, %v1124
    %v1127 = vld [vmem:[%s5] sm:$0xf]
    %v1128 = vld [vmem:[%s5 + $0x4] sm:$0xf]
    %v1129 = vld [vmem:[%s5 + $0x8] sm:$0xf]
    %v1130 = vld [vmem:[%s5 + $0xc] sm:$0xf]
    %v1131 = vld [vmem:[%s6] sm:$0xf]
    %v1132 = vld [vmem:[%s6 + $0x4] sm:$0xf]
    %v1133 = vld [vmem:[%s6 + $0x8] sm:$0xf]
    %v1134 = vld [vmem:[%s6 + $0xc] sm:$0xf]
    %v1135 = vld [vmem:[%s7] sm:$0x1]
    %v1136 = vld [vmem:[#allocation2] sm:$0xff]
    %v1137 = vld [vmem:[#allocation2 + $0x8] sm:$0xff]
    %v1138 = vld [vmem:[#allocation2 + $0x10] sm:$0xff]
    %v1139 = vld [vmem:[#allocation2 + $0x18] sm:$0xff]
    %v1140 = vld [vmem:[#allocation2 + $0x20] sm:$0xff]
    %v1141 = vld [vmem:[#allocation2 + $0x28] sm:$0xff]
    %v1142 = vld [vmem:[#allocation2 + $0x30] sm:$0xff]
    %v1143 = vld [vmem:[#allocation2 + $0x38] sm:$0xff]
    %v1144 = vpack.c.bf16 %v1137, %v1136
    %v1145 = vpack.c.bf16 %v1139, %v1138
    %v1146 = vpack.c.bf16 %v1141, %v1140
    %v1147 = vpack.c.bf16 %v1143, %v1142
    %v1149 = vlaneseq
    %v1150 = vshrl.u32 %v1149, 7
    %v1151 = vsub.s32 0, %v1150
    %v1152 = vrot.slane %v1135, %v1151
    %v1158 = vunpack.c.l.b16 %v1127
    %v1159 = vunpack.c.l.b16 %v1128
    %v1160 = vunpack.c.l.b16 %v1129
    %v1161 = vunpack.c.l.b16 %v1130
    %v1162 = vpack.c.b16 %v1159, %v1158
    %v1163 = vpack.c.b16 %v1161, %v1160
    %v1167 = vsel %vm409, %v1144, 0
    %v1170 = vsel %vm409, %v1145, 0
    %v1173 = vsel %vm409, %v1146, 0
    %v1176 = vsel %vm409, %v1147, 0
    %1178 = vmatprep.subr.bf16.mxu0 0
    %1179 = vmatpush1.bf16.msra.mxu0 %v1162
    %1180 = vmatprep.subr.bf16.mxu0 0
    %1181 = vmatpush1.bf16.msra.mxu0 %v1163
    %1182 = vmatprep.subr.bf16.mxu0 0
    %1183 = vmatpush1.bf16.msra.mxu0 0
    %1184 = vmatprep.subr.bf16.mxu0 0
    %1185 = vmatpush1.bf16.msra.mxu0 0
    %1186 = vmatprep.subr.bf16.mxu0 0
    %1187 = vmatpush1.bf16.msra.mxu0 0
    %1188 = vmatprep.subr.bf16.mxu0 0
    %1189 = vmatpush1.bf16.msra.mxu0 0
    %1190 = vmatprep.subr.bf16.mxu0 0
    %1191 = vmatpush1.bf16.msra.mxu0 0
    %1192 = vmatprep.subr.bf16.mxu0 0
    %1193 = vmatpush1.bf16.msra.mxu0 0
    %1194 = vmatprep.subr.bf16.mxu0 0
    %1195 = vmatpush1.bf16.msra.mxu0 0
    %1196 = vmatprep.subr.bf16.mxu0 0
    %1197 = vmatpush1.bf16.msra.mxu0 0
    %1198 = vmatprep.subr.bf16.mxu0 0
    %1199 = vmatpush1.bf16.msra.mxu0 0
    %1200 = vmatprep.subr.bf16.mxu0 0
    %1201 = vmatpush1.bf16.msra.mxu0 0
    %1202 = vmatprep.subr.bf16.mxu0 0
    %1203 = vmatpush1.bf16.msra.mxu0 0
    %1204 = vmatprep.subr.bf16.mxu0 0
    %1205 = vmatpush1.bf16.msra.mxu0 0
    %1206 = vmatprep.subr.bf16.mxu0 0
    %1207 = vmatpush1.bf16.msra.mxu0 0
    %1208 = vmatprep.subr.bf16.mxu0 0
    %1209 = vmatpush1.bf16.msra.mxu0 0
    %1210 = vmatprep.mubr.bf16.mxu0 0
    %1211 = vmatmul.mubr.bf16.gmra.mrb[0].mxu0 %v1167
    %v1212 = vpop.f32.mrb[0].mxu0
    %v1213 = vadd.f32 %v1152, %v1212
    %v1214 = vpop.f32.mrb[0].mxu0
    %v1215 = vpop.f32.mrb[0].mxu0
    %v1216 = vadd.f32 %v1152, %v1215
    %v1217 = vpop.f32.mrb[0].mxu0
    %1218 = vmatprep.mubr.bf16.mxu0 0
    %1219 = vmatmul.mubr.bf16.gmra.mrb[0].mxu0 %v1170
    %v1220 = vpop.f32.mrb[0].mxu0
    %v1221 = vadd.f32 %v1152, %v1220
    %v1222 = vpop.f32.mrb[0].mxu0
    %v1223 = vpop.f32.mrb[0].mxu0
    %v1224 = vadd.f32 %v1152, %v1223
    %v1225 = vpop.f32.mrb[0].mxu0
    %1226 = vmatprep.mubr.bf16.mxu0 0
    %1227 = vmatmul.mubr.bf16.gmra.mrb[0].mxu0 %v1173
    %v1228 = vpop.f32.mrb[0].mxu0
    %v1229 = vadd.f32 %v1152, %v1228
    %v1230 = vpop.f32.mrb[0].mxu0
    %v1231 = vpop.f32.mrb[0].mxu0
    %v1232 = vadd.f32 %v1152, %v1231
    %v1233 = vpop.f32.mrb[0].mxu0
    %1234 = vmatprep.mubr.bf16.mxu0 0
    %1235 = vmatmul.mubr.bf16.gmra.mrb[0].mxu0 %v1176
    %v1236 = vpop.f32.mrb[0].mxu0
    %v1237 = vadd.f32 %v1152, %v1236
    %v1238 = vpop.f32.mrb[0].mxu0
    %v1239 = vpop.f32.mrb[0].mxu0
    %v1240 = vadd.f32 %v1152, %v1239
    %v1241 = vpop.f32.mrb[0].mxu0
    %1242 = vdwg.mxu0
    %1243 = vst [vmem:[#allocation3] sm:$0xff] %v1213
    %1244 = vst [vmem:[#allocation3 + $0x8] sm:$0xff] %v1216
    %1245 = vst [vmem:[#allocation3 + $0x10] sm:$0xff] %v1221
    %1246 = vst [vmem:[#allocation3 + $0x18] sm:$0xff] %v1224
    %1247 = vst [vmem:[#allocation3 + $0x20] sm:$0xff] %v1229
    %1248 = vst [vmem:[#allocation3 + $0x28] sm:$0xff] %v1232
    %1249 = vst [vmem:[#allocation3 + $0x30] sm:$0xff] %v1237
    %1250 = vst [vmem:[#allocation3 + $0x38] sm:$0xff] %v1240
    %v1251 = vld [vmem:[#allocation3] sm:$0xff]
    %v1256 = vunpack.c.l.b16 %v1131
    %v1257 = vunpack.c.l.b16 %v1132
    %v1258 = vunpack.c.l.b16 %v1133
    %v1259 = vunpack.c.l.b16 %v1134
    %v1260 = vpack.c.b16 %v1257, %v1256
    %v1261 = vpack.c.b16 %v1259, %v1258
    %1264 = vmatprep.subr.bf16.mxu0 0
    %1265 = vmatpush1.bf16.msra.mxu0 %v1260
    %1266 = vmatprep.subr.bf16.mxu0 0
    %1267 = vmatpush1.bf16.msra.mxu0 %v1261
    %1268 = vmatprep.subr.bf16.mxu0 0
    %1269 = vmatpush1.bf16.msra.mxu0 0
    %1270 = vmatprep.subr.bf16.mxu0 0
    %1271 = vmatpush1.bf16.msra.mxu0 0
    %1272 = vmatprep.subr.bf16.mxu0 0
    %1273 = vmatpush1.bf16.msra.mxu0 0
    %1274 = vmatprep.subr.bf16.mxu0 0
    %1275 = vmatpush1.bf16.msra.mxu0 0
    %1276 = vmatprep.subr.bf16.mxu0 0
    %1277 = vmatpush1.bf16.msra.mxu0 0
    %1278 = vmatprep.subr.bf16.mxu0 0
    %1279 = vmatpush1.bf16.msra.mxu0 0
    %1280 = vmatprep.subr.bf16.mxu0 0
    %1281 = vmatpush1.bf16.msra.mxu0 0
    %1282 = vmatprep.subr.bf16.mxu0 0
    %1283 = vmatpush1.bf16.msra.mxu0 0
    %1284 = vmatprep.subr.bf16.mxu0 0
    %1285 = vmatpush1.bf16.msra.mxu0 0
    %1286 = vmatprep.subr.bf16.mxu0 0
    %1287 = vmatpush1.bf16.msra.mxu0 0
    %1288 = vmatprep.subr.bf16.mxu0 0
    %1289 = vmatpush1.bf16.msra.mxu0 0
    %1290 = vmatprep.subr.bf16.mxu0 0
    %1291 = vmatpush1.bf16.msra.mxu0 0
    %1292 = vmatprep.subr.bf16.mxu0 0
    %1293 = vmatpush1.bf16.msra.mxu0 0
    %1294 = vmatprep.subr.bf16.mxu0 0
    %1295 = vmatpush1.bf16.msra.mxu0 0
    %1296 = vmatprep.mubr.bf16.mxu0 0
    %1297 = vmatmul.mubr.bf16.gmra.mrb[0].mxu0 %v509
    %v1298 = vpop.f32.mrb[0].mxu0
    %v1299 = vadd.f32 0.0, %v1298
    %v1300 = vpop.f32.mrb[0].mxu0
    %v1301 = vpop.f32.mrb[0].mxu0
    %v1302 = vpop.f32.mrb[0].mxu0
    %1303 = vdwg.mxu0
    %v1304 = vadd.f32 %v1251, %v1299
    %v1305 = vxor.u32 %v1304, 2147483648
    %v1306 = vmul.f32 %v1305, 1.442695
    %v1307 = vpow.pop %v1306
    %v1308 = vadd.f32 %v1307, 1.0
    %v1309 = vrcp.pop %v1308
    %v1310 = vmul.f32 1.0, %v1309
    %v1311 = vtanh.pop %v1304
    %v1312 = vmul.f32 %v1310, 0.0
    %1314 = vrot.lane.b32.xlu0 %v1311, 64
    %v1315 = vpop.permute.xlu0 %1314
    %v1317 = vmul.f32 %v1310, %v1315
    %1319 = vrot.lane.b32.xlu0 %v1317, 32
    %v1320 = vpop.permute.xlu0 %1319
    %v1322 = vadd.f32 %v1312, %v1320
    %v1323 = vtanh.pop %v1322
    %1325 = vrot.lane.b32.xlu0 %v1323, 64
    %v1326 = vpop.permute.xlu0 %1325
    %v1328 = vmul.f32 %v1310, %v1326
    %1330 = vrot.lane.b32.xlu0 %v1328, 32
    %v1331 = vpop.permute.xlu0 %1330
    %1333 = vst.msk [vmem:[#allocation2] sm:$0xff] %vm409, %v1331
    %v1334 = vld [vmem:[#allocation3 + $0x8] sm:$0xff]
    %v1335 = vpack.c.bf16 %v1328, %v1328
    %1337 = vrot.lane.b32.xlu0 %v1335, 32
    %v1338 = vpop.permute.xlu0 %1337
    %v1340 = vsel %vm409, %v1338, 0
    %1342 = vmatprep.subr.bf16.mxu0 0
    %1343 = vmatpush1.bf16.msra.mxu0 %v1260
    %1344 = vmatprep.subr.bf16.mxu0 0
    %1345 = vmatpush1.bf16.msra.mxu0 %v1261
    %1346 = vmatprep.subr.bf16.mxu0 0
    %1347 = vmatpush1.bf16.msra.mxu0 0
    %1348 = vmatprep.subr.bf16.mxu0 0
    %1349 = vmatpush1.bf16.msra.mxu0 0
    %1350 = vmatprep.subr.bf16.mxu0 0
    %1351 = vmatpush1.bf16.msra.mxu0 0
    %1352 = vmatprep.subr.bf16.mxu0 0
    %1353 = vmatpush1.bf16.msra.mxu0 0
    %1354 = vmatprep.subr.bf16.mxu0 0
    %1355 = vmatpush1.bf16.msra.mxu0 0
    %1356 = vmatprep.subr.bf16.mxu0 0
    %1357 = vmatpush1.bf16.msra.mxu0 0
    %1358 = vmatprep.subr.bf16.mxu0 0
    %1359 = vmatpush1.bf16.msra.mxu0 0
    %1360 = vmatprep.subr.bf16.mxu0 0
    %1361 = vmatpush1.bf16.msra.mxu0 0
    %1362 = vmatprep.subr.bf16.mxu0 0
    %1363 = vmatpush1.bf16.msra.mxu0 0
    %1364 = vmatprep.subr.bf16.mxu0 0
    %1365 = vmatpush1.bf16.msra.mxu0 0
    %1366 = vmatprep.subr.bf16.mxu0 0
    %1367 = vmatpush1.bf16.msra.mxu0 0
    %1368 = vmatprep.subr.bf16.mxu0 0
    %1369 = vmatpush1.bf16.msra.mxu0 0
    %1370 = vmatprep.subr.bf16.mxu0 0
    %1371 = vmatpush1.bf16.msra.mxu0 0
    %1372 = vmatprep.subr.bf16.mxu0 0
    %1373 = vmatpush1.bf16.msra.mxu0 0
    %1374 = vmatprep.mubr.bf16.mxu0 0
    %1375 = vmatmul.mubr.bf16.gmra.mrb[0].mxu0 %v1340
    %v1376 = vpop.f32.mrb[0].mxu0
    %v1377 = vadd.f32 0.0, %v1376
    %v1378 = vpop.f32.mrb[0].mxu0
    %v1379 = vpop.f32.mrb[0].mxu0
    %v1380 = vpop.f32.mrb[0].mxu0
    %1381 = vdwg.mxu0
    %v1382 = vadd.f32 %v1334, %v1377
    %v1383 = vxor.u32 %v1382, 2147483648
    %v1384 = vmul.f32 %v1383, 1.442695
    %v1385 = vpow.pop %v1384
    %v1386 = vadd.f32 %v1385, 1.0
    %v1387 = vrcp.pop %v1386
    %v1388 = vmul.f32 1.0, %v1387
    %v1389 = vtanh.pop %v1382
    %v1390 = vmul.f32 %v1388, %v1322
    %1392 = vrot.lane.b32.xlu0 %v1389, 64
    %v1393 = vpop.permute.xlu0 %1392
    %v1395 = vmul.f32 %v1388, %v1393
    %1397 = vrot.lane.b32.xlu0 %v1395, 32
    %v1398 = vpop.permute.xlu0 %1397
    %v1400 = vadd.f32 %v1390, %v1398
    %v1401 = vtanh.pop %v1400
    %1403 = vrot.lane.b32.xlu0 %v1401, 64
    %v1404 = vpop.permute.xlu0 %1403
    %v1406 = vmul.f32 %v1388, %v1404
    %1408 = vrot.lane.b32.xlu0 %v1406, 32
    %v1409 = vpop.permute.xlu0 %1408
    %1411 = vst.msk [vmem:[#allocation2 + $0x8] sm:$0xff] %vm409, %v1409
    %v1412 = vld [vmem:[#allocation3 + $0x10] sm:$0xff]
    %v1413 = vpack.c.bf16 %v1406, %v1406
    %1415 = vrot.lane.b32.xlu0 %v1413, 32
    %v1416 = vpop.permute.xlu0 %1415
    %v1418 = vsel %vm409, %v1416, 0
    %1420 = vmatprep.subr.bf16.mxu0 0
    %1421 = vmatpush1.bf16.msra.mxu0 %v1260
    %1422 = vmatprep.subr.bf16.mxu0 0
    %1423 = vmatpush1.bf16.msra.mxu0 %v1261
    %1424 = vmatprep.subr.bf16.mxu0 0
    %1425 = vmatpush1.bf16.msra.mxu0 0
    %1426 = vmatprep.subr.bf16.mxu0 0
    %1427 = vmatpush1.bf16.msra.mxu0 0
    %1428 = vmatprep.subr.bf16.mxu0 0
    %1429 = vmatpush1.bf16.msra.mxu0 0
    %1430 = vmatprep.subr.bf16.mxu0 0
    %1431 = vmatpush1.bf16.msra.mxu0 0
    %1432 = vmatprep.subr.bf16.mxu0 0
    %1433 = vmatpush1.bf16.msra.mxu0 0
    %1434 = vmatprep.subr.bf16.mxu0 0
    %1435 = vmatpush1.bf16.msra.mxu0 0
    %1436 = vmatprep.subr.bf16.mxu0 0
    %1437 = vmatpush1.bf16.msra.mxu0 0
    %1438 = vmatprep.subr.bf16.mxu0 0
    %1439 = vmatpush1.bf16.msra.mxu0 0
    %1440 = vmatprep.subr.bf16.mxu0 0
    %1441 = vmatpush1.bf16.msra.mxu0 0
    %1442 = vmatprep.subr.bf16.mxu0 0
    %1443 = vmatpush1.bf16.msra.mxu0 0
    %1444 = vmatprep.subr.bf16.mxu0 0
    %1445 = vmatpush1.bf16.msra.mxu0 0
    %1446 = vmatprep.subr.bf16.mxu0 0
    %1447 = vmatpush1.bf16.msra.mxu0 0
    %1448 = vmatprep.subr.bf16.mxu0 0
    %1449 = vmatpush1.bf16.msra.mxu0 0
    %1450 = vmatprep.subr.bf16.mxu0 0
    %1451 = vmatpush1.bf16.msra.mxu0 0
    %1452 = vmatprep.mubr.bf16.mxu0 0
    %1453 = vmatmul.mubr.bf16.gmra.mrb[0].mxu0 %v1418
    %v1454 = vpop.f32.mrb[0].mxu0
    %v1455 = vadd.f32 0.0, %v1454
    %v1456 = vpop.f32.mrb[0].mxu0
    %v1457 = vpop.f32.mrb[0].mxu0
    %v1458 = vpop.f32.mrb[0].mxu0
    %1459 = vdwg.mxu0
    %v1460 = vadd.f32 %v1412, %v1455
    %v1461 = vxor.u32 %v1460, 2147483648
    %v1462 = vmul.f32 %v1461, 1.442695
    %v1463 = vpow.pop %v1462
    %v1464 = vadd.f32 %v1463, 1.0
    %v1465 = vrcp.pop %v1464
    %v1466 = vmul.f32 1.0, %v1465
    %v1467 = vtanh.pop %v1460
    %v1468 = vmul.f32 %v1466, %v1400
    %1470 = vrot.lane.b32.xlu0 %v1467, 64
    %v1471 = vpop.permute.xlu0 %1470
    %v1473 = vmul.f32 %v1466, %v1471
    %1475 = vrot.lane.b32.xlu0 %v1473, 32
    %v1476 = vpop.permute.xlu0 %1475
    %v1478 = vadd.f32 %v1468, %v1476
    %v1479 = vtanh.pop %v1478
    %1481 = vrot.lane.b32.xlu0 %v1479, 64
    %v1482 = vpop.permute.xlu0 %1481
    %v1484 = vmul.f32 %v1466, %v1482
    %1486 = vrot.lane.b32.xlu0 %v1484, 32
    %v1487 = vpop.permute.xlu0 %1486
    %1489 = vst.msk [vmem:[#allocation2 + $0x10] sm:$0xff] %vm409, %v1487
    %v1490 = vld [vmem:[#allocation3 + $0x18] sm:$0xff]
    %v1491 = vpack.c.bf16 %v1484, %v1484
    %1493 = vrot.lane.b32.xlu0 %v1491, 32
    %v1494 = vpop.permute.xlu0 %1493
    %v1496 = vsel %vm409, %v1494, 0
    %1498 = vmatprep.subr.bf16.mxu0 0
    %1499 = vmatpush1.bf16.msra.mxu0 %v1260
    %1500 = vmatprep.subr.bf16.mxu0 0
    %1501 = vmatpush1.bf16.msra.mxu0 %v1261
    %1502 = vmatprep.subr.bf16.mxu0 0
    %1503 = vmatpush1.bf16.msra.mxu0 0
    %1504 = vmatprep.subr.bf16.mxu0 0
    %1505 = vmatpush1.bf16.msra.mxu0 0
    %1506 = vmatprep.subr.bf16.mxu0 0
    %1507 = vmatpush1.bf16.msra.mxu0 0
    %1508 = vmatprep.subr.bf16.mxu0 0
    %1509 = vmatpush1.bf16.msra.mxu0 0
    %1510 = vmatprep.subr.bf16.mxu0 0
    %1511 = vmatpush1.bf16.msra.mxu0 0
    %1512 = vmatprep.subr.bf16.mxu0 0
    %1513 = vmatpush1.bf16.msra.mxu0 0
    %1514 = vmatprep.subr.bf16.mxu0 0
    %1515 = vmatpush1.bf16.msra.mxu0 0
    %1516 = vmatprep.subr.bf16.mxu0 0
    %1517 = vmatpush1.bf16.msra.mxu0 0
    %1518 = vmatprep.subr.bf16.mxu0 0
    %1519 = vmatpush1.bf16.msra.mxu0 0
    %1520 = vmatprep.subr.bf16.mxu0 0
    %1521 = vmatpush1.bf16.msra.mxu0 0
    %1522 = vmatprep.subr.bf16.mxu0 0
    %1523 = vmatpush1.bf16.msra.mxu0 0
    %1524 = vmatprep.subr.bf16.mxu0 0
    %1525 = vmatpush1.bf16.msra.mxu0 0
    %1526 = vmatprep.subr.bf16.mxu0 0
    %1527 = vmatpush1.bf16.msra.mxu0 0
    %1528 = vmatprep.subr.bf16.mxu0 0
    %1529 = vmatpush1.bf16.msra.mxu0 0
    %1530 = vmatprep.mubr.bf16.mxu0 0
    %1531 = vmatmul.mubr.bf16.gmra.mrb[0].mxu0 %v1496
    %v1532 = vpop.f32.mrb[0].mxu0
    %v1533 = vadd.f32 0.0, %v1532
    %v1534 = vpop.f32.mrb[0].mxu0
    %v1535 = vpop.f32.mrb[0].mxu0
    %v1536 = vpop.f32.mrb[0].mxu0
    %1537 = vdwg.mxu0
    %v1538 = vadd.f32 %v1490, %v1533
    %v1539 = vxor.u32 %v1538, 2147483648
    %v1540 = vmul.f32 %v1539, 1.442695
    %v1541 = vpow.pop %v1540
    %v1542 = vadd.f32 %v1541, 1.0
    %v1543 = vrcp.pop %v1542
    %v1544 = vmul.f32 1.0, %v1543
    %v1545 = vtanh.pop %v1538
    %v1546 = vmul.f32 %v1544, %v1478
    %1548 = vrot.lane.b32.xlu0 %v1545, 64
    %v1549 = vpop.permute.xlu0 %1548
    %v1551 = vmul.f32 %v1544, %v1549
    %1553 = vrot.lane.b32.xlu0 %v1551, 32
    %v1554 = vpop.permute.xlu0 %1553
    %v1556 = vadd.f32 %v1546, %v1554
    %v1557 = vtanh.pop %v1556
    %1559 = vrot.lane.b32.xlu0 %v1557, 64
    %v1560 = vpop.permute.xlu0 %1559
    %v1562 = vmul.f32 %v1544, %v1560
    %1564 = vrot.lane.b32.xlu0 %v1562, 32
    %v1565 = vpop.permute.xlu0 %1564
    %1567 = vst.msk [vmem:[#allocation2 + $0x18] sm:$0xff] %vm409, %v1565
    %v1568 = vld [vmem:[#allocation3 + $0x20] sm:$0xff]
    %v1569 = vpack.c.bf16 %v1562, %v1562
    %1571 = vrot.lane.b32.xlu0 %v1569, 32
    %v1572 = vpop.permute.xlu0 %1571
    %v1574 = vsel %vm409, %v1572, 0
    %1576 = vmatprep.subr.bf16.mxu0 0
    %1577 = vmatpush1.bf16.msra.mxu0 %v1260
    %1578 = vmatprep.subr.bf16.mxu0 0
    %1579 = vmatpush1.bf16.msra.mxu0 %v1261
    %1580 = vmatprep.subr.bf16.mxu0 0
    %1581 = vmatpush1.bf16.msra.mxu0 0
    %1582 = vmatprep.subr.bf16.mxu0 0
    %1583 = vmatpush1.bf16.msra.mxu0 0
    %1584 = vmatprep.subr.bf16.mxu0 0
    %1585 = vmatpush1.bf16.msra.mxu0 0
    %1586 = vmatprep.subr.bf16.mxu0 0
    %1587 = vmatpush1.bf16.msra.mxu0 0
    %1588 = vmatprep.subr.bf16.mxu0 0
    %1589 = vmatpush1.bf16.msra.mxu0 0
    %1590 = vmatprep.subr.bf16.mxu0 0
    %1591 = vmatpush1.bf16.msra.mxu0 0
    %1592 = vmatprep.subr.bf16.mxu0 0
    %1593 = vmatpush1.bf16.msra.mxu0 0
    %1594 = vmatprep.subr.bf16.mxu0 0
    %1595 = vmatpush1.bf16.msra.mxu0 0
    %1596 = vmatprep.subr.bf16.mxu0 0
    %1597 = vmatpush1.bf16.msra.mxu0 0
    %1598 = vmatprep.subr.bf16.mxu0 0
    %1599 = vmatpush1.bf16.msra.mxu0 0
    %1600 = vmatprep.subr.bf16.mxu0 0
    %1601 = vmatpush1.bf16.msra.mxu0 0
    %1602 = vmatprep.subr.bf16.mxu0 0
    %1603 = vmatpush1.bf16.msra.mxu0 0
    %1604 = vmatprep.subr.bf16.mxu0 0
    %1605 = vmatpush1.bf16.msra.mxu0 0
    %1606 = vmatprep.subr.bf16.mxu0 0
    %1607 = vmatpush1.bf16.msra.mxu0 0
    %1608 = vmatprep.mubr.bf16.mxu0 0
    %1609 = vmatmul.mubr.bf16.gmra.mrb[0].mxu0 %v1574
    %v1610 = vpop.f32.mrb[0].mxu0
    %v1611 = vadd.f32 0.0, %v1610
    %v1612 = vpop.f32.mrb[0].mxu0
    %v1613 = vpop.f32.mrb[0].mxu0
    %v1614 = vpop.f32.mrb[0].mxu0
    %1615 = vdwg.mxu0
    %v1616 = vadd.f32 %v1568, %v1611
    %v1617 = vxor.u32 %v1616, 2147483648
    %v1618 = vmul.f32 %v1617, 1.442695
    %v1619 = vpow.pop %v1618
    %v1620 = vadd.f32 %v1619, 1.0
    %v1621 = vrcp.pop %v1620
    %v1622 = vmul.f32 1.0, %v1621
    %v1623 = vtanh.pop %v1616
    %v1624 = vmul.f32 %v1622, %v1556
    %1626 = vrot.lane.b32.xlu0 %v1623, 64
    %v1627 = vpop.permute.xlu0 %1626
    %v1629 = vmul.f32 %v1622, %v1627
    %1631 = vrot.lane.b32.xlu0 %v1629, 32
    %v1632 = vpop.permute.xlu0 %1631
    %v1634 = vadd.f32 %v1624, %v1632
    %v1635 = vtanh.pop %v1634
    %1637 = vrot.lane.b32.xlu0 %v1635, 64
    %v1638 = vpop.permute.xlu0 %1637
    %v1640 = vmul.f32 %v1622, %v1638
    %1642 = vrot.lane.b32.xlu0 %v1640, 32
    %v1643 = vpop.permute.xlu0 %1642
    %1645 = vst.msk [vmem:[#allocation2 + $0x20] sm:$0xff] %vm409, %v1643
    %v1646 = vld [vmem:[#allocation3 + $0x28] sm:$0xff]
    %v1647 = vpack.c.bf16 %v1640, %v1640
    %1649 = vrot.lane.b32.xlu0 %v1647, 32
    %v1650 = vpop.permute.xlu0 %1649
    %v1652 = vsel %vm409, %v1650, 0
    %1654 = vmatprep.subr.bf16.mxu0 0
    %1655 = vmatpush1.bf16.msra.mxu0 %v1260
    %1656 = vmatprep.subr.bf16.mxu0 0
    %1657 = vmatpush1.bf16.msra.mxu0 %v1261
    %1658 = vmatprep.subr.bf16.mxu0 0
    %1659 = vmatpush1.bf16.msra.mxu0 0
    %1660 = vmatprep.subr.bf16.mxu0 0
    %1661 = vmatpush1.bf16.msra.mxu0 0
    %1662 = vmatprep.subr.bf16.mxu0 0
    %1663 = vmatpush1.bf16.msra.mxu0 0
    %1664 = vmatprep.subr.bf16.mxu0 0
    %1665 = vmatpush1.bf16.msra.mxu0 0
    %1666 = vmatprep.subr.bf16.mxu0 0
    %1667 = vmatpush1.bf16.msra.mxu0 0
    %1668 = vmatprep.subr.bf16.mxu0 0
    %1669 = vmatpush1.bf16.msra.mxu0 0
    %1670 = vmatprep.subr.bf16.mxu0 0
    %1671 = vmatpush1.bf16.msra.mxu0 0
    %1672 = vmatprep.subr.bf16.mxu0 0
    %1673 = vmatpush1.bf16.msra.mxu0 0
    %1674 = vmatprep.subr.bf16.mxu0 0
    %1675 = vmatpush1.bf16.msra.mxu0 0
    %1676 = vmatprep.subr.bf16.mxu0 0
    %1677 = vmatpush1.bf16.msra.mxu0 0
    %1678 = vmatprep.subr.bf16.mxu0 0
    %1679 = vmatpush1.bf16.msra.mxu0 0
    %1680 = vmatprep.subr.bf16.mxu0 0
    %1681 = vmatpush1.bf16.msra.mxu0 0
    %1682 = vmatprep.subr.bf16.mxu0 0
    %1683 = vmatpush1.bf16.msra.mxu0 0
    %1684 = vmatprep.subr.bf16.mxu0 0
    %1685 = vmatpush1.bf16.msra.mxu0 0
    %1686 = vmatprep.mubr.bf16.mxu0 0
    %1687 = vmatmul.mubr.bf16.gmra.mrb[0].mxu0 %v1652
    %v1688 = vpop.f32.mrb[0].mxu0
    %v1689 = vadd.f32 0.0, %v1688
    %v1690 = vpop.f32.mrb[0].mxu0
    %v1691 = vpop.f32.mrb[0].mxu0
    %v1692 = vpop.f32.mrb[0].mxu0
    %1693 = vdwg.mxu0
    %v1694 = vadd.f32 %v1646, %v1689
    %v1695 = vxor.u32 %v1694, 2147483648
    %v1696 = vmul.f32 %v1695, 1.442695
    %v1697 = vpow.pop %v1696
    %v1698 = vadd.f32 %v1697, 1.0
    %v1699 = vrcp.pop %v1698
    %v1700 = vmul.f32 1.0, %v1699
    %v1701 = vtanh.pop %v1694
    %v1702 = vmul.f32 %v1700, %v1634
    %1704 = vrot.lane.b32.xlu0 %v1701, 64
    %v1705 = vpop.permute.xlu0 %1704
    %v1707 = vmul.f32 %v1700, %v1705
    %1709 = vrot.lane.b32.xlu0 %v1707, 32
    %v1710 = vpop.permute.xlu0 %1709
    %v1712 = vadd.f32 %v1702, %v1710
    %v1713 = vtanh.pop %v1712
    %1715 = vrot.lane.b32.xlu0 %v1713, 64
    %v1716 = vpop.permute.xlu0 %1715
    %v1718 = vmul.f32 %v1700, %v1716
    %1720 = vrot.lane.b32.xlu0 %v1718, 32
    %v1721 = vpop.permute.xlu0 %1720
    %1723 = vst.msk [vmem:[#allocation2 + $0x28] sm:$0xff] %vm409, %v1721
    %v1724 = vld [vmem:[#allocation3 + $0x30] sm:$0xff]
    %v1725 = vpack.c.bf16 %v1718, %v1718
    %1727 = vrot.lane.b32.xlu0 %v1725, 32
    %v1728 = vpop.permute.xlu0 %1727
    %v1730 = vsel %vm409, %v1728, 0
    %1732 = vmatprep.subr.bf16.mxu0 0
    %1733 = vmatpush1.bf16.msra.mxu0 %v1260
    %1734 = vmatprep.subr.bf16.mxu0 0
    %1735 = vmatpush1.bf16.msra.mxu0 %v1261
    %1736 = vmatprep.subr.bf16.mxu0 0
    %1737 = vmatpush1.bf16.msra.mxu0 0
    %1738 = vmatprep.subr.bf16.mxu0 0
    %1739 = vmatpush1.bf16.msra.mxu0 0
    %1740 = vmatprep.subr.bf16.mxu0 0
    %1741 = vmatpush1.bf16.msra.mxu0 0
    %1742 = vmatprep.subr.bf16.mxu0 0
    %1743 = vmatpush1.bf16.msra.mxu0 0
    %1744 = vmatprep.subr.bf16.mxu0 0
    %1745 = vmatpush1.bf16.msra.mxu0 0
    %1746 = vmatprep.subr.bf16.mxu0 0
    %1747 = vmatpush1.bf16.msra.mxu0 0
    %1748 = vmatprep.subr.bf16.mxu0 0
    %1749 = vmatpush1.bf16.msra.mxu0 0
    %1750 = vmatprep.subr.bf16.mxu0 0
    %1751 = vmatpush1.bf16.msra.mxu0 0
    %1752 = vmatprep.subr.bf16.mxu0 0
    %1753 = vmatpush1.bf16.msra.mxu0 0
    %1754 = vmatprep.subr.bf16.mxu0 0
    %1755 = vmatpush1.bf16.msra.mxu0 0
    %1756 = vmatprep.subr.bf16.mxu0 0
    %1757 = vmatpush1.bf16.msra.mxu0 0
    %1758 = vmatprep.subr.bf16.mxu0 0
    %1759 = vmatpush1.bf16.msra.mxu0 0
    %1760 = vmatprep.subr.bf16.mxu0 0
    %1761 = vmatpush1.bf16.msra.mxu0 0
    %1762 = vmatprep.subr.bf16.mxu0 0
    %1763 = vmatpush1.bf16.msra.mxu0 0
    %1764 = vmatprep.mubr.bf16.mxu0 0
    %1765 = vmatmul.mubr.bf16.gmra.mrb[0].mxu0 %v1730
    %v1766 = vpop.f32.mrb[0].mxu0
    %v1767 = vadd.f32 0.0, %v1766
    %v1768 = vpop.f32.mrb[0].mxu0
    %v1769 = vpop.f32.mrb[0].mxu0
    %v1770 = vpop.f32.mrb[0].mxu0
    %1771 = vdwg.mxu0
    %v1772 = vadd.f32 %v1724, %v1767
    %v1773 = vxor.u32 %v1772, 2147483648
    %v1774 = vmul.f32 %v1773, 1.442695
    %v1775 = vpow.pop %v1774
    %v1776 = vadd.f32 %v1775, 1.0
    %v1777 = vrcp.pop %v1776
    %v1778 = vmul.f32 1.0, %v1777
    %v1779 = vtanh.pop %v1772
    %v1780 = vmul.f32 %v1778, %v1712
    %1782 = vrot.lane.b32.xlu0 %v1779, 64
    %v1783 = vpop.permute.xlu0 %1782
    %v1785 = vmul.f32 %v1778, %v1783
    %1787 = vrot.lane.b32.xlu0 %v1785, 32
    %v1788 = vpop.permute.xlu0 %1787
    %v1790 = vadd.f32 %v1780, %v1788
    %v1791 = vtanh.pop %v1790
    %1793 = vrot.lane.b32.xlu0 %v1791, 64
    %v1794 = vpop.permute.xlu0 %1793
    %v1796 = vmul.f32 %v1778, %v1794
    %1798 = vrot.lane.b32.xlu0 %v1796, 32
    %v1799 = vpop.permute.xlu0 %1798
    %1801 = vst.msk [vmem:[#allocation2 + $0x30] sm:$0xff] %vm409, %v1799
    %v1802 = vld [vmem:[#allocation3 + $0x38] sm:$0xff]
    %v1803 = vpack.c.bf16 %v1796, %v1796
    %1805 = vrot.lane.b32.xlu0 %v1803, 32
    %v1806 = vpop.permute.xlu0 %1805
    %v1808 = vsel %vm409, %v1806, 0
    %1810 = vmatprep.subr.bf16.mxu0 0
    %1811 = vmatpush1.bf16.msra.mxu0 %v1260
    %1812 = vmatprep.subr.bf16.mxu0 0
    %1813 = vmatpush1.bf16.msra.mxu0 %v1261
    %1814 = vmatprep.subr.bf16.mxu0 0
    %1815 = vmatpush1.bf16.msra.mxu0 0
    %1816 = vmatprep.subr.bf16.mxu0 0
    %1817 = vmatpush1.bf16.msra.mxu0 0
    %1818 = vmatprep.subr.bf16.mxu0 0
    %1819 = vmatpush1.bf16.msra.mxu0 0
    %1820 = vmatprep.subr.bf16.mxu0 0
    %1821 = vmatpush1.bf16.msra.mxu0 0
    %1822 = vmatprep.subr.bf16.mxu0 0
    %1823 = vmatpush1.bf16.msra.mxu0 0
    %1824 = vmatprep.subr.bf16.mxu0 0
    %1825 = vmatpush1.bf16.msra.mxu0 0
    %1826 = vmatprep.subr.bf16.mxu0 0
    %1827 = vmatpush1.bf16.msra.mxu0 0
    %1828 = vmatprep.subr.bf16.mxu0 0
    %1829 = vmatpush1.bf16.msra.mxu0 0
    %1830 = vmatprep.subr.bf16.mxu0 0
    %1831 = vmatpush1.bf16.msra.mxu0 0
    %1832 = vmatprep.subr.bf16.mxu0 0
    %1833 = vmatpush1.bf16.msra.mxu0 0
    %1834 = vmatprep.subr.bf16.mxu0 0
    %1835 = vmatpush1.bf16.msra.mxu0 0
    %1836 = vmatprep.subr.bf16.mxu0 0
    %1837 = vmatpush1.bf16.msra.mxu0 0
    %1838 = vmatprep.subr.bf16.mxu0 0
    %1839 = vmatpush1.bf16.msra.mxu0 0
    %1840 = vmatprep.subr.bf16.mxu0 0
    %1841 = vmatpush1.bf16.msra.mxu0 0
    %1842 = vmatprep.mubr.bf16.mxu0 0
    %1843 = vmatmul.mubr.bf16.gmra.mrb[0].mxu0 %v1808
    %v1844 = vpop.f32.mrb[0].mxu0
    %v1845 = vadd.f32 0.0, %v1844
    %v1846 = vpop.f32.mrb[0].mxu0
    %v1847 = vpop.f32.mrb[0].mxu0
    %v1848 = vpop.f32.mrb[0].mxu0
    %1849 = vdwg.mxu0
    %v1850 = vadd.f32 %v1802, %v1845
    %v1851 = vxor.u32 %v1850, 2147483648
    %v1852 = vmul.f32 %v1851, 1.442695
    %v1853 = vpow.pop %v1852
    %v1854 = vadd.f32 %v1853, 1.0
    %v1855 = vrcp.pop %v1854
    %v1856 = vmul.f32 1.0, %v1855
    %v1857 = vtanh.pop %v1850
    %v1858 = vmul.f32 %v1856, %v1790
    %1860 = vrot.lane.b32.xlu0 %v1857, 64
    %v1861 = vpop.permute.xlu0 %1860
    %v1863 = vmul.f32 %v1856, %v1861
    %1865 = vrot.lane.b32.xlu0 %v1863, 32
    %v1866 = vpop.permute.xlu0 %1865
    %v1868 = vadd.f32 %v1858, %v1866
    %v1869 = vtanh.pop %v1868
    %1871 = vrot.lane.b32.xlu0 %v1869, 64
    %v1872 = vpop.permute.xlu0 %1871
    %v1874 = vmul.f32 %v1856, %v1872
    %1876 = vrot.lane.b32.xlu0 %v1874, 32
    %v1877 = vpop.permute.xlu0 %1876
    %1879 = vst.msk [vmem:[#allocation2 + $0x38] sm:$0xff] %vm409, %v1877
    %v1880 = vld [vmem:[#allocation2] sm:$0xff]
    %v1881 = vld [vmem:[#allocation2 + $0x8] sm:$0xff]
    %v1882 = vld [vmem:[#allocation2 + $0x10] sm:$0xff]
    %v1883 = vld [vmem:[#allocation2 + $0x18] sm:$0xff]
    %v1884 = vld [vmem:[#allocation2 + $0x20] sm:$0xff]
    %v1885 = vld [vmem:[#allocation2 + $0x28] sm:$0xff]
    %v1886 = vld [vmem:[#allocation2 + $0x30] sm:$0xff]
    %v1887 = vld [vmem:[#allocation2 + $0x38] sm:$0xff]
    %v1888 = vld [vmem:[%s8] sm:$0xff]
    %v1889 = vld [vmem:[%s8 + $0x8] sm:$0xff]
    %v1890 = vld [vmem:[%s8 + $0x10] sm:$0xff]
    %v1891 = vld [vmem:[%s8 + $0x18] sm:$0xff]
    %v1892 = vld [vmem:[#allocation6] sm:$0x1]
    %v1894 = vlaneseq
    %v1895 = vshrl.u32 %v1894, 7
    %v1896 = vsub.s32 0, %v1895
    %v1897 = vrot.slane %v1892, %v1896
    %v1900 = vsel %vm409, %v1880, 0
    %v1903 = vsel %vm409, %v1881, 0
    %v1906 = vsel %vm409, %v1882, 0
    %v1909 = vsel %vm409, %v1883, 0
    %v1912 = vsel %vm409, %v1884, 0
    %v1915 = vsel %vm409, %v1885, 0
    %v1918 = vsel %vm409, %v1886, 0
    %v1921 = vsel %vm409, %v1887, 0
    %1923 = vmatprep.subr.mxu0 0.0
    %1924 = vmatpush1.msra.mxu0 %v1888
    %1925 = vmatprep.subr.mxu0 0.0
    %1926 = vmatpush1.msra.mxu0 %v1889
    %1927 = vmatprep.subr.mxu0 0.0
    %1928 = vmatpush1.msra.mxu0 %v1890
    %1929 = vmatprep.subr.mxu0 0.0
    %1930 = vmatpush1.msra.mxu0 %v1891
    %1931 = vmatprep.subr.mxu0 0.0
    %1932 = vmatpush1.msra.mxu0 0.0
    %1933 = vmatprep.subr.mxu0 0.0
    %1934 = vmatpush1.msra.mxu0 0.0
    %1935 = vmatprep.subr.mxu0 0.0
    %1936 = vmatpush1.msra.mxu0 0.0
    %1937 = vmatprep.subr.mxu0 0.0
    %1938 = vmatpush1.msra.mxu0 0.0
    %1939 = vmatprep.subr.mxu0 0.0
    %1940 = vmatpush1.msra.mxu0 0.0
    %1941 = vmatprep.subr.mxu0 0.0
    %1942 = vmatpush1.msra.mxu0 0.0
    %1943 = vmatprep.subr.mxu0 0.0
    %1944 = vmatpush1.msra.mxu0 0.0
    %1945 = vmatprep.subr.mxu0 0.0
    %1946 = vmatpush1.msra.mxu0 0.0
    %1947 = vmatprep.subr.mxu0 0.0
    %1948 = vmatpush1.msra.mxu0 0.0
    %1949 = vmatprep.subr.mxu0 0.0
    %1950 = vmatpush1.msra.mxu0 0.0
    %1951 = vmatprep.subr.mxu0 0.0
    %1952 = vmatpush1.msra.mxu0 0.0
    %1953 = vmatprep.subr.mxu0 0.0
    %1954 = vmatpush1.msra.mxu0 0.0
    %1955 = vmatprep.subr.mxu0 0.0
    %1956 = vmatpush1.msra.mxu0 0.0
    %1957 = vmatprep.subr.mxu0 0.0
    %1958 = vmatpush1.msra.mxu0 0.0
    %1959 = vmatprep.subr.mxu0 0.0
    %1960 = vmatpush1.msra.mxu0 0.0
    %1961 = vmatprep.subr.mxu0 0.0
    %1962 = vmatpush1.msra.mxu0 0.0
    %1963 = vmatprep.subr.mxu0 0.0
    %1964 = vmatpush1.msra.mxu0 0.0
    %1965 = vmatprep.subr.mxu0 0.0
    %1966 = vmatpush1.msra.mxu0 0.0
    %1967 = vmatprep.subr.mxu0 0.0
    %1968 = vmatpush1.msra.mxu0 0.0
    %1969 = vmatprep.subr.mxu0 0.0
    %1970 = vmatpush1.msra.mxu0 0.0
    %1971 = vmatprep.subr.mxu0 0.0
    %1972 = vmatpush1.msra.mxu0 0.0
    %1973 = vmatprep.subr.mxu0 0.0
    %1974 = vmatpush1.msra.mxu0 0.0
    %1975 = vmatprep.subr.mxu0 0.0
    %1976 = vmatpush1.msra.mxu0 0.0
    %1977 = vmatprep.subr.mxu0 0.0
    %1978 = vmatpush1.msra.mxu0 0.0
    %1979 = vmatprep.subr.mxu0 0.0
    %1980 = vmatpush1.msra.mxu0 0.0
    %1981 = vmatprep.subr.mxu0 0.0
    %1982 = vmatpush1.msra.mxu0 0.0
    %1983 = vmatprep.subr.mxu0 0.0
    %1984 = vmatpush1.msra.mxu0 0.0
    %1985 = vmatprep.subr.mxu0 0.0
    %1986 = vmatpush1.msra.mxu0 0.0
    %1987 = vmatprep.mubr.f32.mxu0 0.0
    %1988 = vmatmul.mubr.f32.gmra.mrb[0].mxu0 %v1900
    %v1989 = vpop.f32.mrb[0].mxu0
    %v1990 = vadd.f32 %v1897, %v1989
    %v1991 = vpop.f32.mrb[0].mxu0
    %1992 = vmatprep.mubr.f32.mxu0 0.0
    %1993 = vmatmul.mubr.f32.gmra.mrb[0].mxu0 %v1903
    %v1994 = vpop.f32.mrb[0].mxu0
    %v1995 = vadd.f32 %v1897, %v1994
    %v1996 = vpop.f32.mrb[0].mxu0
    %1997 = vmatprep.mubr.f32.mxu0 0.0
    %1998 = vmatmul.mubr.f32.gmra.mrb[0].mxu0 %v1906
    %v1999 = vpop.f32.mrb[0].mxu0
    %v2000 = vadd.f32 %v1897, %v1999
    %v2001 = vpop.f32.mrb[0].mxu0
    %2002 = vmatprep.mubr.f32.mxu0 0.0
    %2003 = vmatmul.mubr.f32.gmra.mrb[0].mxu0 %v1909
    %v2004 = vpop.f32.mrb[0].mxu0
    %v2005 = vadd.f32 %v1897, %v2004
    %v2006 = vpop.f32.mrb[0].mxu0
    %2007 = vmatprep.mubr.f32.mxu0 0.0
    %2008 = vmatmul.mubr.f32.gmra.mrb[0].mxu0 %v1912
    %v2009 = vpop.f32.mrb[0].mxu0
    %v2010 = vadd.f32 %v1897, %v2009
    %v2011 = vpop.f32.mrb[0].mxu0
    %2012 = vmatprep.mubr.f32.mxu0 0.0
    %2013 = vmatmul.mubr.f32.gmra.mrb[0].mxu0 %v1915
    %v2014 = vpop.f32.mrb[0].mxu0
    %v2015 = vadd.f32 %v1897, %v2014
    %v2016 = vpop.f32.mrb[0].mxu0
    %2017 = vmatprep.mubr.f32.mxu0 0.0
    %2018 = vmatmul.mubr.f32.gmra.mrb[0].mxu0 %v1918
    %v2019 = vpop.f32.mrb[0].mxu0
    %v2020 = vadd.f32 %v1897, %v2019
    %v2021 = vpop.f32.mrb[0].mxu0
    %2022 = vmatprep.mubr.f32.mxu0 0.0
    %2023 = vmatmul.mubr.f32.gmra.mrb[0].mxu0 %v1921
    %v2024 = vpop.f32.mrb[0].mxu0
    %v2025 = vadd.f32 %v1897, %v2024
    %v2026 = vpop.f32.mrb[0].mxu0
    %2027 = vdwg.mxu0
    %v2028 = vmax.f32 %v1990, %v1995
    %v2029 = vmax.f32 %v2028, %v2000
    %v2030 = vmax.f32 %v2029, %v2005
    %v2031 = vmax.f32 %v2030, %v2010
    %v2032 = vmax.f32 %v2031, %v2015
    %v2033 = vmax.f32 %v2032, %v2020
    %v2034 = vmax.f32 %v2033, %v2025
    %v2035 = vsub.f32 %v1990, %v2034
    %v2036 = vmul.f32 %v2035, 1.442695
    %v2037 = vpow.pop %v2036
    %v2038 = vsub.f32 %v1995, %v2034
    %v2039 = vmul.f32 %v2038, 1.442695
    %v2040 = vpow.pop %v2039
    %v2041 = vsub.f32 %v2000, %v2034
    %v2042 = vmul.f32 %v2041, 1.442695
    %v2043 = vpow.pop %v2042
    %v2044 = vsub.f32 %v2005, %v2034
    %v2045 = vmul.f32 %v2044, 1.442695
    %v2046 = vpow.pop %v2045
    %v2047 = vsub.f32 %v2010, %v2034
    %v2048 = vmul.f32 %v2047, 1.442695
    %v2049 = vpow.pop %v2048
    %v2050 = vsub.f32 %v2015, %v2034
    %v2051 = vmul.f32 %v2050, 1.442695
    %v2052 = vpow.pop %v2051
    %v2053 = vsub.f32 %v2020, %v2034
    %v2054 = vmul.f32 %v2053, 1.442695
    %v2055 = vpow.pop %v2054
    %v2056 = vsub.f32 %v2025, %v2034
    %v2057 = vmul.f32 %v2056, 1.442695
    %v2058 = vpow.pop %v2057
    %v2059 = vadd.f32 %v2037, %v2040
    %v2060 = vadd.f32 %v2059, %v2043
    %v2061 = vadd.f32 %v2060, %v2046
    %v2062 = vadd.f32 %v2061, %v2049
    %v2063 = vadd.f32 %v2062, %v2052
    %v2064 = vadd.f32 %v2063, %v2055
    %v2065 = vadd.f32 %v2064, %v2058
    %v2066 = vrcp.pop %v2065
    %v2067 = vmul.f32 %v2037, %v2066
    %2069 = vset.pattern.permute.xlu0 0
    %2070 = vperm.xlu0 %2069, %v2067
    %v2071 = vpop.permute.xlu0 %2070
    %v2073 = vmul.f32 %v2071, %v1880
    %v2074 = vadd.f32 %v2073, 0.0
    %v2075 = vmul.f32 %v2040, %v2066
    %2077 = vset.pattern.permute.xlu0 0
    %2078 = vperm.xlu0 %2077, %v2075
    %v2079 = vpop.permute.xlu0 %2078
    %v2081 = vmul.f32 %v2079, %v1881
    %v2082 = vadd.f32 %v2074, %v2081
    %v2083 = vmul.f32 %v2043, %v2066
    %2085 = vset.pattern.permute.xlu0 0
    %2086 = vperm.xlu0 %2085, %v2083
    %v2087 = vpop.permute.xlu0 %2086
    %v2089 = vmul.f32 %v2087, %v1882
    %v2090 = vadd.f32 %v2082, %v2089
    %v2091 = vmul.f32 %v2046, %v2066
    %2093 = vset.pattern.permute.xlu0 0
    %2094 = vperm.xlu0 %2093, %v2091
    %v2095 = vpop.permute.xlu0 %2094
    %v2097 = vmul.f32 %v2095, %v1883
    %v2098 = vadd.f32 %v2090, %v2097
    %v2099 = vmul.f32 %v2049, %v2066
    %2101 = vset.pattern.permute.xlu0 0
    %2102 = vperm.xlu0 %2101, %v2099
    %v2103 = vpop.permute.xlu0 %2102
    %v2105 = vmul.f32 %v2103, %v1884
    %v2106 = vadd.f32 %v2098, %v2105
    %v2107 = vmul.f32 %v2052, %v2066
    %2109 = vset.pattern.permute.xlu0 0
    %2110 = vperm.xlu0 %2109, %v2107
    %v2111 = vpop.permute.xlu0 %2110
    %v2113 = vmul.f32 %v2111, %v1885
    %v2114 = vadd.f32 %v2106, %v2113
    %v2115 = vmul.f32 %v2055, %v2066
    %2117 = vset.pattern.permute.xlu0 0
    %2118 = vperm.xlu0 %2117, %v2115
    %v2119 = vpop.permute.xlu0 %2118
    %v2121 = vmul.f32 %v2119, %v1886
    %v2122 = vadd.f32 %v2114, %v2121
    %v2123 = vmul.f32 %v2058, %v2066
    %2125 = vset.pattern.permute.xlu0 0
    %2126 = vperm.xlu0 %2125, %v2123
    %v2127 = vpop.permute.xlu0 %2126
    %v2129 = vmul.f32 %v2127, %v1887
    %v2130 = vadd.f32 %v2122, %v2129
    %v2131 = vpack.c.bf16 %v2130, %v2130
    %v2132 = vld [vmem:[%s10] sm:$0xf]
    %v2133 = vld [vmem:[%s10 + $0x4] sm:$0xf]
    %v2134 = vld [vmem:[%s10 + $0x8] sm:$0xf]
    %v2135 = vld [vmem:[%s10 + $0xc] sm:$0xf]
    %v2136 = vld [vmem:[%s11] sm:$0x1]
    %v2138 = vlaneseq
    %v2139 = vshrl.u32 %v2138, 7
    %v2140 = vsub.s32 0, %v2139
    %v2141 = vrot.slane %v2136, %v2140
    %v2147 = vunpack.c.l.b16 %v2132
    %v2148 = vunpack.c.l.b16 %v2133
    %v2149 = vunpack.c.l.b16 %v2134
    %v2150 = vunpack.c.l.b16 %v2135
    %v2151 = vpack.c.b16 %v2148, %v2147
    %v2152 = vpack.c.b16 %v2150, %v2149
    %v2156 = vsel %vm409, %v2131, 0
    %2158 = vmatprep.subr.bf16.mxu0 0
    %2159 = vmatpush1.bf16.msra.mxu0 %v2151
    %2160 = vmatprep.subr.bf16.mxu0 0
    %2161 = vmatpush1.bf16.msra.mxu0 %v2152
    %2162 = vmatprep.subr.bf16.mxu0 0
    %2163 = vmatpush1.bf16.msra.mxu0 0
    %2164 = vmatprep.subr.bf16.mxu0 0
    %2165 = vmatpush1.bf16.msra.mxu0 0
    %2166 = vmatprep.subr.bf16.mxu0 0
    %2167 = vmatpush1.bf16.msra.mxu0 0
    %2168 = vmatprep.subr.bf16.mxu0 0
    %2169 = vmatpush1.bf16.msra.mxu0 0
    %2170 = vmatprep.subr.bf16.mxu0 0
    %2171 = vmatpush1.bf16.msra.mxu0 0
    %2172 = vmatprep.subr.bf16.mxu0 0
    %2173 = vmatpush1.bf16.msra.mxu0 0
    %2174 = vmatprep.subr.bf16.mxu0 0
    %2175 = vmatpush1.bf16.msra.mxu0 0
    %2176 = vmatprep.subr.bf16.mxu0 0
    %2177 = vmatpush1.bf16.msra.mxu0 0
    %2178 = vmatprep.subr.bf16.mxu0 0
    %2179 = vmatpush1.bf16.msra.mxu0 0
    %2180 = vmatprep.subr.bf16.mxu0 0
    %2181 = vmatpush1.bf16.msra.mxu0 0
    %2182 = vmatprep.subr.bf16.mxu0 0
    %2183 = vmatpush1.bf16.msra.mxu0 0
    %2184 = vmatprep.subr.bf16.mxu0 0
    %2185 = vmatpush1.bf16.msra.mxu0 0
    %2186 = vmatprep.subr.bf16.mxu0 0
    %2187 = vmatpush1.bf16.msra.mxu0 0
    %2188 = vmatprep.subr.bf16.mxu0 0
    %2189 = vmatpush1.bf16.msra.mxu0 0
    %2190 = vmatprep.mubr.bf16.mxu0 0
    %2191 = vmatmul.mubr.bf16.gmra.mrb[0].mxu0 %v2156
    %v2192 = vpop.f32.mrb[0].mxu0
    %v2193 = vadd.f32 %v2141, %v2192
    %v2194 = vpop.f32.mrb[0].mxu0
    %v2195 = vpop.f32.mrb[0].mxu0
    %v2196 = vpop.f32.mrb[0].mxu0
    %2197 = vdwg.mxu0
    %2198 = vst [vmem:[#allocation7] sm:$0xff] %v2193
    // Predicated region
    $region46: #{tpu_custom_call.1} parent=1 // pred_check
      _
    $region47: #{tpu_custom_call.1} parent=1 // pred_check_branch
      %2200 = sbr.rel (0) target = $region49
    $region48: #{tpu_custom_call.1} parent=1 // pred_region
      %s2202 = ssub.s32 128, 128
      %2203 = vsyncadd [#allocation8], %s2202
      %s2205 = sshll.u32 [#allocation7], 4
      %s2206 = int_to_ptr.vmem [resolvable:$true] %s2205
      %2208 = dma.vmem_to_hbm [thread:$0]  %s2206, 128, %s12, [#allocation8]
    $region49: #{tpu_custom_call.1} parent=1 // pred_fallthru
      _
    // Predicated region
    $region50: #{tpu_custom_call.1} parent=1 // pred_check
      _
    $region51: #{tpu_custom_call.1} parent=1 // pred_check_branch
      %2210 = sbr.rel (0) target = $region53
    $region52: #{tpu_custom_call.1} parent=1 // pred_region
      %2211 = dma.done [#allocation8], 128
    $region53: #{tpu_custom_call.1} parent=1 // pred_fallthru
      _
    %2212 = vsyncpa [#allocation8], 1

</llo_original>
